<compile_context>
chip_gen: v5e
topology: v5e:2x2
jax: 0.10.0
libtpu: 0.0.40
codegen_flags: <defaults>
</compile_context>

<pallas_src>
import jax
import jax.numpy as jnp
from jax.experimental import pallas as pl
from jax.experimental.pallas import tpu as pltpu


def _round_up(x, m):
    return (x + m - 1) // m * m


def _vmem_limit_bytes(frac=0.7, fallback=32 * 1024 * 1024):
    """Generation-aware scoped-VMEM limit (v7x has 64 MiB/TC, v5e/v6e 128 MiB)."""
    try:
        info = pltpu.get_tpu_info()
        cap = getattr(info, "vmem_capacity_bytes", None)
        if cap:
            return int(cap * frac)
    except Exception:
        pass
    return fallback


# --------------------------------------------------------------------------
# Fused kernel: attention + combine + multi-layer GRU (j==0) + vocab tiles (all j)
# --------------------------------------------------------------------------
def decoder_step_kernel(emb_ref, hid_ref, enc_ref, encp_ref, bias_ref,
                        w_dec_ref, b_dec_ref, v_ref,
                        w_comb_ref, b_comb_ref,
                        w_cat_ref, b_cat_ref,
                        w_out_ref, b_out_ref,
                        hid_out_ref, attn_ref, pred_ref,
                        x_top_ref, xh_ref):
    j = pl.program_id(0)

    @pl.when(j == 0)
    def _attention_and_gru():
        L, Bp, H = hid_ref.shape
        E = emb_ref.shape[1]

        dec_top = hid_ref[L - 1]                                         # (Bp, H) f32

        # ---- attention score (encoder projection precomputed once per sequence) ----
        dec_proj = (jnp.dot(dec_top.astype(jnp.bfloat16), w_dec_ref[...],
                            preferred_element_type=jnp.float32)
                    + b_dec_ref[...])                                    # (Bp, A) f32
        energy = jnp.tanh(encp_ref[...].astype(jnp.float32)
                          + dec_proj[:, None, :])                        # (Bp, Sp, A)
        score = jnp.sum(energy * v_ref[...][None, :, :], axis=-1)        # (Bp, Sp)
        score = score + bias_ref[...]                                    # additive mask bias

        # ---- softmax (exact normalization: attn is a returned output) ----
        m = jnp.max(score, axis=1, keepdims=True)
        p = jnp.exp(score - m)
        attn = p / jnp.sum(p, axis=1, keepdims=True)
        attn_ref[...] = attn

        # ---- context via VPU multiply + cross-sublane reduce (keeps MXU free) ----
        context = jnp.sum(attn[:, :, None] * enc_ref[...].astype(jnp.float32),
                          axis=1)                                        # (Bp, H) f32

        # ---- combine_context: single matmul on [embedded | context] (bf16 scratch) ----
        xh_ref[:, :E] = emb_ref[...]
        xh_ref[:, E:] = context.astype(jnp.bfloat16)
        x = (jnp.dot(xh_ref[...], w_comb_ref[...],
                     preferred_element_type=jnp.float32)
             + b_comb_ref[...])                                          # (Bp, E) f32

        # ---- multi-layer GRU, single step, ONE fused matmul per layer ----
        # g[:, :3H] = [x|h] @ [W_ih; W_hh] + b_ih + b_hh
        # g[:, 3H:] = h @ W_hn + b_hn      (zeros in the x rows of the weight)
        # n = tanh(g_n + (r - 1) * gh_n)
        for l in range(L):
            h = hid_ref[l]                                               # (Bp, H) f32
            xh_ref[:, :E] = x.astype(jnp.bfloat16)
            xh_ref[:, E:] = h.astype(jnp.bfloat16)
            g = (jnp.dot(xh_ref[...], w_cat_ref[l],
                         preferred_element_type=jnp.float32)
                 + b_cat_ref[l])                                         # (Bp, 4H)
            r = jax.nn.sigmoid(g[:, 0 * H:1 * H])
            z = jax.nn.sigmoid(g[:, 1 * H:2 * H])
            n = jnp.tanh(g[:, 2 * H:3 * H] + (r - 1.0) * g[:, 3 * H:4 * H])
            h_new = (1.0 - z) * n + z * h
            hid_out_ref[l] = h_new
            x = h_new                                                    # input to next layer

        x_top_ref[...] = x.astype(jnp.bfloat16)                          # bf16 handoff

    # ---- vocab projection tile (every grid step; w_out tile DMA is pipelined) ----
    pred_ref[...] = (jnp.dot(x_top_ref[...], w_out_ref[...],
                             preferred_element_type=jnp.float32)
                     + b_out_ref[...])


# --------------------------------------------------------------------------
# Step-invariant preparation (hoisted out of the per-step path)
# --------------------------------------------------------------------------
def prepare_weights(params, out_tile=1024):
    """Once per model: kernel-ready (bf16 / fused / padded) weights."""
    f32, bf16 = jnp.float32, jnp.bfloat16
    H = params['w_dec'].shape[0]
    A = params['w_dec'].shape[1]
    E = params['w_comb'].shape[1]
    V = params['w_out'].shape[1]
    L = params['w_ih'].shape[0]
    assert E == H, "stacked GRU weights require embedding_dim == hidden_dim"

    TN = min(out_tile, _round_up(V, 128))
    Vp = _round_up(V, TN)

    # Fused GRU operand: (L, E+H, 4H) -> [ W_ih|W_hh for r,z,n  ;  0|W_hn ]
    w_ih, w_hh = params['w_ih'], params['w_hh']
    w_gates = jnp.concatenate([w_ih, w_hh], axis=1)                      # (L, E+H, 3H)
    w_n_extra = jnp.concatenate(
        [jnp.zeros((L, E, H), w_hh.dtype), w_hh[:, :, 2 * H:]], axis=1)  # (L, E+H, H)
    w_cat = jnp.concatenate([w_gates, w_n_extra], axis=2).astype(bf16)   # (L, E+H, 4H)
    b_cat = jnp.concatenate([params['b_ih'] + params['b_hh'],
                             params['b_hh'][:, :, 2 * H:]],
                            axis=2).astype(f32)                          # (L, 1, 4H)

    return dict(
        emb_table=params['emb_table'].astype(bf16),
        w_dec=params['w_dec'].astype(bf16),
        b_dec=params['b_dec'].astype(f32),
        v_score=params['v_score'].astype(f32),
        w_comb=params['w_comb'].astype(bf16),
        b_comb=params['b_comb'].astype(f32),
        w_cat=w_cat, b_cat=b_cat,
        w_out=jnp.pad(params['w_out'], ((0, 0), (0, Vp - V))).astype(bf16),
        b_out=jnp.pad(params['b_out'], ((0, 0), (0, Vp - V))).astype(f32),
        E=E, H=H, A=A, L=L, V=V, Vp=Vp, TN=TN,
    )


def prepare_encoder(params, encoder_outputs, src_mask):
    """Once per source sequence: encoder projection, padding, mask bias (bf16 storage)."""
    f32, bf16 = jnp.float32, jnp.bfloat16
    B, S, H = encoder_outputs.shape
    A = params['w_enc'].shape[1]
    Bp = _round_up(B, 8)
    Sp = _round_up(S, 128)

    enc_proj = (encoder_outputs.reshape(B * S, H) @ params['w_enc']
                + params['b_enc']).reshape(B, S, A)

    enc_p = jnp.pad(encoder_outputs, ((0, Bp - B), (0, Sp - S), (0, 0))).astype(bf16)
    encp_p = jnp.pad(enc_proj, ((0, Bp - B), (0, Sp - S), (0, 0))).astype(bf16)
    mask_f = jnp.pad(src_mask.astype(f32), ((0, Bp - B), (0, Sp - S)))
    bias = (mask_f - 1.0) * 1e30                                         # 0 valid / -1e30 masked

    return dict(enc=enc_p, encp=encp_p, bias=bias, B=B, S=S, Bp=Bp, Sp=Sp)


# --------------------------------------------------------------------------
# Per-step driver
# --------------------------------------------------------------------------
def decoder_step(weights, enc_state, input_ids, hidden_p):
    """One autoregressive decode step.  hidden_p is (L, Bp, H) f32 (batch-padded)."""
    # TODO(synk): nn.Dropout is a no-op here (inference semantics).
    f32 = jnp.float32
    E, H, A, L = weights['E'], weights['H'], weights['A'], weights['L']
    Vp, TN = weights['Vp'], weights['TN']
    Bp, Sp = enc_state['Bp'], enc_state['Sp']
    B = input_ids.shape[0]

    embedded = weights['emb_table'][input_ids]                           # (B, E) bf16 gather
    embedded = jnp.pad(embedded, ((0, Bp - B), (0, 0)))

    inv2 = lambda j: (0, 0)
    inv3 = lambda j: (0, 0, 0)

    in_specs = [
        pl.BlockSpec((Bp, E), inv2),                # embedded
        pl.BlockSpec((L, Bp, H), inv3),             # hidden
        pl.BlockSpec((Bp, Sp, H), inv3),            # encoder_outputs (bf16)
        pl.BlockSpec((Bp, Sp, A), inv3),            # enc_proj (bf16)
        pl.BlockSpec((Bp, Sp), inv2),               # mask bias
        pl.BlockSpec((H, A), inv2),                 # w_dec
        pl.BlockSpec((1, A), inv2),                 # b_dec
        pl.BlockSpec((1, A), inv2),                 # v_score
        pl.BlockSpec((E + H, E), inv2),             # w_comb
        pl.BlockSpec((1, E), inv2),                 # b_comb
        pl.BlockSpec((L, E + H, 4 * H), inv3),      # fused GRU weights
        pl.BlockSpec((L, 1, 4 * H), inv3),          # fused GRU biases
        pl.BlockSpec((H, TN), lambda j: (0, j)),    # w_out vocab tile
        pl.BlockSpec((1, TN), lambda j: (0, j)),    # b_out vocab tile
    ]
    out_specs = (
        pl.BlockSpec((L, Bp, H), inv3),             # new hidden (resident)
        pl.BlockSpec((Bp, Sp), inv2),               # attention weights (resident)
        pl.BlockSpec((Bp, TN), lambda j: (0, j)),   # prediction vocab tile
    )
    out_shape = (
        jax.ShapeDtypeStruct((L, Bp, H), f32),
        jax.ShapeDtypeStruct((Bp, Sp), f32),
        jax.ShapeDtypeStruct((Bp, Vp), f32),
    )

    new_hid_p, attn_p, pred_p = pl.pallas_call(
        decoder_step_kernel,
        out_shape=out_shape,
        grid=(Vp // TN,),
        in_specs=in_specs,
        out_specs=out_specs,
        scratch_shapes=[pltpu.VMEM((Bp, H), jnp.bfloat16),       # x_top (GRU output, bf16)
                        pltpu.VMEM((Bp, E + H), jnp.bfloat16)],  # [x | h] concat scratch
        input_output_aliases={1: 0},                 # GRU hidden state updated in place
        compiler_params=pltpu.CompilerParams(
            dimension_semantics=("arbitrary",),      # j==0 compute feeds later vocab tiles
            vmem_limit_bytes=_vmem_limit_bytes()),
    )(embedded, hidden_p, enc_state['enc'], enc_state['encp'], enc_state['bias'],
      weights['w_dec'], weights['b_dec'], weights['v_score'],
      weights['w_comb'], weights['b_comb'],
      weights['w_cat'], weights['b_cat'],
      weights['w_out'], weights['b_out'])

    return pred_p, new_hid_p, attn_p


def decoder_forward(params, input_ids, hidden, encoder_outputs, src_mask,
                    weights=None, enc_state=None, out_tile=1024):
    """Convenience wrapper matching the PyTorch Decoder.forward signature (eval mode)."""
    if weights is None:
        weights = prepare_weights(params, out_tile=out_tile)
    if enc_state is None:
        enc_state = prepare_encoder(params, encoder_outputs, src_mask)

    L, B, H = hidden.shape
    Bp = enc_state['Bp']
    hidden_p = jnp.pad(hidden.astype(jnp.float32), ((0, 0), (0, Bp - B), (0, 0)))

    pred_p, new_hid_p, attn_p = decoder_step(weights, enc_state, input_ids, hidden_p)

    return (pred_p[:B, :weights['V']],
            new_hid_p[:, :B, :],
            attn_p[:B, :enc_state['S']])


# --------------------------------------------------------------------------
# Plain-JAX reference (mirrors the PyTorch module, eval mode, f32)
# --------------------------------------------------------------------------
def reference_forward(params, input_ids, hidden, encoder_outputs, src_mask):
    L, B, H = hidden.shape
    dec_top = hidden[-1]
    enc_proj = jnp.einsum('bsh,ha->bsa', encoder_outputs, params['w_enc']) + params['b_enc']
    dec_proj = dec_top @ params['w_dec'] + params['b_dec']
    energy = jnp.tanh(enc_proj + dec_proj[:, None, :])
    score = jnp.sum(energy * params['v_score'][None, :, :], axis=-1)
    score = jnp.where(src_mask, score, -jnp.inf)
    attn = jax.nn.softmax(score, axis=1)
    context = jnp.einsum('bs,bsh->bh', attn, encoder_outputs)
    embedded = params['emb_table'][input_ids]
    combined = jnp.concatenate([embedded, context], axis=-1)
    x = combined @ params['w_comb'] + params['b_comb']
    new_h = []
    for l in range(L):
        h = hidden[l]
        gi = x @ params['w_ih'][l] + params['b_ih'][l][0]
        gh = h @ params['w_hh'][l] + params['b_hh'][l][0]
        r = jax.nn.sigmoid(gi[:, :H] + gh[:, :H])
        z = jax.nn.sigmoid(gi[:, H:2 * H] + gh[:, H:2 * H])
        n = jnp.tanh(gi[:, 2 * H:] + r * gh[:, 2 * H:])
        h_new = (1.0 - z) * n + z * h
        new_h.append(h_new)
        x = h_new
    pred = x @ params['w_out'] + params['b_out']
    return pred, jnp.stack(new_h), attn


def init_params(key, vocab_size, E, H, A, L, pad_idx):
    ks = jax.random.split(key, 16)
    s = 0.1
    emb = jax.random.normal(ks[0], (vocab_size, E), jnp.float32) * s
    emb = emb.at[pad_idx].set(0.0)                     # padding_idx row = 0
    return dict(
        emb_table=emb,
        w_enc=jax.random.normal(ks[1], (H, A), jnp.float32) * s,
        b_enc=jax.random.normal(ks[2], (1, A), jnp.float32) * s,
        w_dec=jax.random.normal(ks[3], (H, A), jnp.float32) * s,
        b_dec=jax.random.normal(ks[4], (1, A), jnp.float32) * s,
        v_score=jax.random.normal(ks[5], (1, A), jnp.float32) * s,   # Linear(A,1,bias=False)
        w_comb=jax.random.normal(ks[6], (E + H, E), jnp.float32) * s,
        b_comb=jax.random.normal(ks[7], (1, E), jnp.float32) * s,
        w_ih=jax.random.normal(ks[8], (L, E, 3 * H), jnp.float32) * s,
        w_hh=jax.random.normal(ks[9], (L, H, 3 * H), jnp.float32) * s,
        b_ih=jax.random.normal(ks[10], (L, 1, 3 * H), jnp.float32) * s,
        b_hh=jax.random.normal(ks[11], (L, 1, 3 * H), jnp.float32) * s,
        w_out=jax.random.normal(ks[12], (H, vocab_size), jnp.float32) * s,
        b_out=jax.random.normal(ks[13], (1, vocab_size), jnp.float32) * s,
    )


if __name__ == "__main__":
    # Small shapes: batch=4, src_seq=8, hidden=32, embed=32, attn=32, vocab=64, n_layers=2
    B, S, H, E, A, V, L = 4, 8, 32, 32, 32, 64, 2
    pad_idx = 0

    key = jax.random.PRNGKey(0)
    kp, k1, k2, k3 = jax.random.split(key, 4)
    params = init_params(kp, V, E, H, A, L, pad_idx)

    input_ids = jax.random.randint(k1, (B,), 1, V)                       # (B,)
    hidden = jax.random.normal(k2, (L, B, H), jnp.float32) * 0.5         # (L, B, H)
    encoder_outputs = jax.random.normal(k3, (B, S, H), jnp.float32) * 0.5
    lengths = jnp.array([8, 5, 7, 3], dtype=jnp.int32)
    src_mask = jnp.arange(S)[None, :] < lengths[:, None]                 # (B, S) bool

    # Step-invariant prep: once per model / once per source sequence.
    weights = prepare_weights(params)
    enc_state = prepare_encoder(params, encoder_outputs, src_mask)

    pred, new_hidden, attn = decoder_forward(params, input_ids, hidden,
                                             encoder_outputs, src_mask,
                                             weights=weights, enc_state=enc_state)
    jax.block_until_ready((pred, new_hidden, attn))

    pred_ref, hid_ref, attn_ref = reference_forward(params, input_ids, hidden,
                                                    encoder_outputs, src_mask)
    assert pred.shape == (B, V) and new_hidden.shape == (L, B, H) and attn.shape == (B, S)
    assert jnp.allclose(pred, pred_ref, atol=2e-2, rtol=2e-2)
    assert jnp.allclose(new_hidden, hid_ref, atol=2e-2, rtol=2e-2)
    assert jnp.allclose(attn, attn_ref, atol=2e-2, rtol=2e-2)

    print("KERNEL_OK")
</pallas_src>

<mosaic_0001>
module attributes {stable_mosaic.version = 11 : i64} {
  func.func @decoder_step_kernel(%arg0: i32, %arg1: memref<8x32xbf16, #tpu.memory_space<vmem>>, %arg2: memref<2x8x32xf32, #tpu.memory_space<vmem>>, %arg3: memref<8x128x32xbf16, #tpu.memory_space<vmem>>, %arg4: memref<8x128x32xbf16, #tpu.memory_space<vmem>>, %arg5: memref<8x128xf32, #tpu.memory_space<vmem>>, %arg6: memref<32x32xbf16, #tpu.memory_space<vmem>>, %arg7: memref<1x32xf32, #tpu.memory_space<vmem>>, %arg8: memref<1x32xf32, #tpu.memory_space<vmem>>, %arg9: memref<64x32xbf16, #tpu.memory_space<vmem>>, %arg10: memref<1x32xf32, #tpu.memory_space<vmem>>, %arg11: memref<2x64x128xbf16, #tpu.memory_space<vmem>>, %arg12: memref<2x1x128xf32, #tpu.memory_space<vmem>>, %arg13: memref<32x128xbf16, #tpu.memory_space<vmem>>, %arg14: memref<1x128xf32, #tpu.memory_space<vmem>>, %arg15: memref<2x8x32xf32, #tpu.memory_space<vmem>>, %arg16: memref<8x128xf32, #tpu.memory_space<vmem>>, %arg17: memref<8x128xf32, #tpu.memory_space<vmem>>, %arg18: memref<8x32xbf16, #tpu.memory_space<vmem>>, %arg19: memref<8x64xbf16, #tpu.memory_space<vmem>>) attributes {dimension_semantics = [#tpu.dimension_semantics<arbitrary>], iteration_bounds = array<i64: 1>, scalar_prefetch = 0 : i64, scratch_operands = 2 : i64, tpu.core_type = #tpu.core_type<tc>, window_params = [{pipeline_mode = #tpu.pipeline_mode<synchronous>, transform_indices = @transform_0, window_bounds = array<i64: 8, 32>}, {pipeline_mode = #tpu.pipeline_mode<synchronous>, transform_indices = @transform_1, window_bounds = array<i64: 2, 8, 32>}, {pipeline_mode = #tpu.pipeline_mode<synchronous>, transform_indices = @transform_2, window_bounds = array<i64: 8, 128, 32>}, {pipeline_mode = #tpu.pipeline_mode<synchronous>, transform_indices = @transform_3, window_bounds = array<i64: 8, 128, 32>}, {pipeline_mode = #tpu.pipeline_mode<synchronous>, transform_indices = @transform_4, window_bounds = array<i64: 8, 128>}, {pipeline_mode = #tpu.pipeline_mode<synchronous>, transform_indices = @transform_5, window_bounds = array<i64: 32, 32>}, {pipeline_mode = #tpu.pipeline_mode<synchronous>, transform_indices = @transform_6, window_bounds = array<i64: 1, 32>}, {pipeline_mode = #tpu.pipeline_mode<synchronous>, transform_indices = @transform_7, window_bounds = array<i64: 1, 32>}, {pipeline_mode = #tpu.pipeline_mode<synchronous>, transform_indices = @transform_8, window_bounds = array<i64: 64, 32>}, {pipeline_mode = #tpu.pipeline_mode<synchronous>, transform_indices = @transform_9, window_bounds = array<i64: 1, 32>}, {pipeline_mode = #tpu.pipeline_mode<synchronous>, transform_indices = @transform_10, window_bounds = array<i64: 2, 64, 128>}, {pipeline_mode = #tpu.pipeline_mode<synchronous>, transform_indices = @transform_11, window_bounds = array<i64: 2, 1, 128>}, {transform_indices = @transform_12, window_bounds = array<i64: 32, 128>}, {transform_indices = @transform_13, window_bounds = array<i64: 1, 128>}, {pipeline_mode = #tpu.pipeline_mode<synchronous>, transform_indices = @transform_14, window_bounds = array<i64: 2, 8, 32>}, {pipeline_mode = #tpu.pipeline_mode<synchronous>, transform_indices = @transform_15, window_bounds = array<i64: 8, 128>}, {transform_indices = @transform_16, window_bounds = array<i64: 8, 128>}]} {
    %c0_i32 = arith.constant 0 : i32
    %0 = arith.cmpi eq, %arg0, %c0_i32 : i32
    %1 = arith.extui %0 : i1 to i32
    %c0_i32_0 = arith.constant 0 : i32
    %2 = arith.cmpi ne, %1, %c0_i32_0 : i32
    scf.if %2 {
      %c1 = arith.constant 1 : index
      %c0_8 = arith.constant 0 : index
      %c0_9 = arith.constant 0 : index
      %10 = vector.load %arg2[%c1, %c0_8, %c0_9] : memref<2x8x32xf32, #tpu.memory_space<vmem>>, vector<1x8x32xf32>
      %11 = vector.shape_cast %10 : vector<1x8x32xf32> to vector<8x32xf32>
      %12 = arith.truncf %11 : vector<8x32xf32> to vector<8x32xbf16>
      %c0_10 = arith.constant 0 : index
      %c0_11 = arith.constant 0 : index
      %13 = vector.load %arg6[%c0_10, %c0_11] : memref<32x32xbf16, #tpu.memory_space<vmem>>, vector<32x32xbf16>
      %cst_12 = arith.constant dense<0.000000e+00> : vector<8x32xf32>
      %14 = tpu.matmul %12, %13, %cst_12 {dimension_numbers = #tpu.dot_dimension_numbers<[1], [0], [0], [1], [0, 0, 1, 1], [], []>} : vector<8x32xbf16>, vector<32x32xbf16>, vector<8x32xf32> -> vector<8x32xf32>
      %c0_13 = arith.constant 0 : index
      %c0_14 = arith.constant 0 : index
      %15 = vector.load %arg7[%c0_13, %c0_14] : memref<1x32xf32, #tpu.memory_space<vmem>>, vector<1x32xf32>
      %16 = vector.broadcast %15 : vector<1x32xf32> to vector<8x32xf32>
      %17 = arith.addf %14, %16 : vector<8x32xf32>
      %c0_15 = arith.constant 0 : index
      %c0_16 = arith.constant 0 : index
      %c0_17 = arith.constant 0 : index
      %18 = vector.load %arg4[%c0_15, %c0_16, %c0_17] : memref<8x128x32xbf16, #tpu.memory_space<vmem>>, vector<8x128x32xbf16>
      %19 = arith.extf %18 : vector<8x128x32xbf16> to vector<8x128x32xf32>
      %20 = vector.shape_cast %17 : vector<8x32xf32> to vector<8x1x32xf32>
      %21 = vector.broadcast %20 : vector<8x1x32xf32> to vector<8x128x32xf32>
      %22 = arith.addf %19, %21 : vector<8x128x32xf32>
      %23 = math.tanh %22 : vector<8x128x32xf32>
      %c0_18 = arith.constant 0 : index
      %c0_19 = arith.constant 0 : index
      %24 = vector.load %arg8[%c0_18, %c0_19] : memref<1x32xf32, #tpu.memory_space<vmem>>, vector<1x32xf32>
      %25 = vector.shape_cast %24 : vector<1x32xf32> to vector<1x1x32xf32>
      %26 = vector.broadcast %25 : vector<1x1x32xf32> to vector<8x128x32xf32>
      %27 = arith.mulf %23, %26 : vector<8x128x32xf32>
      %cst_20 = arith.constant dense<0.000000e+00> : vector<8x128xf32>
      %28 = vector.multi_reduction <add>, %27, %cst_20 [2] : vector<8x128x32xf32> to vector<8x128xf32>
      %c0_21 = arith.constant 0 : index
      %c0_22 = arith.constant 0 : index
      %29 = vector.load %arg5[%c0_21, %c0_22] : memref<8x128xf32, #tpu.memory_space<vmem>>, vector<8x128xf32>
      %30 = arith.addf %28, %29 : vector<8x128xf32>
      %cst_23 = arith.constant dense<0xFF800000> : vector<8xf32>
      %31 = vector.multi_reduction <maximumf>, %30, %cst_23 [1] : vector<8x128xf32> to vector<8xf32>
      %32 = vector.shape_cast %31 : vector<8xf32> to vector<8x1xf32>
      %33 = vector.broadcast %32 : vector<8x1xf32> to vector<8x128xf32>
      %34 = arith.subf %30, %33 : vector<8x128xf32>
      %35 = math.exp %34 : vector<8x128xf32>
      %cst_24 = arith.constant dense<0.000000e+00> : vector<8xf32>
      %36 = vector.multi_reduction <add>, %35, %cst_24 [1] : vector<8x128xf32> to vector<8xf32>
      %37 = vector.shape_cast %36 : vector<8xf32> to vector<8x1xf32>
      %38 = vector.broadcast %37 : vector<8x1xf32> to vector<8x128xf32>
      %39 = arith.divf %35, %38 : vector<8x128xf32>
      %c0_25 = arith.constant 0 : index
      %c0_26 = arith.constant 0 : index
      %40 = vector.load %arg16[%c0_25, %c0_26] : memref<8x128xf32, #tpu.memory_space<vmem>>, vector<8x128xf32>
      tpu.vector_store %arg16[%c0_25, %c0_26], %39 {strides = array<i32>} : memref<8x128xf32, #tpu.memory_space<vmem>>, vector<8x128xf32>,
      %41 = vector.shape_cast %39 : vector<8x128xf32> to vector<8x128x1xf32>
      %c0_27 = arith.constant 0 : index
      %c0_28 = arith.constant 0 : index
      %c0_29 = arith.constant 0 : index
      %42 = vector.load %arg3[%c0_27, %c0_28, %c0_29] : memref<8x128x32xbf16, #tpu.memory_space<vmem>>, vector<8x128x32xbf16>
      %43 = arith.extf %42 : vector<8x128x32xbf16> to vector<8x128x32xf32>
      %44 = vector.broadcast %41 : vector<8x128x1xf32> to vector<8x128x32xf32>
      %45 = arith.mulf %44, %43 : vector<8x128x32xf32>
      %cst_30 = arith.constant dense<0.000000e+00> : vector<8x32xf32>
      %46 = vector.multi_reduction <add>, %45, %cst_30 [1] : vector<8x128x32xf32> to vector<8x32xf32>
      %c0_31 = arith.constant 0 : index
      %c0_32 = arith.constant 0 : index
      %47 = vector.load %arg1[%c0_31, %c0_32] : memref<8x32xbf16, #tpu.memory_space<vmem>>, vector<8x32xbf16>
      %c0_33 = arith.constant 0 : index
      %c0_34 = arith.constant 0 : index
      %48 = vector.load %arg19[%c0_33, %c0_34] : memref<8x64xbf16, #tpu.memory_space<vmem>>, vector<8x32xbf16>
      tpu.vector_store %arg19[%c0_33, %c0_34], %47 {strides = array<i32>} : memref<8x64xbf16, #tpu.memory_space<vmem>>, vector<8x32xbf16>,
      %49 = arith.truncf %46 : vector<8x32xf32> to vector<8x32xbf16>
      %c0_35 = arith.constant 0 : index
      %c32 = arith.constant 32 : index
      %50 = vector.load %arg19[%c0_35, %c32] : memref<8x64xbf16, #tpu.memory_space<vmem>>, vector<8x32xbf16>
      tpu.vector_store %arg19[%c0_35, %c32], %49 {strides = array<i32>} : memref<8x64xbf16, #tpu.memory_space<vmem>>, vector<8x32xbf16>,
      %c0_36 = arith.constant 0 : index
      %c0_37 = arith.constant 0 : index
      %51 = vector.load %arg19[%c0_36, %c0_37] : memref<8x64xbf16, #tpu.memory_space<vmem>>, vector<8x64xbf16>
      %c0_38 = arith.constant 0 : index
      %c0_39 = arith.constant 0 : index
      %52 = vector.load %arg9[%c0_38, %c0_39] : memref<64x32xbf16, #tpu.memory_space<vmem>>, vector<64x32xbf16>
      %cst_40 = arith.constant dense<0.000000e+00> : vector<8x32xf32>
      %53 = tpu.matmul %51, %52, %cst_40 {dimension_numbers = #tpu.dot_dimension_numbers<[1], [0], [0], [1], [0, 0, 1, 1], [], []>} : vector<8x64xbf16>, vector<64x32xbf16>, vector<8x32xf32> -> vector<8x32xf32>
      %c0_41 = arith.constant 0 : index
      %c0_42 = arith.constant 0 : index
      %54 = vector.load %arg10[%c0_41, %c0_42] : memref<1x32xf32, #tpu.memory_space<vmem>>, vector<1x32xf32>
      %55 = vector.broadcast %54 : vector<1x32xf32> to vector<8x32xf32>
      %56 = arith.addf %53, %55 : vector<8x32xf32>
      %c0_43 = arith.constant 0 : index
      %c0_44 = arith.constant 0 : index
      %c0_45 = arith.constant 0 : index
      %57 = vector.load %arg2[%c0_43, %c0_44, %c0_45] : memref<2x8x32xf32, #tpu.memory_space<vmem>>, vector<1x8x32xf32>
      %58 = vector.shape_cast %57 : vector<1x8x32xf32> to vector<8x32xf32>
      %59 = arith.truncf %56 : vector<8x32xf32> to vector<8x32xbf16>
      %c0_46 = arith.constant 0 : index
      %c0_47 = arith.constant 0 : index
      %60 = vector.load %arg19[%c0_46, %c0_47] : memref<8x64xbf16, #tpu.memory_space<vmem>>, vector<8x32xbf16>
      tpu.vector_store %arg19[%c0_46, %c0_47], %59 {strides = array<i32>} : memref<8x64xbf16, #tpu.memory_space<vmem>>, vector<8x32xbf16>,
      %61 = arith.truncf %58 : vector<8x32xf32> to vector<8x32xbf16>
      %c0_48 = arith.constant 0 : index
      %c32_49 = arith.constant 32 : index
      %62 = vector.load %arg19[%c0_48, %c32_49] : memref<8x64xbf16, #tpu.memory_space<vmem>>, vector<8x32xbf16>
      tpu.vector_store %arg19[%c0_48, %c32_49], %61 {strides = array<i32>} : memref<8x64xbf16, #tpu.memory_space<vmem>>, vector<8x32xbf16>,
      %c0_50 = arith.constant 0 : index
      %c0_51 = arith.constant 0 : index
      %63 = vector.load %arg19[%c0_50, %c0_51] : memref<8x64xbf16, #tpu.memory_space<vmem>>, vector<8x64xbf16>
      %c0_52 = arith.constant 0 : index
      %c0_53 = arith.constant 0 : index
      %c0_54 = arith.constant 0 : index
      %64 = vector.load %arg11[%c0_52, %c0_53, %c0_54] : memref<2x64x128xbf16, #tpu.memory_space<vmem>>, vector<1x64x128xbf16>
      %65 = vector.shape_cast %64 : vector<1x64x128xbf16> to vector<64x128xbf16>
      %cst_55 = arith.constant dense<0.000000e+00> : vector<8x128xf32>
      %66 = tpu.matmul %63, %65, %cst_55 {dimension_numbers = #tpu.dot_dimension_numbers<[1], [0], [0], [1], [0, 0, 1, 1], [], []>} : vector<8x64xbf16>, vector<64x128xbf16>, vector<8x128xf32> -> vector<8x128xf32>
      %c0_56 = arith.constant 0 : index
      %c0_57 = arith.constant 0 : index
      %c0_58 = arith.constant 0 : index
      %67 = vector.load %arg12[%c0_56, %c0_57, %c0_58] : memref<2x1x128xf32, #tpu.memory_space<vmem>>, vector<1x1x128xf32>
      %68 = vector.shape_cast %67 : vector<1x1x128xf32> to vector<1x128xf32>
      %69 = vector.broadcast %68 : vector<1x128xf32> to vector<8x128xf32>
      %70 = arith.addf %66, %69 : vector<8x128xf32>
      %71 = vector.extract_strided_slice %70 {offsets = [0, 0], sizes = [8, 32], strides = [1, 1]} : vector<8x128xf32> to vector<8x32xf32>
      %72 = arith.negf %71 : vector<8x32xf32>
      %73 = math.exp %72 : vector<8x32xf32>
      %cst_59 = arith.constant 1.000000e+00 : f32
      %74 = vector.broadcast %cst_59 : f32 to vector<8x32xf32>
      %75 = arith.addf %74, %73 : vector<8x32xf32>
      %76 = arith.divf %74, %75 : vector<8x32xf32>
      %77 = vector.extract_strided_slice %70 {offsets = [0, 32], sizes = [8, 32], strides = [1, 1]} : vector<8x128xf32> to vector<8x32xf32>
      %78 = arith.negf %77 : vector<8x32xf32>
      %79 = math.exp %78 : vector<8x32xf32>
      %cst_60 = arith.constant 1.000000e+00 : f32
      %80 = vector.broadcast %cst_60 : f32 to vector<8x32xf32>
      %81 = arith.addf %80, %79 : vector<8x32xf32>
      %82 = arith.divf %80, %81 : vector<8x32xf32>
      %83 = vector.extract_strided_slice %70 {offsets = [0, 64], sizes = [8, 32], strides = [1, 1]} : vector<8x128xf32> to vector<8x32xf32>
      %cst_61 = arith.constant 1.000000e+00 : f32
      %84 = vector.broadcast %cst_61 : f32 to vector<8x32xf32>
      %85 = arith.subf %76, %84 : vector<8x32xf32>
      %86 = vector.extract_strided_slice %70 {offsets = [0, 96], sizes = [8, 32], strides = [1, 1]} : vector<8x128xf32> to vector<8x32xf32>
      %87 = arith.mulf %85, %86 : vector<8x32xf32>
      %88 = arith.addf %83, %87 : vector<8x32xf32>
      %89 = math.tanh %88 : vector<8x32xf32>
      %cst_62 = arith.constant 1.000000e+00 : f32
      %90 = vector.broadcast %cst_62 : f32 to vector<8x32xf32>
      %91 = arith.subf %90, %82 : vector<8x32xf32>
      %92 = arith.mulf %91, %89 : vector<8x32xf32>
      %93 = arith.mulf %82, %58 : vector<8x32xf32>
      %94 = arith.addf %92, %93 : vector<8x32xf32>
      %c0_63 = arith.constant 0 : index
      %c0_64 = arith.constant 0 : index
      %c0_65 = arith.constant 0 : index
      %95 = vector.load %arg15[%c0_63, %c0_64, %c0_65] : memref<2x8x32xf32, #tpu.memory_space<vmem>>, vector<1x8x32xf32>
      %96 = vector.shape_cast %95 : vector<1x8x32xf32> to vector<8x32xf32>
      %97 = vector.shape_cast %94 : vector<8x32xf32> to vector<1x8x32xf32>
      tpu.vector_store %arg15[%c0_63, %c0_64, %c0_65], %97 {strides = array<i32>} : memref<2x8x32xf32, #tpu.memory_space<vmem>>, vector<1x8x32xf32>,
      %c1_66 = arith.constant 1 : index
      %c0_67 = arith.constant 0 : index
      %c0_68 = arith.constant 0 : index
      %98 = vector.load %arg2[%c1_66, %c0_67, %c0_68] : memref<2x8x32xf32, #tpu.memory_space<vmem>>, vector<1x8x32xf32>
      %99 = vector.shape_cast %98 : vector<1x8x32xf32> to vector<8x32xf32>
      %100 = arith.truncf %94 : vector<8x32xf32> to vector<8x32xbf16>
      %c0_69 = arith.constant 0 : index
      %c0_70 = arith.constant 0 : index
      %101 = vector.load %arg19[%c0_69, %c0_70] : memref<8x64xbf16, #tpu.memory_space<vmem>>, vector<8x32xbf16>
      tpu.vector_store %arg19[%c0_69, %c0_70], %100 {strides = array<i32>} : memref<8x64xbf16, #tpu.memory_space<vmem>>, vector<8x32xbf16>,
      %102 = arith.truncf %99 : vector<8x32xf32> to vector<8x32xbf16>
      %c0_71 = arith.constant 0 : index
      %c32_72 = arith.constant 32 : index
      %103 = vector.load %arg19[%c0_71, %c32_72] : memref<8x64xbf16, #tpu.memory_space<vmem>>, vector<8x32xbf16>
      tpu.vector_store %arg19[%c0_71, %c32_72], %102 {strides = array<i32>} : memref<8x64xbf16, #tpu.memory_space<vmem>>, vector<8x32xbf16>,
      %c0_73 = arith.constant 0 : index
      %c0_74 = arith.constant 0 : index
      %104 = vector.load %arg19[%c0_73, %c0_74] : memref<8x64xbf16, #tpu.memory_space<vmem>>, vector<8x64xbf16>
      %c1_75 = arith.constant 1 : index
      %c0_76 = arith.constant 0 : index
      %c0_77 = arith.constant 0 : index
      %105 = vector.load %arg11[%c1_75, %c0_76, %c0_77] : memref<2x64x128xbf16, #tpu.memory_space<vmem>>, vector<1x64x128xbf16>
      %106 = vector.shape_cast %105 : vector<1x64x128xbf16> to vector<64x128xbf16>
      %cst_78 = arith.constant dense<0.000000e+00> : vector<8x128xf32>
      %107 = tpu.matmul %104, %106, %cst_78 {dimension_numbers = #tpu.dot_dimension_numbers<[1], [0], [0], [1], [0, 0, 1, 1], [], []>} : vector<8x64xbf16>, vector<64x128xbf16>, vector<8x128xf32> -> vector<8x128xf32>
      %c1_79 = arith.constant 1 : index
      %c0_80 = arith.constant 0 : index
      %c0_81 = arith.constant 0 : index
      %108 = vector.load %arg12[%c1_79, %c0_80, %c0_81] : memref<2x1x128xf32, #tpu.memory_space<vmem>>, vector<1x1x128xf32>
      %109 = vector.shape_cast %108 : vector<1x1x128xf32> to vector<1x128xf32>
      %110 = vector.broadcast %109 : vector<1x128xf32> to vector<8x128xf32>
      %111 = arith.addf %107, %110 : vector<8x128xf32>
      %112 = vector.extract_strided_slice %111 {offsets = [0, 0], sizes = [8, 32], strides = [1, 1]} : vector<8x128xf32> to vector<8x32xf32>
      %113 = arith.negf %112 : vector<8x32xf32>
      %114 = math.exp %113 : vector<8x32xf32>
      %cst_82 = arith.constant 1.000000e+00 : f32
      %115 = vector.broadcast %cst_82 : f32 to vector<8x32xf32>
      %116 = arith.addf %115, %114 : vector<8x32xf32>
      %117 = arith.divf %115, %116 : vector<8x32xf32>
      %118 = vector.extract_strided_slice %111 {offsets = [0, 32], sizes = [8, 32], strides = [1, 1]} : vector<8x128xf32> to vector<8x32xf32>
      %119 = arith.negf %118 : vector<8x32xf32>
      %120 = math.exp %119 : vector<8x32xf32>
      %cst_83 = arith.constant 1.000000e+00 : f32
      %121 = vector.broadcast %cst_83 : f32 to vector<8x32xf32>
      %122 = arith.addf %121, %120 : vector<8x32xf32>
      %123 = arith.divf %121, %122 : vector<8x32xf32>
      %124 = vector.extract_strided_slice %111 {offsets = [0, 64], sizes = [8, 32], strides = [1, 1]} : vector<8x128xf32> to vector<8x32xf32>
      %cst_84 = arith.constant 1.000000e+00 : f32
      %125 = vector.broadcast %cst_84 : f32 to vector<8x32xf32>
      %126 = arith.subf %117, %125 : vector<8x32xf32>
      %127 = vector.extract_strided_slice %111 {offsets = [0, 96], sizes = [8, 32], strides = [1, 1]} : vector<8x128xf32> to vector<8x32xf32>
      %128 = arith.mulf %126, %127 : vector<8x32xf32>
      %129 = arith.addf %124, %128 : vector<8x32xf32>
      %130 = math.tanh %129 : vector<8x32xf32>
      %cst_85 = arith.constant 1.000000e+00 : f32
      %131 = vector.broadcast %cst_85 : f32 to vector<8x32xf32>
      %132 = arith.subf %131, %123 : vector<8x32xf32>
      %133 = arith.mulf %132, %130 : vector<8x32xf32>
      %134 = arith.mulf %123, %99 : vector<8x32xf32>
      %135 = arith.addf %133, %134 : vector<8x32xf32>
      %c1_86 = arith.constant 1 : index
      %c0_87 = arith.constant 0 : index
      %c0_88 = arith.constant 0 : index
      %136 = vector.load %arg15[%c1_86, %c0_87, %c0_88] : memref<2x8x32xf32, #tpu.memory_space<vmem>>, vector<1x8x32xf32>
      %137 = vector.shape_cast %136 : vector<1x8x32xf32> to vector<8x32xf32>
      %138 = vector.shape_cast %135 : vector<8x32xf32> to vector<1x8x32xf32>
      tpu.vector_store %arg15[%c1_86, %c0_87, %c0_88], %138 {strides = array<i32>} : memref<2x8x32xf32, #tpu.memory_space<vmem>>, vector<1x8x32xf32>,
      %139 = arith.truncf %135 : vector<8x32xf32> to vector<8x32xbf16>
      %c0_89 = arith.constant 0 : index
      %c0_90 = arith.constant 0 : index
      %140 = vector.load %arg18[%c0_89, %c0_90] : memref<8x32xbf16, #tpu.memory_space<vmem>>, vector<8x32xbf16>
      tpu.vector_store %arg18[%c0_89, %c0_90], %139 {strides = array<i32>} : memref<8x32xbf16, #tpu.memory_space<vmem>>, vector<8x32xbf16>,
    } else {
    }
    %c0 = arith.constant 0 : index
    %c0_1 = arith.constant 0 : index
    %3 = vector.load %arg18[%c0, %c0_1] : memref<8x32xbf16, #tpu.memory_space<vmem>>, vector<8x32xbf16>
    %c0_2 = arith.constant 0 : index
    %c0_3 = arith.constant 0 : index
    %4 = vector.load %arg13[%c0_2, %c0_3] : memref<32x128xbf16, #tpu.memory_space<vmem>>, vector<32x128xbf16>
    %cst = arith.constant dense<0.000000e+00> : vector<8x128xf32>
    %5 = tpu.matmul %3, %4, %cst {dimension_numbers = #tpu.dot_dimension_numbers<[1], [0], [0], [1], [0, 0, 1, 1], [], []>} : vector<8x32xbf16>, vector<32x128xbf16>, vector<8x128xf32> -> vector<8x128xf32>
    %c0_4 = arith.constant 0 : index
    %c0_5 = arith.constant 0 : index
    %6 = vector.load %arg14[%c0_4, %c0_5] : memref<1x128xf32, #tpu.memory_space<vmem>>, vector<1x128xf32>
    %7 = vector.broadcast %6 : vector<1x128xf32> to vector<8x128xf32>
    %8 = arith.addf %5, %7 : vector<8x128xf32>
    %c0_6 = arith.constant 0 : index
    %c0_7 = arith.constant 0 : index
    %9 = vector.load %arg17[%c0_6, %c0_7] : memref<8x128xf32, #tpu.memory_space<vmem>>, vector<8x128xf32>
    tpu.vector_store %arg17[%c0_6, %c0_7], %8 {strides = array<i32>} : memref<8x128xf32, #tpu.memory_space<vmem>>, vector<8x128xf32>,
    return
  }
  func.func @transform_0(%arg0: i32) -> (i32, i32) {
    %c0_i32 = arith.constant 0 : i32
    %c0_i32_0 = arith.constant 0 : i32
    %c0_i32_1 = arith.constant 0 : i32
    return %c0_i32, %c0_i32_0 : i32, i32
  }
  func.func @transform_1(%arg0: i32) -> (i32, i32, i32) {
    %c0_i32 = arith.constant 0 : i32
    %c0_i32_0 = arith.constant 0 : i32
    %c0_i32_1 = arith.constant 0 : i32
    %c0_i32_2 = arith.constant 0 : i32
    return %c0_i32, %c0_i32_0, %c0_i32_1 : i32, i32, i32
  }
  func.func @transform_2(%arg0: i32) -> (i32, i32, i32) {
    %c0_i32 = arith.constant 0 : i32
    %c0_i32_0 = arith.constant 0 : i32
    %c0_i32_1 = arith.constant 0 : i32
    %c0_i32_2 = arith.constant 0 : i32
    return %c0_i32, %c0_i32_0, %c0_i32_1 : i32, i32, i32
  }
  func.func @transform_3(%arg0: i32) -> (i32, i32, i32) {
    %c0_i32 = arith.constant 0 : i32
    %c0_i32_0 = arith.constant 0 : i32
    %c0_i32_1 = arith.constant 0 : i32
    %c0_i32_2 = arith.constant 0 : i32
    return %c0_i32, %c0_i32_0, %c0_i32_1 : i32, i32, i32
  }
  func.func @transform_4(%arg0: i32) -> (i32, i32) {
    %c0_i32 = arith.constant 0 : i32
    %c0_i32_0 = arith.constant 0 : i32
    %c0_i32_1 = arith.constant 0 : i32
    return %c0_i32, %c0_i32_0 : i32, i32
  }
  func.func @transform_5(%arg0: i32) -> (i32, i32) {
    %c0_i32 = arith.constant 0 : i32
    %c0_i32_0 = arith.constant 0 : i32
    %c0_i32_1 = arith.constant 0 : i32
    return %c0_i32, %c0_i32_0 : i32, i32
  }
  func.func @transform_6(%arg0: i32) -> (i32, i32) {
    %c0_i32 = arith.constant 0 : i32
    %c0_i32_0 = arith.constant 0 : i32
    %c0_i32_1 = arith.constant 0 : i32
    return %c0_i32, %c0_i32_0 : i32, i32
  }
  func.func @transform_7(%arg0: i32) -> (i32, i32) {
    %c0_i32 = arith.constant 0 : i32
    %c0_i32_0 = arith.constant 0 : i32
    %c0_i32_1 = arith.constant 0 : i32
    return %c0_i32, %c0_i32_0 : i32, i32
  }
  func.func @transform_8(%arg0: i32) -> (i32, i32) {
    %c0_i32 = arith.constant 0 : i32
    %c0_i32_0 = arith.constant 0 : i32
    %c0_i32_1 = arith.constant 0 : i32
    return %c0_i32, %c0_i32_0 : i32, i32
  }
  func.func @transform_9(%arg0: i32) -> (i32, i32) {
    %c0_i32 = arith.constant 0 : i32
    %c0_i32_0 = arith.constant 0 : i32
    %c0_i32_1 = arith.constant 0 : i32
    return %c0_i32, %c0_i32_0 : i32, i32
  }
  func.func @transform_10(%arg0: i32) -> (i32, i32, i32) {
    %c0_i32 = arith.constant 0 : i32
    %c0_i32_0 = arith.constant 0 : i32
    %c0_i32_1 = arith.constant 0 : i32
    %c0_i32_2 = arith.constant 0 : i32
    return %c0_i32, %c0_i32_0, %c0_i32_1 : i32, i32, i32
  }
  func.func @transform_11(%arg0: i32) -> (i32, i32, i32) {
    %c0_i32 = arith.constant 0 : i32
    %c0_i32_0 = arith.constant 0 : i32
    %c0_i32_1 = arith.constant 0 : i32
    %c0_i32_2 = arith.constant 0 : i32
    return %c0_i32, %c0_i32_0, %c0_i32_1 : i32, i32, i32
  }
  func.func @transform_12(%arg0: i32) -> (i32, i32) {
    %c0_i32 = arith.constant 0 : i32
    %c0_i32_0 = arith.constant 0 : i32
    return %c0_i32, %arg0 : i32, i32
  }
  func.func @transform_13(%arg0: i32) -> (i32, i32) {
    %c0_i32 = arith.constant 0 : i32
    %c0_i32_0 = arith.constant 0 : i32
    return %c0_i32, %arg0 : i32, i32
  }
  func.func @transform_14(%arg0: i32) -> (i32, i32, i32) {
    %c0_i32 = arith.constant 0 : i32
    %c0_i32_0 = arith.constant 0 : i32
    %c0_i32_1 = arith.constant 0 : i32
    %c0_i32_2 = arith.constant 0 : i32
    return %c0_i32, %c0_i32_0, %c0_i32_1 : i32, i32, i32
  }
  func.func @transform_15(%arg0: i32) -> (i32, i32) {
    %c0_i32 = arith.constant 0 : i32
    %c0_i32_0 = arith.constant 0 : i32
    %c0_i32_1 = arith.constant 0 : i32
    return %c0_i32, %c0_i32_0 : i32, i32
  }
  func.func @transform_16(%arg0: i32) -> (i32, i32) {
    %c0_i32 = arith.constant 0 : i32
    %c0_i32_0 = arith.constant 0 : i32
    return %c0_i32, %arg0 : i32, i32
  }
}

</mosaic_0001>

<llo_original>
// kernel: tpu_custom_call.1
$region0: #{tpu_custom_call.1}
  #allocation0 [shape = 'u32[]', space=smem, size = 0x4, offset = 0x4, fixed_abs, tag = 'smem constant byte address 0x4 - core index']
  #allocation1 [shape = 'u32[72,128]{1,0:T(1,128)}', space=vmem, size = 0x9000, scoped, tag = 'internal scratch']
  #allocation2 [shape = 'bf16[8,32]{1,0:T(8,128)(2,1)}', space=vmem, size = 0x800, scoped, tag = 'scratch operand']
  #allocation3 [shape = 'bf16[8,64]{1,0:T(8,128)(2,1)}', space=vmem, size = 0x800, scoped, tag = 'scratch operand']
  %s0 = inlined_call_operand.vmem [shape: bf16[8,32], index: 0, kind: input, shape index: {}]
  %s1 = inlined_call_operand.hbm [shape: f32[2,8,32], index: 1, kind: input, shape index: {}, may-alias: {1,14}]
  %s2 = inlined_call_operand.vmem [shape: bf16[8,128,32], index: 2, kind: input, shape index: {}]
  %s3 = inlined_call_operand.vmem [shape: bf16[8,128,32], index: 3, kind: input, shape index: {}]
  %s4 = inlined_call_operand.vmem [shape: f32[8,128], index: 4, kind: input, shape index: {}]
  %s5 = inlined_call_operand.vmem [shape: bf16[32,32], index: 5, kind: input, shape index: {}]
  %s6 = inlined_call_operand.vmem [shape: f32[1,32], index: 6, kind: input, shape index: {}]
  %s7 = inlined_call_operand.vmem [shape: f32[1,32], index: 7, kind: input, shape index: {}]
  %s8 = inlined_call_operand.vmem [shape: bf16[64,32], index: 8, kind: input, shape index: {}]
  %s9 = inlined_call_operand.vmem [shape: f32[1,32], index: 9, kind: input, shape index: {}]
  %s10 = inlined_call_operand.vmem [shape: bf16[2,64,128], index: 10, kind: input, shape index: {}]
  %s11 = inlined_call_operand.vmem [shape: f32[2,1,128], index: 11, kind: input, shape index: {}]
  %s12 = inlined_call_operand.vmem [shape: bf16[32,128], index: 12, kind: input, shape index: {}]
  %s13 = inlined_call_operand.vmem [shape: f32[1,128], index: 13, kind: input, shape index: {}]
  %s14 = inlined_call_operand.hbm [shape: f32[2,8,32], index: 14, kind: output, shape index: {0}, may-alias: {1,14}]
  %s15 = inlined_call_operand.hbm [shape: f32[8,128], index: 15, kind: output, shape index: {1}]
  %s16 = inlined_call_operand.hbm [shape: f32[8,128], index: 16, kind: output, shape index: {2}]
  %17 = xla_tuple %s14, %s15, %s16
  %s18 = sld [smem:[#allocation0]]
  $region90: #{tpu_custom_call.1} parent=0
    _
  %s20 = ssub.s32 1, %s18
  %s21 = scalar_select 0, %s20, %s18
  $region1: #{tpu_custom_call.1} parent=0
    #allocation4 [shape = 'u8[8192]{0}', space=vmem, size = 0x2000, scoped, tag = 'input window, operand 1, single buffered']
    #allocation5 [shape = 's32[1]{0}', space=sflag, size = 0x4, scoped, tag = 'scoped memory for tpu_custom_call.1']
    #allocation6 [shape = 's32[1]{0}', space=sflag, size = 0x4, scoped, tag = 'scoped memory for tpu_custom_call.1']
    #allocation7 [shape = 'u8[8192]{0}', space=vmem, size = 0x2000, scoped, tag = 'output window, operand 0, single buffered']
    #allocation8 [shape = 'u8[4096]{0}', space=vmem, size = 0x1000, scoped, tag = 'output window, operand 1, single buffered']
    #allocation9 [shape = 's32[1]{0}', space=sflag, size = 0x4, scoped, tag = 'scoped memory for tpu_custom_call.1']
    #allocation10 [shape = 'u8[4096]{0}', space=vmem, size = 0x1000, scoped, tag = 'output window, operand 2, single buffered']
    %22 = vsyncpa [#allocation5], 0
    %23 = vsyncpa [#allocation6], 0
    %24 = vsyncpa [#allocation9], 0
    // Predicated region
    $region2: #{tpu_custom_call.1} parent=1 // pred_check
      _
    $region3: #{tpu_custom_call.1} parent=1 // pred_check_branch
      %26 = sbr.rel (0) target = $region5
    $region4: #{tpu_custom_call.1} parent=1 // pred_region
      _
    $region5: #{tpu_custom_call.1} parent=1 // pred_fallthru
      _
    // Predicated region
    $region6: #{tpu_custom_call.1} parent=1 // pred_check
      _
    $region7: #{tpu_custom_call.1} parent=1 // pred_check_branch
      %28 = sbr.rel (0) target = $region9
    $region8: #{tpu_custom_call.1} parent=1 // pred_region
      %30 = vsyncadd [#allocation5], 0
      %s31 = sshll.u32 %s1, 4
      %s32 = int_to_ptr.hbm [resolvable:$true] %s31
      %s33 = sshll.u32 [#allocation4], 4
      %s34 = int_to_ptr.vmem [resolvable:$true] %s33
      %39 = dma.hbm_to_vmem [thread:$0]  %s32, 256, %s34, [#allocation5], 128, 128, 8
    $region9: #{tpu_custom_call.1} parent=1 // pred_fallthru
      _
    // Predicated region
    $region10: #{tpu_custom_call.1} parent=1 // pred_check
      _
    $region11: #{tpu_custom_call.1} parent=1 // pred_check_branch
      %41 = sbr.rel (0) target = $region13
    $region12: #{tpu_custom_call.1} parent=1 // pred_region
      _
    $region13: #{tpu_custom_call.1} parent=1 // pred_fallthru
      _
    // Predicated region
    $region14: #{tpu_custom_call.1} parent=1 // pred_check
      _
    $region15: #{tpu_custom_call.1} parent=1 // pred_check_branch
      %43 = sbr.rel (0) target = $region17
    $region16: #{tpu_custom_call.1} parent=1 // pred_region
      _
    $region17: #{tpu_custom_call.1} parent=1 // pred_fallthru
      _
    // Predicated region
    $region18: #{tpu_custom_call.1} parent=1 // pred_check
      _
    $region19: #{tpu_custom_call.1} parent=1 // pred_check_branch
      %45 = sbr.rel (0) target = $region21
    $region20: #{tpu_custom_call.1} parent=1 // pred_region
      _
    $region21: #{tpu_custom_call.1} parent=1 // pred_fallthru
      _
    // Predicated region
    $region22: #{tpu_custom_call.1} parent=1 // pred_check
      _
    $region23: #{tpu_custom_call.1} parent=1 // pred_check_branch
      %47 = sbr.rel (0) target = $region25
    $region24: #{tpu_custom_call.1} parent=1 // pred_region
      _
    $region25: #{tpu_custom_call.1} parent=1 // pred_fallthru
      _
    // Predicated region
    $region26: #{tpu_custom_call.1} parent=1 // pred_check
      _
    $region27: #{tpu_custom_call.1} parent=1 // pred_check_branch
      %49 = sbr.rel (0) target = $region29
    $region28: #{tpu_custom_call.1} parent=1 // pred_region
      _
    $region29: #{tpu_custom_call.1} parent=1 // pred_fallthru
      _
    // Predicated region
    $region30: #{tpu_custom_call.1} parent=1 // pred_check
      _
    $region31: #{tpu_custom_call.1} parent=1 // pred_check_branch
      %51 = sbr.rel (0) target = $region33
    $region32: #{tpu_custom_call.1} parent=1 // pred_region
      _
    $region33: #{tpu_custom_call.1} parent=1 // pred_fallthru
      _
    // Predicated region
    $region34: #{tpu_custom_call.1} parent=1 // pred_check
      _
    $region35: #{tpu_custom_call.1} parent=1 // pred_check_branch
      %53 = sbr.rel (0) target = $region37
    $region36: #{tpu_custom_call.1} parent=1 // pred_region
      _
    $region37: #{tpu_custom_call.1} parent=1 // pred_fallthru
      _
    // Predicated region
    $region38: #{tpu_custom_call.1} parent=1 // pred_check
      _
    $region39: #{tpu_custom_call.1} parent=1 // pred_check_branch
      %55 = sbr.rel (0) target = $region41
    $region40: #{tpu_custom_call.1} parent=1 // pred_region
      _
    $region41: #{tpu_custom_call.1} parent=1 // pred_fallthru
      _
    // Predicated region
    $region42: #{tpu_custom_call.1} parent=1 // pred_check
      _
    $region43: #{tpu_custom_call.1} parent=1 // pred_check_branch
      %57 = sbr.rel (0) target = $region45
    $region44: #{tpu_custom_call.1} parent=1 // pred_region
      _
    $region45: #{tpu_custom_call.1} parent=1 // pred_fallthru
      _
    // Predicated region
    $region46: #{tpu_custom_call.1} parent=1 // pred_check
      _
    $region47: #{tpu_custom_call.1} parent=1 // pred_check_branch
      %59 = sbr.rel (0) target = $region49
    $region48: #{tpu_custom_call.1} parent=1 // pred_region
      _
    $region49: #{tpu_custom_call.1} parent=1 // pred_fallthru
      _
    // Predicated region
    $region50: #{tpu_custom_call.1} parent=1 // pred_check
      _
    $region51: #{tpu_custom_call.1} parent=1 // pred_check_branch
      %61 = sbr.rel (0) target = $region53
    $region52: #{tpu_custom_call.1} parent=1 // pred_region
      _
    $region53: #{tpu_custom_call.1} parent=1 // pred_fallthru
      _
    // Predicated region
    $region54: #{tpu_custom_call.1} parent=1 // pred_check
      _
    $region55: #{tpu_custom_call.1} parent=1 // pred_check_branch
      %63 = sbr.rel (0) target = $region57
    $region56: #{tpu_custom_call.1} parent=1 // pred_region
      _
    $region57: #{tpu_custom_call.1} parent=1 // pred_fallthru
      _
    // Predicated region
    $region58: #{tpu_custom_call.1} parent=1 // pred_check
      _
    $region59: #{tpu_custom_call.1} parent=1 // pred_check_branch
      %65 = sbr.rel (0) target = $region61
    $region60: #{tpu_custom_call.1} parent=1 // pred_region
      %67 = dma.done [#allocation5], 256
    $region61: #{tpu_custom_call.1} parent=1 // pred_fallthru
      _
    %p69 = scmp.eq.s32.totalorder 0, 0
    // Predicated region
    $region62: #{tpu_custom_call.1} parent=1 // pred_check
      %p70 = pneg %p69
    $region63: #{tpu_custom_call.1} parent=1 // pred_check_branch
      %72 = sbr.rel (%p70) target = $region65
    $region64: #{tpu_custom_call.1} parent=1 // pred_region
      %s73 = scalar_lea.vmem [#allocation4], 8
      %v74 = vld [vmem:[%s73] sm:$0xff]
      %v75 = vpack.c.bf16 %v74, %v74
      %v76 = vld [vmem:[%s5] sm:$0xf]
      %v77 = vld [vmem:[%s5 + $0x4] sm:$0xf]
      %v78 = vld [vmem:[%s5 + $0x8] sm:$0xf]
      %v79 = vld [vmem:[%s5 + $0xc] sm:$0xf]
      %v80 = vld [vmem:[%s6] sm:$0x1]
      %v82 = vperm.slane %v80, 0
      %v88 = vunpack.c.l.b16 %v76
      %v89 = vunpack.c.l.b16 %v77
      %v90 = vunpack.c.l.b16 %v78
      %v91 = vunpack.c.l.b16 %v79
      %v92 = vpack.c.b16 %v89, %v88
      %v93 = vpack.c.b16 %v91, %v90
      %vm96 = vcmask 261120
      %v98 = vsel %vm96, %v75, 0
      %100 = vmatpush.bf16.msra.mxu0 0
      %101 = vmatpush.bf16.msra.mxu0 0
      %102 = vmatpush.bf16.msra.mxu0 0
      %103 = vmatpush.bf16.msra.mxu0 0
      %104 = vmatpush.bf16.msra.mxu0 0
      %105 = vmatpush.bf16.msra.mxu0 0
      %106 = vmatpush.bf16.msra.mxu0 %v93
      %107 = vmatpush.bf16.msra.mxu0 %v92
      %108 = vmatmul.bf16.gmra.mxu0 %v98
      %v109 = vpop.f32.mrf.mxu0
      %v110 = vadd.f32 %v82, %v109
      %v111 = vpop.f32.mrf.mxu0
      %112 = vdwg.mxu0
      %v113 = vld [vmem:[%s3] sm:$0xf]
      %v114 = vld [vmem:[%s3 + $0x4] sm:$0xf]
      %v115 = vld [vmem:[%s3 + $0x8] sm:$0xf]
      %v116 = vld [vmem:[%s3 + $0xc] sm:$0xf]
      %v117 = vld [vmem:[%s3 + $0x10] sm:$0xf]
      %v118 = vld [vmem:[%s3 + $0x14] sm:$0xf]
      %v119 = vld [vmem:[%s3 + $0x18] sm:$0xf]
      %v120 = vld [vmem:[%s3 + $0x1c] sm:$0xf]
      %v121 = vld [vmem:[%s3 + $0x20] sm:$0xf]
      %v122 = vld [vmem:[%s3 + $0x24] sm:$0xf]
      %v123 = vld [vmem:[%s3 + $0x28] sm:$0xf]
      %v124 = vld [vmem:[%s3 + $0x2c] sm:$0xf]
      %v125 = vld [vmem:[%s3 + $0x30] sm:$0xf]
      %v126 = vld [vmem:[%s3 + $0x34] sm:$0xf]
      %v127 = vld [vmem:[%s3 + $0x38] sm:$0xf]
      %v128 = vld [vmem:[%s3 + $0x3c] sm:$0xf]
      %v129 = vld [vmem:[%s3 + $0x40] sm:$0xf]
      %v130 = vld [vmem:[%s3 + $0x44] sm:$0xf]
      %v131 = vld [vmem:[%s3 + $0x48] sm:$0xf]
      %v132 = vld [vmem:[%s3 + $0x4c] sm:$0xf]
      %v133 = vld [vmem:[%s3 + $0x50] sm:$0xf]
      %v134 = vld [vmem:[%s3 + $0x54] sm:$0xf]
      %v135 = vld [vmem:[%s3 + $0x58] sm:$0xf]
      %v136 = vld [vmem:[%s3 + $0x5c] sm:$0xf]
      %v137 = vld [vmem:[%s3 + $0x60] sm:$0xf]
      %v138 = vld [vmem:[%s3 + $0x64] sm:$0xf]
      %v139 = vld [vmem:[%s3 + $0x68] sm:$0xf]
      %v140 = vld [vmem:[%s3 + $0x6c] sm:$0xf]
      %v141 = vld [vmem:[%s3 + $0x70] sm:$0xf]
      %v142 = vld [vmem:[%s3 + $0x74] sm:$0xf]
      %v143 = vld [vmem:[%s3 + $0x78] sm:$0xf]
      %v144 = vld [vmem:[%s3 + $0x7c] sm:$0xf]
      %v145 = vld [vmem:[%s3 + $0x80] sm:$0xf]
      %v146 = vld [vmem:[%s3 + $0x84] sm:$0xf]
      %v147 = vld [vmem:[%s3 + $0x88] sm:$0xf]
      %v148 = vld [vmem:[%s3 + $0x8c] sm:$0xf]
      %v149 = vld [vmem:[%s3 + $0x90] sm:$0xf]
      %v150 = vld [vmem:[%s3 + $0x94] sm:$0xf]
      %v151 = vld [vmem:[%s3 + $0x98] sm:$0xf]
      %v152 = vld [vmem:[%s3 + $0x9c] sm:$0xf]
      %v153 = vld [vmem:[%s3 + $0xa0] sm:$0xf]
      %v154 = vld [vmem:[%s3 + $0xa4] sm:$0xf]
      %v155 = vld [vmem:[%s3 + $0xa8] sm:$0xf]
      %v156 = vld [vmem:[%s3 + $0xac] sm:$0xf]
      %v157 = vld [vmem:[%s3 + $0xb0] sm:$0xf]
      %v158 = vld [vmem:[%s3 + $0xb4] sm:$0xf]
      %v159 = vld [vmem:[%s3 + $0xb8] sm:$0xf]
      %v160 = vld [vmem:[%s3 + $0xbc] sm:$0xf]
      %v161 = vld [vmem:[%s3 + $0xc0] sm:$0xf]
      %v162 = vld [vmem:[%s3 + $0xc4] sm:$0xf]
      %v163 = vld [vmem:[%s3 + $0xc8] sm:$0xf]
      %v164 = vld [vmem:[%s3 + $0xcc] sm:$0xf]
      %v165 = vld [vmem:[%s3 + $0xd0] sm:$0xf]
      %v166 = vld [vmem:[%s3 + $0xd4] sm:$0xf]
      %v167 = vld [vmem:[%s3 + $0xd8] sm:$0xf]
      %v168 = vld [vmem:[%s3 + $0xdc] sm:$0xf]
      %v169 = vld [vmem:[%s3 + $0xe0] sm:$0xf]
      %v170 = vld [vmem:[%s3 + $0xe4] sm:$0xf]
      %v171 = vld [vmem:[%s3 + $0xe8] sm:$0xf]
      %v172 = vld [vmem:[%s3 + $0xec] sm:$0xf]
      %v173 = vld [vmem:[%s3 + $0xf0] sm:$0xf]
      %v174 = vld [vmem:[%s3 + $0xf4] sm:$0xf]
      %v175 = vld [vmem:[%s3 + $0xf8] sm:$0xf]
      %v176 = vld [vmem:[%s3 + $0xfc] sm:$0xf]
      %v177 = vld [vmem:[%s3 + $0x100] sm:$0xf]
      %v178 = vld [vmem:[%s3 + $0x104] sm:$0xf]
      %v179 = vld [vmem:[%s3 + $0x108] sm:$0xf]
      %v180 = vld [vmem:[%s3 + $0x10c] sm:$0xf]
      %v181 = vld [vmem:[%s3 + $0x110] sm:$0xf]
      %v182 = vld [vmem:[%s3 + $0x114] sm:$0xf]
      %v183 = vld [vmem:[%s3 + $0x118] sm:$0xf]
      %v184 = vld [vmem:[%s3 + $0x11c] sm:$0xf]
      %v185 = vld [vmem:[%s3 + $0x120] sm:$0xf]
      %v186 = vld [vmem:[%s3 + $0x124] sm:$0xf]
      %v187 = vld [vmem:[%s3 + $0x128] sm:$0xf]
      %v188 = vld [vmem:[%s3 + $0x12c] sm:$0xf]
      %v189 = vld [vmem:[%s3 + $0x130] sm:$0xf]
      %v190 = vld [vmem:[%s3 + $0x134] sm:$0xf]
      %v191 = vld [vmem:[%s3 + $0x138] sm:$0xf]
      %v192 = vld [vmem:[%s3 + $0x13c] sm:$0xf]
      %v193 = vld [vmem:[%s3 + $0x140] sm:$0xf]
      %v194 = vld [vmem:[%s3 + $0x144] sm:$0xf]
      %v195 = vld [vmem:[%s3 + $0x148] sm:$0xf]
      %v196 = vld [vmem:[%s3 + $0x14c] sm:$0xf]
      %v197 = vld [vmem:[%s3 + $0x150] sm:$0xf]
      %v198 = vld [vmem:[%s3 + $0x154] sm:$0xf]
      %v199 = vld [vmem:[%s3 + $0x158] sm:$0xf]
      %v200 = vld [vmem:[%s3 + $0x15c] sm:$0xf]
      %v201 = vld [vmem:[%s3 + $0x160] sm:$0xf]
      %v202 = vld [vmem:[%s3 + $0x164] sm:$0xf]
      %v203 = vld [vmem:[%s3 + $0x168] sm:$0xf]
      %v204 = vld [vmem:[%s3 + $0x16c] sm:$0xf]
      %v205 = vld [vmem:[%s3 + $0x170] sm:$0xf]
      %v206 = vld [vmem:[%s3 + $0x174] sm:$0xf]
      %v207 = vld [vmem:[%s3 + $0x178] sm:$0xf]
      %v208 = vld [vmem:[%s3 + $0x17c] sm:$0xf]
      %v209 = vld [vmem:[%s3 + $0x180] sm:$0xf]
      %v210 = vld [vmem:[%s3 + $0x184] sm:$0xf]
      %v211 = vld [vmem:[%s3 + $0x188] sm:$0xf]
      %v212 = vld [vmem:[%s3 + $0x18c] sm:$0xf]
      %v213 = vld [vmem:[%s3 + $0x190] sm:$0xf]
      %v214 = vld [vmem:[%s3 + $0x194] sm:$0xf]
      %v215 = vld [vmem:[%s3 + $0x198] sm:$0xf]
      %v216 = vld [vmem:[%s3 + $0x19c] sm:$0xf]
      %v217 = vld [vmem:[%s3 + $0x1a0] sm:$0xf]
      %v218 = vld [vmem:[%s3 + $0x1a4] sm:$0xf]
      %v219 = vld [vmem:[%s3 + $0x1a8] sm:$0xf]
      %v220 = vld [vmem:[%s3 + $0x1ac] sm:$0xf]
      %v221 = vld [vmem:[%s3 + $0x1b0] sm:$0xf]
      %v222 = vld [vmem:[%s3 + $0x1b4] sm:$0xf]
      %v223 = vld [vmem:[%s3 + $0x1b8] sm:$0xf]
      %v224 = vld [vmem:[%s3 + $0x1bc] sm:$0xf]
      %v225 = vld [vmem:[%s3 + $0x1c0] sm:$0xf]
      %v226 = vld [vmem:[%s3 + $0x1c4] sm:$0xf]
      %v227 = vld [vmem:[%s3 + $0x1c8] sm:$0xf]
      %v228 = vld [vmem:[%s3 + $0x1cc] sm:$0xf]
      %v229 = vld [vmem:[%s3 + $0x1d0] sm:$0xf]
      %v230 = vld [vmem:[%s3 + $0x1d4] sm:$0xf]
      %v231 = vld [vmem:[%s3 + $0x1d8] sm:$0xf]
      %v232 = vld [vmem:[%s3 + $0x1dc] sm:$0xf]
      %v233 = vld [vmem:[%s3 + $0x1e0] sm:$0xf]
      %v234 = vld [vmem:[%s3 + $0x1e4] sm:$0xf]
      %v235 = vld [vmem:[%s3 + $0x1e8] sm:$0xf]
      %v236 = vld [vmem:[%s3 + $0x1ec] sm:$0xf]
      %v237 = vld [vmem:[%s3 + $0x1f0] sm:$0xf]
      %v238 = vld [vmem:[%s3 + $0x1f4] sm:$0xf]
      %v239 = vld [vmem:[%s3 + $0x1f8] sm:$0xf]
      %v240 = vld [vmem:[%s3 + $0x1fc] sm:$0xf]
      %v241 = vunpack.c.l.bf16 %v113
      %v242 = vunpack.c.l.bf16 %v114
      %v243 = vunpack.c.l.bf16 %v115
      %v244 = vunpack.c.l.bf16 %v116
      %v245 = vunpack.c.l.bf16 %v117
      %v246 = vunpack.c.l.bf16 %v118
      %v247 = vunpack.c.l.bf16 %v119
      %v248 = vunpack.c.l.bf16 %v120
      %v249 = vunpack.c.l.bf16 %v121
      %v250 = vunpack.c.l.bf16 %v122
      %v251 = vunpack.c.l.bf16 %v123
      %v252 = vunpack.c.l.bf16 %v124
      %v253 = vunpack.c.l.bf16 %v125
      %v254 = vunpack.c.l.bf16 %v126
      %v255 = vunpack.c.l.bf16 %v127
      %v256 = vunpack.c.l.bf16 %v128
      %v257 = vunpack.c.l.bf16 %v129
      %v258 = vunpack.c.l.bf16 %v130
      %v259 = vunpack.c.l.bf16 %v131
      %v260 = vunpack.c.l.bf16 %v132
      %v261 = vunpack.c.l.bf16 %v133
      %v262 = vunpack.c.l.bf16 %v134
      %v263 = vunpack.c.l.bf16 %v135
      %v264 = vunpack.c.l.bf16 %v136
      %v265 = vunpack.c.l.bf16 %v137
      %v266 = vunpack.c.l.bf16 %v138
      %v267 = vunpack.c.l.bf16 %v139
      %v268 = vunpack.c.l.bf16 %v140
      %v269 = vunpack.c.l.bf16 %v141
      %v270 = vunpack.c.l.bf16 %v142
      %v271 = vunpack.c.l.bf16 %v143
      %v272 = vunpack.c.l.bf16 %v144
      %v273 = vunpack.c.l.bf16 %v145
      %v274 = vunpack.c.l.bf16 %v146
      %v275 = vunpack.c.l.bf16 %v147
      %v276 = vunpack.c.l.bf16 %v148
      %v277 = vunpack.c.l.bf16 %v149
      %v278 = vunpack.c.l.bf16 %v150
      %v279 = vunpack.c.l.bf16 %v151
      %v280 = vunpack.c.l.bf16 %v152
      %v281 = vunpack.c.l.bf16 %v153
      %v282 = vunpack.c.l.bf16 %v154
      %v283 = vunpack.c.l.bf16 %v155
      %v284 = vunpack.c.l.bf16 %v156
      %v285 = vunpack.c.l.bf16 %v157
      %v286 = vunpack.c.l.bf16 %v158
      %v287 = vunpack.c.l.bf16 %v159
      %v288 = vunpack.c.l.bf16 %v160
      %v289 = vunpack.c.l.bf16 %v161
      %v290 = vunpack.c.l.bf16 %v162
      %v291 = vunpack.c.l.bf16 %v163
      %v292 = vunpack.c.l.bf16 %v164
      %v293 = vunpack.c.l.bf16 %v165
      %v294 = vunpack.c.l.bf16 %v166
      %v295 = vunpack.c.l.bf16 %v167
      %v296 = vunpack.c.l.bf16 %v168
      %v297 = vunpack.c.l.bf16 %v169
      %v298 = vunpack.c.l.bf16 %v170
      %v299 = vunpack.c.l.bf16 %v171
      %v300 = vunpack.c.l.bf16 %v172
      %v301 = vunpack.c.l.bf16 %v173
      %v302 = vunpack.c.l.bf16 %v174
      %v303 = vunpack.c.l.bf16 %v175
      %v304 = vunpack.c.l.bf16 %v176
      %v305 = vunpack.c.l.bf16 %v177
      %v306 = vunpack.c.l.bf16 %v178
      %v307 = vunpack.c.l.bf16 %v179
      %v308 = vunpack.c.l.bf16 %v180
      %v309 = vunpack.c.l.bf16 %v181
      %v310 = vunpack.c.l.bf16 %v182
      %v311 = vunpack.c.l.bf16 %v183
      %v312 = vunpack.c.l.bf16 %v184
      %v313 = vunpack.c.l.bf16 %v185
      %v314 = vunpack.c.l.bf16 %v186
      %v315 = vunpack.c.l.bf16 %v187
      %v316 = vunpack.c.l.bf16 %v188
      %v317 = vunpack.c.l.bf16 %v189
      %v318 = vunpack.c.l.bf16 %v190
      %v319 = vunpack.c.l.bf16 %v191
      %v320 = vunpack.c.l.bf16 %v192
      %v321 = vunpack.c.l.bf16 %v193
      %v322 = vunpack.c.l.bf16 %v194
      %v323 = vunpack.c.l.bf16 %v195
      %v324 = vunpack.c.l.bf16 %v196
      %v325 = vunpack.c.l.bf16 %v197
      %v326 = vunpack.c.l.bf16 %v198
      %v327 = vunpack.c.l.bf16 %v199
      %v328 = vunpack.c.l.bf16 %v200
      %v329 = vunpack.c.l.bf16 %v201
      %v330 = vunpack.c.l.bf16 %v202
      %v331 = vunpack.c.l.bf16 %v203
      %v332 = vunpack.c.l.bf16 %v204
      %v333 = vunpack.c.l.bf16 %v205
      %v334 = vunpack.c.l.bf16 %v206
      %v335 = vunpack.c.l.bf16 %v207
      %v336 = vunpack.c.l.bf16 %v208
      %v337 = vunpack.c.l.bf16 %v209
      %v338 = vunpack.c.l.bf16 %v210
      %v339 = vunpack.c.l.bf16 %v211
      %v340 = vunpack.c.l.bf16 %v212
      %v341 = vunpack.c.l.bf16 %v213
      %v342 = vunpack.c.l.bf16 %v214
      %v343 = vunpack.c.l.bf16 %v215
      %v344 = vunpack.c.l.bf16 %v216
      %v345 = vunpack.c.l.bf16 %v217
      %v346 = vunpack.c.l.bf16 %v218
      %v347 = vunpack.c.l.bf16 %v219
      %v348 = vunpack.c.l.bf16 %v220
      %v349 = vunpack.c.l.bf16 %v221
      %v350 = vunpack.c.l.bf16 %v222
      %v351 = vunpack.c.l.bf16 %v223
      %v352 = vunpack.c.l.bf16 %v224
      %v353 = vunpack.c.l.bf16 %v225
      %v354 = vunpack.c.l.bf16 %v226
      %v355 = vunpack.c.l.bf16 %v227
      %v356 = vunpack.c.l.bf16 %v228
      %v357 = vunpack.c.l.bf16 %v229
      %v358 = vunpack.c.l.bf16 %v230
      %v359 = vunpack.c.l.bf16 %v231
      %v360 = vunpack.c.l.bf16 %v232
      %v361 = vunpack.c.l.bf16 %v233
      %v362 = vunpack.c.l.bf16 %v234
      %v363 = vunpack.c.l.bf16 %v235
      %v364 = vunpack.c.l.bf16 %v236
      %v365 = vunpack.c.l.bf16 %v237
      %v366 = vunpack.c.l.bf16 %v238
      %v367 = vunpack.c.l.bf16 %v239
      %v368 = vunpack.c.l.bf16 %v240
      %v370 = vrot.slane %v110, 1
      %v371 = vrot.slane %v110, 2
      %v372 = vrot.slane %v110, 3
      %v373 = vrot.slane %v110, 4
      %v374 = vrot.slane %v110, 5
      %v375 = vrot.slane %v110, 6
      %v376 = vrot.slane %v110, 7
      %v377 = vperm.slane %v110, 0
      %v378 = vperm.slane %v370, 0
      %v379 = vperm.slane %v371, 0
      %v380 = vperm.slane %v372, 0
      %v381 = vperm.slane %v373, 0
      %v382 = vperm.slane %v374, 0
      %v383 = vperm.slane %v375, 0
      %v384 = vperm.slane %v376, 0
      %v393 = vadd.f32 %v241, %v377
      %v394 = vadd.f32 %v242, %v377
      %v395 = vadd.f32 %v243, %v377
      %v396 = vadd.f32 %v244, %v377
      %v397 = vadd.f32 %v245, %v377
      %v398 = vadd.f32 %v246, %v377
      %v399 = vadd.f32 %v247, %v377
      %v400 = vadd.f32 %v248, %v377
      %v401 = vadd.f32 %v249, %v377
      %v402 = vadd.f32 %v250, %v377
      %v403 = vadd.f32 %v251, %v377
      %v404 = vadd.f32 %v252, %v377
      %v405 = vadd.f32 %v253, %v377
      %v406 = vadd.f32 %v254, %v377
      %v407 = vadd.f32 %v255, %v377
      %v408 = vadd.f32 %v256, %v377
      %v409 = vadd.f32 %v257, %v378
      %v410 = vadd.f32 %v258, %v378
      %v411 = vadd.f32 %v259, %v378
      %v412 = vadd.f32 %v260, %v378
      %v413 = vadd.f32 %v261, %v378
      %v414 = vadd.f32 %v262, %v378
      %v415 = vadd.f32 %v263, %v378
      %v416 = vadd.f32 %v264, %v378
      %v417 = vadd.f32 %v265, %v378
      %v418 = vadd.f32 %v266, %v378
      %v419 = vadd.f32 %v267, %v378
      %v420 = vadd.f32 %v268, %v378
      %v421 = vadd.f32 %v269, %v378
      %v422 = vadd.f32 %v270, %v378
      %v423 = vadd.f32 %v271, %v378
      %v424 = vadd.f32 %v272, %v378
      %v425 = vadd.f32 %v273, %v379
      %v426 = vadd.f32 %v274, %v379
      %v427 = vadd.f32 %v275, %v379
      %v428 = vadd.f32 %v276, %v379
      %v429 = vadd.f32 %v277, %v379
      %v430 = vadd.f32 %v278, %v379
      %v431 = vadd.f32 %v279, %v379
      %v432 = vadd.f32 %v280, %v379
      %v433 = vadd.f32 %v281, %v379
      %v434 = vadd.f32 %v282, %v379
      %v435 = vadd.f32 %v283, %v379
      %v436 = vadd.f32 %v284, %v379
      %v437 = vadd.f32 %v285, %v379
      %v438 = vadd.f32 %v286, %v379
      %v439 = vadd.f32 %v287, %v379
      %v440 = vadd.f32 %v288, %v379
      %v441 = vadd.f32 %v289, %v380
      %v442 = vadd.f32 %v290, %v380
      %v443 = vadd.f32 %v291, %v380
      %v444 = vadd.f32 %v292, %v380
      %v445 = vadd.f32 %v293, %v380
      %v446 = vadd.f32 %v294, %v380
      %v447 = vadd.f32 %v295, %v380
      %v448 = vadd.f32 %v296, %v380
      %v449 = vadd.f32 %v297, %v380
      %v450 = vadd.f32 %v298, %v380
      %v451 = vadd.f32 %v299, %v380
      %v452 = vadd.f32 %v300, %v380
      %v453 = vadd.f32 %v301, %v380
      %v454 = vadd.f32 %v302, %v380
      %v455 = vadd.f32 %v303, %v380
      %v456 = vadd.f32 %v304, %v380
      %v457 = vadd.f32 %v305, %v381
      %v458 = vadd.f32 %v306, %v381
      %v459 = vadd.f32 %v307, %v381
      %v460 = vadd.f32 %v308, %v381
      %v461 = vadd.f32 %v309, %v381
      %v462 = vadd.f32 %v310, %v381
      %v463 = vadd.f32 %v311, %v381
      %v464 = vadd.f32 %v312, %v381
      %v465 = vadd.f32 %v313, %v381
      %v466 = vadd.f32 %v314, %v381
      %v467 = vadd.f32 %v315, %v381
      %v468 = vadd.f32 %v316, %v381
      %v469 = vadd.f32 %v317, %v381
      %v470 = vadd.f32 %v318, %v381
      %v471 = vadd.f32 %v319, %v381
      %v472 = vadd.f32 %v320, %v381
      %v473 = vadd.f32 %v321, %v382
      %v474 = vadd.f32 %v322, %v382
      %v475 = vadd.f32 %v323, %v382
      %v476 = vadd.f32 %v324, %v382
      %v477 = vadd.f32 %v325, %v382
      %v478 = vadd.f32 %v326, %v382
      %v479 = vadd.f32 %v327, %v382
      %v480 = vadd.f32 %v328, %v382
      %v481 = vadd.f32 %v329, %v382
      %v482 = vadd.f32 %v330, %v382
      %v483 = vadd.f32 %v331, %v382
      %v484 = vadd.f32 %v332, %v382
      %v485 = vadd.f32 %v333, %v382
      %v486 = vadd.f32 %v334, %v382
      %v487 = vadd.f32 %v335, %v382
      %v488 = vadd.f32 %v336, %v382
      %v489 = vadd.f32 %v337, %v383
      %v490 = vadd.f32 %v338, %v383
      %v491 = vadd.f32 %v339, %v383
      %v492 = vadd.f32 %v340, %v383
      %v493 = vadd.f32 %v341, %v383
      %v494 = vadd.f32 %v342, %v383
      %v495 = vadd.f32 %v343, %v383
      %v496 = vadd.f32 %v344, %v383
      %v497 = vadd.f32 %v345, %v383
      %v498 = vadd.f32 %v346, %v383
      %v499 = vadd.f32 %v347, %v383
      %v500 = vadd.f32 %v348, %v383
      %v501 = vadd.f32 %v349, %v383
      %v502 = vadd.f32 %v350, %v383
      %v503 = vadd.f32 %v351, %v383
      %v504 = vadd.f32 %v352, %v383
      %v505 = vadd.f32 %v353, %v384
      %v506 = vadd.f32 %v354, %v384
      %v507 = vadd.f32 %v355, %v384
      %v508 = vadd.f32 %v356, %v384
      %v509 = vadd.f32 %v357, %v384
      %v510 = vadd.f32 %v358, %v384
      %v511 = vadd.f32 %v359, %v384
      %v512 = vadd.f32 %v360, %v384
      %v513 = vadd.f32 %v361, %v384
      %v514 = vadd.f32 %v362, %v384
      %v515 = vadd.f32 %v363, %v384
      %v516 = vadd.f32 %v364, %v384
      %v517 = vadd.f32 %v365, %v384
      %v518 = vadd.f32 %v366, %v384
      %v519 = vadd.f32 %v367, %v384
      %v520 = vadd.f32 %v368, %v384
      %v521 = vtanh.pop %v393
      %v522 = vtanh.pop %v394
      %v523 = vtanh.pop %v395
      %v524 = vtanh.pop %v396
      %v525 = vtanh.pop %v397
      %v526 = vtanh.pop %v398
      %v527 = vtanh.pop %v399
      %v528 = vtanh.pop %v400
      %v529 = vtanh.pop %v401
      %v530 = vtanh.pop %v402
      %v531 = vtanh.pop %v403
      %v532 = vtanh.pop %v404
      %v533 = vtanh.pop %v405
      %v534 = vtanh.pop %v406
      %v535 = vtanh.pop %v407
      %v536 = vtanh.pop %v408
      %v537 = vtanh.pop %v409
      %v538 = vtanh.pop %v410
      %v539 = vtanh.pop %v411
      %v540 = vtanh.pop %v412
      %v541 = vtanh.pop %v413
      %v542 = vtanh.pop %v414
      %v543 = vtanh.pop %v415
      %v544 = vtanh.pop %v416
      %v545 = vtanh.pop %v417
      %v546 = vtanh.pop %v418
      %v547 = vtanh.pop %v419
      %v548 = vtanh.pop %v420
      %v549 = vtanh.pop %v421
      %v550 = vtanh.pop %v422
      %v551 = vtanh.pop %v423
      %v552 = vtanh.pop %v424
      %v553 = vtanh.pop %v425
      %v554 = vtanh.pop %v426
      %v555 = vtanh.pop %v427
      %v556 = vtanh.pop %v428
      %v557 = vtanh.pop %v429
      %v558 = vtanh.pop %v430
      %v559 = vtanh.pop %v431
      %v560 = vtanh.pop %v432
      %v561 = vtanh.pop %v433
      %v562 = vtanh.pop %v434
      %v563 = vtanh.pop %v435
      %v564 = vtanh.pop %v436
      %v565 = vtanh.pop %v437
      %v566 = vtanh.pop %v438
      %v567 = vtanh.pop %v439
      %v568 = vtanh.pop %v440
      %v569 = vtanh.pop %v441
      %v570 = vtanh.pop %v442
      %v571 = vtanh.pop %v443
      %v572 = vtanh.pop %v444
      %v573 = vtanh.pop %v445
      %v574 = vtanh.pop %v446
      %v575 = vtanh.pop %v447
      %v576 = vtanh.pop %v448
      %v577 = vtanh.pop %v449
      %v578 = vtanh.pop %v450
      %v579 = vtanh.pop %v451
      %v580 = vtanh.pop %v452
      %v581 = vtanh.pop %v453
      %v582 = vtanh.pop %v454
      %v583 = vtanh.pop %v455
      %v584 = vtanh.pop %v456
      %v585 = vtanh.pop %v457
      %v586 = vtanh.pop %v458
      %v587 = vtanh.pop %v459
      %v588 = vtanh.pop %v460
      %v589 = vtanh.pop %v461
      %v590 = vtanh.pop %v462
      %v591 = vtanh.pop %v463
      %v592 = vtanh.pop %v464
      %v593 = vtanh.pop %v465
      %v594 = vtanh.pop %v466
      %v595 = vtanh.pop %v467
      %v596 = vtanh.pop %v468
      %v597 = vtanh.pop %v469
      %v598 = vtanh.pop %v470
      %v599 = vtanh.pop %v471
      %v600 = vtanh.pop %v472
      %v601 = vtanh.pop %v473
      %v602 = vtanh.pop %v474
      %v603 = vtanh.pop %v475
      %v604 = vtanh.pop %v476
      %v605 = vtanh.pop %v477
      %v606 = vtanh.pop %v478
      %v607 = vtanh.pop %v479
      %v608 = vtanh.pop %v480
      %v609 = vtanh.pop %v481
      %v610 = vtanh.pop %v482
      %v611 = vtanh.pop %v483
      %v612 = vtanh.pop %v484
      %v613 = vtanh.pop %v485
      %v614 = vtanh.pop %v486
      %v615 = vtanh.pop %v487
      %v616 = vtanh.pop %v488
      %v617 = vtanh.pop %v489
      %v618 = vtanh.pop %v490
      %v619 = vtanh.pop %v491
      %v620 = vtanh.pop %v492
      %v621 = vtanh.pop %v493
      %v622 = vtanh.pop %v494
      %v623 = vtanh.pop %v495
      %v624 = vtanh.pop %v496
      %v625 = vtanh.pop %v497
      %v626 = vtanh.pop %v498
      %v627 = vtanh.pop %v499
      %v628 = vtanh.pop %v500
      %v629 = vtanh.pop %v501
      %v630 = vtanh.pop %v502
      %v631 = vtanh.pop %v503
      %v632 = vtanh.pop %v504
      %v633 = vtanh.pop %v505
      %v634 = vtanh.pop %v506
      %v635 = vtanh.pop %v507
      %v636 = vtanh.pop %v508
      %v637 = vtanh.pop %v509
      %v638 = vtanh.pop %v510
      %v639 = vtanh.pop %v511
      %v640 = vtanh.pop %v512
      %v641 = vtanh.pop %v513
      %v642 = vtanh.pop %v514
      %v643 = vtanh.pop %v515
      %v644 = vtanh.pop %v516
      %v645 = vtanh.pop %v517
      %v646 = vtanh.pop %v518
      %v647 = vtanh.pop %v519
      %v648 = vtanh.pop %v520
      %v649 = vld [vmem:[%s7] sm:$0x1]
      %v651 = vperm.slane %v649, 0
      %v653 = vmul.f32 %v521, %v651
      %v654 = vmul.f32 %v522, %v651
      %v655 = vmul.f32 %v523, %v651
      %v656 = vmul.f32 %v524, %v651
      %v657 = vmul.f32 %v525, %v651
      %v658 = vmul.f32 %v526, %v651
      %v659 = vmul.f32 %v527, %v651
      %v660 = vmul.f32 %v528, %v651
      %v661 = vmul.f32 %v529, %v651
      %v662 = vmul.f32 %v530, %v651
      %v663 = vmul.f32 %v531, %v651
      %v664 = vmul.f32 %v532, %v651
      %v665 = vmul.f32 %v533, %v651
      %v666 = vmul.f32 %v534, %v651
      %v667 = vmul.f32 %v535, %v651
      %v668 = vmul.f32 %v536, %v651
      %v669 = vmul.f32 %v537, %v651
      %v670 = vmul.f32 %v538, %v651
      %v671 = vmul.f32 %v539, %v651
      %v672 = vmul.f32 %v540, %v651
      %v673 = vmul.f32 %v541, %v651
      %v674 = vmul.f32 %v542, %v651
      %v675 = vmul.f32 %v543, %v651
      %v676 = vmul.f32 %v544, %v651
      %v677 = vmul.f32 %v545, %v651
      %v678 = vmul.f32 %v546, %v651
      %v679 = vmul.f32 %v547, %v651
      %v680 = vmul.f32 %v548, %v651
      %v681 = vmul.f32 %v549, %v651
      %v682 = vmul.f32 %v550, %v651
      %v683 = vmul.f32 %v551, %v651
      %v684 = vmul.f32 %v552, %v651
      %v685 = vmul.f32 %v553, %v651
      %v686 = vmul.f32 %v554, %v651
      %v687 = vmul.f32 %v555, %v651
      %v688 = vmul.f32 %v556, %v651
      %v689 = vmul.f32 %v557, %v651
      %v690 = vmul.f32 %v558, %v651
      %v691 = vmul.f32 %v559, %v651
      %v692 = vmul.f32 %v560, %v651
      %v693 = vmul.f32 %v561, %v651
      %v694 = vmul.f32 %v562, %v651
      %v695 = vmul.f32 %v563, %v651
      %v696 = vmul.f32 %v564, %v651
      %v697 = vmul.f32 %v565, %v651
      %v698 = vmul.f32 %v566, %v651
      %v699 = vmul.f32 %v567, %v651
      %v700 = vmul.f32 %v568, %v651
      %v701 = vmul.f32 %v569, %v651
      %v702 = vmul.f32 %v570, %v651
      %v703 = vmul.f32 %v571, %v651
      %v704 = vmul.f32 %v572, %v651
      %v705 = vmul.f32 %v573, %v651
      %v706 = vmul.f32 %v574, %v651
      %v707 = vmul.f32 %v575, %v651
      %v708 = vmul.f32 %v576, %v651
      %v709 = vmul.f32 %v577, %v651
      %v710 = vmul.f32 %v578, %v651
      %v711 = vmul.f32 %v579, %v651
      %v712 = vmul.f32 %v580, %v651
      %v713 = vmul.f32 %v581, %v651
      %v714 = vmul.f32 %v582, %v651
      %v715 = vmul.f32 %v583, %v651
      %v716 = vmul.f32 %v584, %v651
      %v717 = vmul.f32 %v585, %v651
      %v718 = vmul.f32 %v586, %v651
      %v719 = vmul.f32 %v587, %v651
      %v720 = vmul.f32 %v588, %v651
      %v721 = vmul.f32 %v589, %v651
      %v722 = vmul.f32 %v590, %v651
      %v723 = vmul.f32 %v591, %v651
      %v724 = vmul.f32 %v592, %v651
      %v725 = vmul.f32 %v593, %v651
      %v726 = vmul.f32 %v594, %v651
      %v727 = vmul.f32 %v595, %v651
      %v728 = vmul.f32 %v596, %v651
      %v729 = vmul.f32 %v597, %v651
      %v730 = vmul.f32 %v598, %v651
      %v731 = vmul.f32 %v599, %v651
      %v732 = vmul.f32 %v600, %v651
      %v733 = vmul.f32 %v601, %v651
      %v734 = vmul.f32 %v602, %v651
      %v735 = vmul.f32 %v603, %v651
      %v736 = vmul.f32 %v604, %v651
      %v737 = vmul.f32 %v605, %v651
      %v738 = vmul.f32 %v606, %v651
      %v739 = vmul.f32 %v607, %v651
      %v740 = vmul.f32 %v608, %v651
      %v741 = vmul.f32 %v609, %v651
      %v742 = vmul.f32 %v610, %v651
      %v743 = vmul.f32 %v611, %v651
      %v744 = vmul.f32 %v612, %v651
      %v745 = vmul.f32 %v613, %v651
      %v746 = vmul.f32 %v614, %v651
      %v747 = vmul.f32 %v615, %v651
      %v748 = vmul.f32 %v616, %v651
      %v749 = vmul.f32 %v617, %v651
      %v750 = vmul.f32 %v618, %v651
      %v751 = vmul.f32 %v619, %v651
      %v752 = vmul.f32 %v620, %v651
      %v753 = vmul.f32 %v621, %v651
      %v754 = vmul.f32 %v622, %v651
      %v755 = vmul.f32 %v623, %v651
      %v756 = vmul.f32 %v624, %v651
      %v757 = vmul.f32 %v625, %v651
      %v758 = vmul.f32 %v626, %v651
      %v759 = vmul.f32 %v627, %v651
      %v760 = vmul.f32 %v628, %v651
      %v761 = vmul.f32 %v629, %v651
      %v762 = vmul.f32 %v630, %v651
      %v763 = vmul.f32 %v631, %v651
      %v764 = vmul.f32 %v632, %v651
      %v765 = vmul.f32 %v633, %v651
      %v766 = vmul.f32 %v634, %v651
      %v767 = vmul.f32 %v635, %v651
      %v768 = vmul.f32 %v636, %v651
      %v769 = vmul.f32 %v637, %v651
      %v770 = vmul.f32 %v638, %v651
      %v771 = vmul.f32 %v639, %v651
      %v772 = vmul.f32 %v640, %v651
      %v773 = vmul.f32 %v641, %v651
      %v774 = vmul.f32 %v642, %v651
      %v775 = vmul.f32 %v643, %v651
      %v776 = vmul.f32 %v644, %v651
      %v777 = vmul.f32 %v645, %v651
      %v778 = vmul.f32 %v646, %v651
      %v779 = vmul.f32 %v647, %v651
      %v780 = vmul.f32 %v648, %v651
      %v781 = vsel %vm96, %v653, 0.0
      %782 = vadd.xlane.f32.xlu0 %v781
      %v783 = vpop.xlane.xlu0 %782
      %v784 = vsel %vm96, %v654, 0.0
      %785 = vadd.xlane.f32.xlu0 %v784
      %v786 = vpop.xlane.xlu0 %785
      %v787 = vsel %vm96, %v655, 0.0
      %788 = vadd.xlane.f32.xlu0 %v787
      %v789 = vpop.xlane.xlu0 %788
      %v790 = vsel %vm96, %v656, 0.0
      %791 = vadd.xlane.f32.xlu0 %v790
      %v792 = vpop.xlane.xlu0 %791
      %v793 = vsel %vm96, %v657, 0.0
      %794 = vadd.xlane.f32.xlu0 %v793
      %v795 = vpop.xlane.xlu0 %794
      %v796 = vsel %vm96, %v658, 0.0
      %797 = vadd.xlane.f32.xlu0 %v796
      %v798 = vpop.xlane.xlu0 %797
      %v799 = vsel %vm96, %v659, 0.0
      %800 = vadd.xlane.f32.xlu0 %v799
      %v801 = vpop.xlane.xlu0 %800
      %v802 = vsel %vm96, %v660, 0.0
      %803 = vadd.xlane.f32.xlu0 %v802
      %v804 = vpop.xlane.xlu0 %803
      %v805 = vsel %vm96, %v661, 0.0
      %806 = vadd.xlane.f32.xlu0 %v805
      %v807 = vpop.xlane.xlu0 %806
      %v808 = vsel %vm96, %v662, 0.0
      %809 = vadd.xlane.f32.xlu0 %v808
      %v810 = vpop.xlane.xlu0 %809
      %v811 = vsel %vm96, %v663, 0.0
      %812 = vadd.xlane.f32.xlu0 %v811
      %v813 = vpop.xlane.xlu0 %812
      %v814 = vsel %vm96, %v664, 0.0
      %815 = vadd.xlane.f32.xlu0 %v814
      %v816 = vpop.xlane.xlu0 %815
      %v817 = vsel %vm96, %v665, 0.0
      %818 = vadd.xlane.f32.xlu0 %v817
      %v819 = vpop.xlane.xlu0 %818
      %v820 = vsel %vm96, %v666, 0.0
      %821 = vadd.xlane.f32.xlu0 %v820
      %v822 = vpop.xlane.xlu0 %821
      %v823 = vsel %vm96, %v667, 0.0
      %824 = vadd.xlane.f32.xlu0 %v823
      %v825 = vpop.xlane.xlu0 %824
      %v826 = vsel %vm96, %v668, 0.0
      %827 = vadd.xlane.f32.xlu0 %v826
      %v828 = vpop.xlane.xlu0 %827
      %v829 = vsel %vm96, %v669, 0.0
      %830 = vadd.xlane.f32.xlu0 %v829
      %v831 = vpop.xlane.xlu0 %830
      %v832 = vsel %vm96, %v670, 0.0
      %833 = vadd.xlane.f32.xlu0 %v832
      %v834 = vpop.xlane.xlu0 %833
      %v835 = vsel %vm96, %v671, 0.0
      %836 = vadd.xlane.f32.xlu0 %v835
      %v837 = vpop.xlane.xlu0 %836
      %v838 = vsel %vm96, %v672, 0.0
      %839 = vadd.xlane.f32.xlu0 %v838
      %v840 = vpop.xlane.xlu0 %839
      %v841 = vsel %vm96, %v673, 0.0
      %842 = vadd.xlane.f32.xlu0 %v841
      %v843 = vpop.xlane.xlu0 %842
      %v844 = vsel %vm96, %v674, 0.0
      %845 = vadd.xlane.f32.xlu0 %v844
      %v846 = vpop.xlane.xlu0 %845
      %v847 = vsel %vm96, %v675, 0.0
      %848 = vadd.xlane.f32.xlu0 %v847
      %v849 = vpop.xlane.xlu0 %848
      %v850 = vsel %vm96, %v676, 0.0
      %851 = vadd.xlane.f32.xlu0 %v850
      %v852 = vpop.xlane.xlu0 %851
      %v853 = vsel %vm96, %v677, 0.0
      %854 = vadd.xlane.f32.xlu0 %v853
      %v855 = vpop.xlane.xlu0 %854
      %v856 = vsel %vm96, %v678, 0.0
      %857 = vadd.xlane.f32.xlu0 %v856
      %v858 = vpop.xlane.xlu0 %857
      %v859 = vsel %vm96, %v679, 0.0
      %860 = vadd.xlane.f32.xlu0 %v859
      %v861 = vpop.xlane.xlu0 %860
      %v862 = vsel %vm96, %v680, 0.0
      %863 = vadd.xlane.f32.xlu0 %v862
      %v864 = vpop.xlane.xlu0 %863
      %v865 = vsel %vm96, %v681, 0.0
      %866 = vadd.xlane.f32.xlu0 %v865
      %v867 = vpop.xlane.xlu0 %866
      %v868 = vsel %vm96, %v682, 0.0
      %869 = vadd.xlane.f32.xlu0 %v868
      %v870 = vpop.xlane.xlu0 %869
      %v871 = vsel %vm96, %v683, 0.0
      %872 = vadd.xlane.f32.xlu0 %v871
      %v873 = vpop.xlane.xlu0 %872
      %v874 = vsel %vm96, %v684, 0.0
      %875 = vadd.xlane.f32.xlu0 %v874
      %v876 = vpop.xlane.xlu0 %875
      %v877 = vsel %vm96, %v685, 0.0
      %878 = vadd.xlane.f32.xlu0 %v877
      %v879 = vpop.xlane.xlu0 %878
      %v880 = vsel %vm96, %v686, 0.0
      %881 = vadd.xlane.f32.xlu0 %v880
      %v882 = vpop.xlane.xlu0 %881
      %v883 = vsel %vm96, %v687, 0.0
      %884 = vadd.xlane.f32.xlu0 %v883
      %v885 = vpop.xlane.xlu0 %884
      %v886 = vsel %vm96, %v688, 0.0
      %887 = vadd.xlane.f32.xlu0 %v886
      %v888 = vpop.xlane.xlu0 %887
      %v889 = vsel %vm96, %v689, 0.0
      %890 = vadd.xlane.f32.xlu0 %v889
      %v891 = vpop.xlane.xlu0 %890
      %v892 = vsel %vm96, %v690, 0.0
      %893 = vadd.xlane.f32.xlu0 %v892
      %v894 = vpop.xlane.xlu0 %893
      %v895 = vsel %vm96, %v691, 0.0
      %896 = vadd.xlane.f32.xlu0 %v895
      %v897 = vpop.xlane.xlu0 %896
      %v898 = vsel %vm96, %v692, 0.0
      %899 = vadd.xlane.f32.xlu0 %v898
      %v900 = vpop.xlane.xlu0 %899
      %v901 = vsel %vm96, %v693, 0.0
      %902 = vadd.xlane.f32.xlu0 %v901
      %v903 = vpop.xlane.xlu0 %902
      %v904 = vsel %vm96, %v694, 0.0
      %905 = vadd.xlane.f32.xlu0 %v904
      %v906 = vpop.xlane.xlu0 %905
      %v907 = vsel %vm96, %v695, 0.0
      %908 = vadd.xlane.f32.xlu0 %v907
      %v909 = vpop.xlane.xlu0 %908
      %v910 = vsel %vm96, %v696, 0.0
      %911 = vadd.xlane.f32.xlu0 %v910
      %v912 = vpop.xlane.xlu0 %911
      %v913 = vsel %vm96, %v697, 0.0
      %914 = vadd.xlane.f32.xlu0 %v913
      %v915 = vpop.xlane.xlu0 %914
      %v916 = vsel %vm96, %v698, 0.0
      %917 = vadd.xlane.f32.xlu0 %v916
      %v918 = vpop.xlane.xlu0 %917
      %v919 = vsel %vm96, %v699, 0.0
      %920 = vadd.xlane.f32.xlu0 %v919
      %v921 = vpop.xlane.xlu0 %920
      %v922 = vsel %vm96, %v700, 0.0
      %923 = vadd.xlane.f32.xlu0 %v922
      %v924 = vpop.xlane.xlu0 %923
      %v925 = vsel %vm96, %v701, 0.0
      %926 = vadd.xlane.f32.xlu0 %v925
      %v927 = vpop.xlane.xlu0 %926
      %v928 = vsel %vm96, %v702, 0.0
      %929 = vadd.xlane.f32.xlu0 %v928
      %v930 = vpop.xlane.xlu0 %929
      %v931 = vsel %vm96, %v703, 0.0
      %932 = vadd.xlane.f32.xlu0 %v931
      %v933 = vpop.xlane.xlu0 %932
      %v934 = vsel %vm96, %v704, 0.0
      %935 = vadd.xlane.f32.xlu0 %v934
      %v936 = vpop.xlane.xlu0 %935
      %v937 = vsel %vm96, %v705, 0.0
      %938 = vadd.xlane.f32.xlu0 %v937
      %v939 = vpop.xlane.xlu0 %938
      %v940 = vsel %vm96, %v706, 0.0
      %941 = vadd.xlane.f32.xlu0 %v940
      %v942 = vpop.xlane.xlu0 %941
      %v943 = vsel %vm96, %v707, 0.0
      %944 = vadd.xlane.f32.xlu0 %v943
      %v945 = vpop.xlane.xlu0 %944
      %v946 = vsel %vm96, %v708, 0.0
      %947 = vadd.xlane.f32.xlu0 %v946
      %v948 = vpop.xlane.xlu0 %947
      %v949 = vsel %vm96, %v709, 0.0
      %950 = vadd.xlane.f32.xlu0 %v949
      %v951 = vpop.xlane.xlu0 %950
      %v952 = vsel %vm96, %v710, 0.0
      %953 = vadd.xlane.f32.xlu0 %v952
      %v954 = vpop.xlane.xlu0 %953
      %v955 = vsel %vm96, %v711, 0.0
      %956 = vadd.xlane.f32.xlu0 %v955
      %v957 = vpop.xlane.xlu0 %956
      %v958 = vsel %vm96, %v712, 0.0
      %959 = vadd.xlane.f32.xlu0 %v958
      %v960 = vpop.xlane.xlu0 %959
      %v961 = vsel %vm96, %v713, 0.0
      %962 = vadd.xlane.f32.xlu0 %v961
      %v963 = vpop.xlane.xlu0 %962
      %v964 = vsel %vm96, %v714, 0.0
      %965 = vadd.xlane.f32.xlu0 %v964
      %v966 = vpop.xlane.xlu0 %965
      %v967 = vsel %vm96, %v715, 0.0
      %968 = vadd.xlane.f32.xlu0 %v967
      %v969 = vpop.xlane.xlu0 %968
      %v970 = vsel %vm96, %v716, 0.0
      %971 = vadd.xlane.f32.xlu0 %v970
      %v972 = vpop.xlane.xlu0 %971
      %v973 = vsel %vm96, %v717, 0.0
      %974 = vadd.xlane.f32.xlu0 %v973
      %v975 = vpop.xlane.xlu0 %974
      %v976 = vsel %vm96, %v718, 0.0
      %977 = vadd.xlane.f32.xlu0 %v976
      %v978 = vpop.xlane.xlu0 %977
      %v979 = vsel %vm96, %v719, 0.0
      %980 = vadd.xlane.f32.xlu0 %v979
      %v981 = vpop.xlane.xlu0 %980
      %v982 = vsel %vm96, %v720, 0.0
      %983 = vadd.xlane.f32.xlu0 %v982
      %v984 = vpop.xlane.xlu0 %983
      %v985 = vsel %vm96, %v721, 0.0
      %986 = vadd.xlane.f32.xlu0 %v985
      %v987 = vpop.xlane.xlu0 %986
      %v988 = vsel %vm96, %v722, 0.0
      %989 = vadd.xlane.f32.xlu0 %v988
      %v990 = vpop.xlane.xlu0 %989
      %v991 = vsel %vm96, %v723, 0.0
      %992 = vadd.xlane.f32.xlu0 %v991
      %v993 = vpop.xlane.xlu0 %992
      %v994 = vsel %vm96, %v724, 0.0
      %995 = vadd.xlane.f32.xlu0 %v994
      %v996 = vpop.xlane.xlu0 %995
      %v997 = vsel %vm96, %v725, 0.0
      %998 = vadd.xlane.f32.xlu0 %v997
      %v999 = vpop.xlane.xlu0 %998
      %v1000 = vsel %vm96, %v726, 0.0
      %1001 = vadd.xlane.f32.xlu0 %v1000
      %v1002 = vpop.xlane.xlu0 %1001
      %v1003 = vsel %vm96, %v727, 0.0
      %1004 = vadd.xlane.f32.xlu0 %v1003
      %v1005 = vpop.xlane.xlu0 %1004
      %v1006 = vsel %vm96, %v728, 0.0
      %1007 = vadd.xlane.f32.xlu0 %v1006
      %v1008 = vpop.xlane.xlu0 %1007
      %v1009 = vsel %vm96, %v729, 0.0
      %1010 = vadd.xlane.f32.xlu0 %v1009
      %v1011 = vpop.xlane.xlu0 %1010
      %v1012 = vsel %vm96, %v730, 0.0
      %1013 = vadd.xlane.f32.xlu0 %v1012
      %v1014 = vpop.xlane.xlu0 %1013
      %v1015 = vsel %vm96, %v731, 0.0
      %1016 = vadd.xlane.f32.xlu0 %v1015
      %v1017 = vpop.xlane.xlu0 %1016
      %v1018 = vsel %vm96, %v732, 0.0
      %1019 = vadd.xlane.f32.xlu0 %v1018
      %v1020 = vpop.xlane.xlu0 %1019
      %v1021 = vsel %vm96, %v733, 0.0
      %1022 = vadd.xlane.f32.xlu0 %v1021
      %v1023 = vpop.xlane.xlu0 %1022
      %v1024 = vsel %vm96, %v734, 0.0
      %1025 = vadd.xlane.f32.xlu0 %v1024
      %v1026 = vpop.xlane.xlu0 %1025
      %v1027 = vsel %vm96, %v735, 0.0
      %1028 = vadd.xlane.f32.xlu0 %v1027
      %v1029 = vpop.xlane.xlu0 %1028
      %v1030 = vsel %vm96, %v736, 0.0
      %1031 = vadd.xlane.f32.xlu0 %v1030
      %v1032 = vpop.xlane.xlu0 %1031
      %v1033 = vsel %vm96, %v737, 0.0
      %1034 = vadd.xlane.f32.xlu0 %v1033
      %v1035 = vpop.xlane.xlu0 %1034
      %v1036 = vsel %vm96, %v738, 0.0
      %1037 = vadd.xlane.f32.xlu0 %v1036
      %v1038 = vpop.xlane.xlu0 %1037
      %v1039 = vsel %vm96, %v739, 0.0
      %1040 = vadd.xlane.f32.xlu0 %v1039
      %v1041 = vpop.xlane.xlu0 %1040
      %v1042 = vsel %vm96, %v740, 0.0
      %1043 = vadd.xlane.f32.xlu0 %v1042
      %v1044 = vpop.xlane.xlu0 %1043
      %v1045 = vsel %vm96, %v741, 0.0
      %1046 = vadd.xlane.f32.xlu0 %v1045
      %v1047 = vpop.xlane.xlu0 %1046
      %v1048 = vsel %vm96, %v742, 0.0
      %1049 = vadd.xlane.f32.xlu0 %v1048
      %v1050 = vpop.xlane.xlu0 %1049
      %v1051 = vsel %vm96, %v743, 0.0
      %1052 = vadd.xlane.f32.xlu0 %v1051
      %v1053 = vpop.xlane.xlu0 %1052
      %v1054 = vsel %vm96, %v744, 0.0
      %1055 = vadd.xlane.f32.xlu0 %v1054
      %v1056 = vpop.xlane.xlu0 %1055
      %v1057 = vsel %vm96, %v745, 0.0
      %1058 = vadd.xlane.f32.xlu0 %v1057
      %v1059 = vpop.xlane.xlu0 %1058
      %v1060 = vsel %vm96, %v746, 0.0
      %1061 = vadd.xlane.f32.xlu0 %v1060
      %v1062 = vpop.xlane.xlu0 %1061
      %v1063 = vsel %vm96, %v747, 0.0
      %1064 = vadd.xlane.f32.xlu0 %v1063
      %v1065 = vpop.xlane.xlu0 %1064
      %v1066 = vsel %vm96, %v748, 0.0
      %1067 = vadd.xlane.f32.xlu0 %v1066
      %v1068 = vpop.xlane.xlu0 %1067
      %v1069 = vsel %vm96, %v749, 0.0
      %1070 = vadd.xlane.f32.xlu0 %v1069
      %v1071 = vpop.xlane.xlu0 %1070
      %v1072 = vsel %vm96, %v750, 0.0
      %1073 = vadd.xlane.f32.xlu0 %v1072
      %v1074 = vpop.xlane.xlu0 %1073
      %v1075 = vsel %vm96, %v751, 0.0
      %1076 = vadd.xlane.f32.xlu0 %v1075
      %v1077 = vpop.xlane.xlu0 %1076
      %v1078 = vsel %vm96, %v752, 0.0
      %1079 = vadd.xlane.f32.xlu0 %v1078
      %v1080 = vpop.xlane.xlu0 %1079
      %v1081 = vsel %vm96, %v753, 0.0
      %1082 = vadd.xlane.f32.xlu0 %v1081
      %v1083 = vpop.xlane.xlu0 %1082
      %v1084 = vsel %vm96, %v754, 0.0
      %1085 = vadd.xlane.f32.xlu0 %v1084
      %v1086 = vpop.xlane.xlu0 %1085
      %v1087 = vsel %vm96, %v755, 0.0
      %1088 = vadd.xlane.f32.xlu0 %v1087
      %v1089 = vpop.xlane.xlu0 %1088
      %v1090 = vsel %vm96, %v756, 0.0
      %1091 = vadd.xlane.f32.xlu0 %v1090
      %v1092 = vpop.xlane.xlu0 %1091
      %v1093 = vsel %vm96, %v757, 0.0
      %1094 = vadd.xlane.f32.xlu0 %v1093
      %v1095 = vpop.xlane.xlu0 %1094
      %v1096 = vsel %vm96, %v758, 0.0
      %1097 = vadd.xlane.f32.xlu0 %v1096
      %v1098 = vpop.xlane.xlu0 %1097
      %v1099 = vsel %vm96, %v759, 0.0
      %1100 = vadd.xlane.f32.xlu0 %v1099
      %v1101 = vpop.xlane.xlu0 %1100
      %v1102 = vsel %vm96, %v760, 0.0
      %1103 = vadd.xlane.f32.xlu0 %v1102
      %v1104 = vpop.xlane.xlu0 %1103
      %v1105 = vsel %vm96, %v761, 0.0
      %1106 = vadd.xlane.f32.xlu0 %v1105
      %v1107 = vpop.xlane.xlu0 %1106
      %v1108 = vsel %vm96, %v762, 0.0
      %1109 = vadd.xlane.f32.xlu0 %v1108
      %v1110 = vpop.xlane.xlu0 %1109
      %v1111 = vsel %vm96, %v763, 0.0
      %1112 = vadd.xlane.f32.xlu0 %v1111
      %v1113 = vpop.xlane.xlu0 %1112
      %v1114 = vsel %vm96, %v764, 0.0
      %1115 = vadd.xlane.f32.xlu0 %v1114
      %v1116 = vpop.xlane.xlu0 %1115
      %v1117 = vsel %vm96, %v765, 0.0
      %1118 = vadd.xlane.f32.xlu0 %v1117
      %v1119 = vpop.xlane.xlu0 %1118
      %v1120 = vsel %vm96, %v766, 0.0
      %1121 = vadd.xlane.f32.xlu0 %v1120
      %v1122 = vpop.xlane.xlu0 %1121
      %v1123 = vsel %vm96, %v767, 0.0
      %1124 = vadd.xlane.f32.xlu0 %v1123
      %v1125 = vpop.xlane.xlu0 %1124
      %v1126 = vsel %vm96, %v768, 0.0
      %1127 = vadd.xlane.f32.xlu0 %v1126
      %v1128 = vpop.xlane.xlu0 %1127
      %v1129 = vsel %vm96, %v769, 0.0
      %1130 = vadd.xlane.f32.xlu0 %v1129
      %v1131 = vpop.xlane.xlu0 %1130
      %v1132 = vsel %vm96, %v770, 0.0
      %1133 = vadd.xlane.f32.xlu0 %v1132
      %v1134 = vpop.xlane.xlu0 %1133
      %v1135 = vsel %vm96, %v771, 0.0
      %1136 = vadd.xlane.f32.xlu0 %v1135
      %v1137 = vpop.xlane.xlu0 %1136
      %v1138 = vsel %vm96, %v772, 0.0
      %1139 = vadd.xlane.f32.xlu0 %v1138
      %v1140 = vpop.xlane.xlu0 %1139
      %v1141 = vsel %vm96, %v773, 0.0
      %1142 = vadd.xlane.f32.xlu0 %v1141
      %v1143 = vpop.xlane.xlu0 %1142
      %v1144 = vsel %vm96, %v774, 0.0
      %1145 = vadd.xlane.f32.xlu0 %v1144
      %v1146 = vpop.xlane.xlu0 %1145
      %v1147 = vsel %vm96, %v775, 0.0
      %1148 = vadd.xlane.f32.xlu0 %v1147
      %v1149 = vpop.xlane.xlu0 %1148
      %v1150 = vsel %vm96, %v776, 0.0
      %1151 = vadd.xlane.f32.xlu0 %v1150
      %v1152 = vpop.xlane.xlu0 %1151
      %v1153 = vsel %vm96, %v777, 0.0
      %1154 = vadd.xlane.f32.xlu0 %v1153
      %v1155 = vpop.xlane.xlu0 %1154
      %v1156 = vsel %vm96, %v778, 0.0
      %1157 = vadd.xlane.f32.xlu0 %v1156
      %v1158 = vpop.xlane.xlu0 %1157
      %v1159 = vsel %vm96, %v779, 0.0
      %1160 = vadd.xlane.f32.xlu0 %v1159
      %v1161 = vpop.xlane.xlu0 %1160
      %v1162 = vsel %vm96, %v780, 0.0
      %1163 = vadd.xlane.f32.xlu0 %v1162
      %v1164 = vpop.xlane.xlu0 %1163
      %v1165 = vld [vmem:[%s4] sm:$0xff]
      %v1167 = vperm.slane %v1165, 0
      %v1168 = vlaneseq
      %v1169 = vshrl.u32 %v1168, 7
      %1171 = vset.pattern.permute.xlu0 %v1169
      %1172 = vperm.xlu0 %1171, %v1167
      %v1173 = vpop.permute.xlu0 %1172
      %v1174 = vlaneseq
      %v1175 = vshrl.u32 %v1174, 7
      %v1176 = vadd.s32 %v1175, 8
      %1177 = vset.pattern.permute.xlu0 %v1176
      %1178 = vperm.xlu0 %1177, %v1167
      %v1179 = vpop.permute.xlu0 %1178
      %v1180 = vlaneseq
      %v1181 = vshrl.u32 %v1180, 7
      %v1182 = vadd.s32 %v1181, 16
      %1183 = vset.pattern.permute.xlu0 %v1182
      %1184 = vperm.xlu0 %1183, %v1167
      %v1185 = vpop.permute.xlu0 %1184
      %v1186 = vlaneseq
      %v1187 = vshrl.u32 %v1186, 7
      %v1188 = vadd.s32 %v1187, 24
      %1189 = vset.pattern.permute.xlu0 %v1188
      %1190 = vperm.xlu0 %1189, %v1167
      %v1191 = vpop.permute.xlu0 %1190
      %v1192 = vlaneseq
      %v1193 = vshrl.u32 %v1192, 7
      %v1194 = vadd.s32 %v1193, 32
      %1195 = vset.pattern.permute.xlu0 %v1194
      %1196 = vperm.xlu0 %1195, %v1167
      %v1197 = vpop.permute.xlu0 %1196
      %v1198 = vlaneseq
      %v1199 = vshrl.u32 %v1198, 7
      %v1200 = vadd.s32 %v1199, 40
      %1201 = vset.pattern.permute.xlu0 %v1200
      %1202 = vperm.xlu0 %1201, %v1167
      %v1203 = vpop.permute.xlu0 %1202
      %v1204 = vlaneseq
      %v1205 = vshrl.u32 %v1204, 7
      %v1206 = vadd.s32 %v1205, 48
      %1207 = vset.pattern.permute.xlu0 %v1206
      %1208 = vperm.xlu0 %1207, %v1167
      %v1209 = vpop.permute.xlu0 %1208
      %v1210 = vlaneseq
      %v1211 = vshrl.u32 %v1210, 7
      %v1212 = vadd.s32 %v1211, 56
      %1213 = vset.pattern.permute.xlu0 %v1212
      %1214 = vperm.xlu0 %1213, %v1167
      %v1215 = vpop.permute.xlu0 %1214
      %v1216 = vlaneseq
      %v1217 = vshrl.u32 %v1216, 7
      %v1218 = vadd.s32 %v1217, 64
      %1219 = vset.pattern.permute.xlu0 %v1218
      %1220 = vperm.xlu0 %1219, %v1167
      %v1221 = vpop.permute.xlu0 %1220
      %v1222 = vlaneseq
      %v1223 = vshrl.u32 %v1222, 7
      %v1224 = vadd.s32 %v1223, 72
      %1225 = vset.pattern.permute.xlu0 %v1224
      %1226 = vperm.xlu0 %1225, %v1167
      %v1227 = vpop.permute.xlu0 %1226
      %v1228 = vlaneseq
      %v1229 = vshrl.u32 %v1228, 7
      %v1230 = vadd.s32 %v1229, 80
      %1231 = vset.pattern.permute.xlu0 %v1230
      %1232 = vperm.xlu0 %1231, %v1167
      %v1233 = vpop.permute.xlu0 %1232
      %v1234 = vlaneseq
      %v1235 = vshrl.u32 %v1234, 7
      %v1236 = vadd.s32 %v1235, 88
      %1237 = vset.pattern.permute.xlu0 %v1236
      %1238 = vperm.xlu0 %1237, %v1167
      %v1239 = vpop.permute.xlu0 %1238
      %v1240 = vlaneseq
      %v1241 = vshrl.u32 %v1240, 7
      %v1242 = vadd.s32 %v1241, 96
      %1243 = vset.pattern.permute.xlu0 %v1242
      %1244 = vperm.xlu0 %1243, %v1167
      %v1245 = vpop.permute.xlu0 %1244
      %v1246 = vlaneseq
      %v1247 = vshrl.u32 %v1246, 7
      %v1248 = vadd.s32 %v1247, 104
      %1249 = vset.pattern.permute.xlu0 %v1248
      %1250 = vperm.xlu0 %1249, %v1167
      %v1251 = vpop.permute.xlu0 %1250
      %v1252 = vlaneseq
      %v1253 = vshrl.u32 %v1252, 7
      %v1254 = vadd.s32 %v1253, 112
      %1255 = vset.pattern.permute.xlu0 %v1254
      %1256 = vperm.xlu0 %1255, %v1167
      %v1257 = vpop.permute.xlu0 %1256
      %v1258 = vlaneseq
      %v1259 = vshrl.u32 %v1258, 7
      %v1260 = vadd.s32 %v1259, 120
      %1261 = vset.pattern.permute.xlu0 %v1260
      %1262 = vperm.xlu0 %1261, %v1167
      %v1263 = vpop.permute.xlu0 %1262
      %v1264 = vperm.slane %v1165, 1
      %v1265 = vlaneseq
      %v1266 = vshrl.u32 %v1265, 7
      %1268 = vset.pattern.permute.xlu0 %v1266
      %1269 = vperm.xlu0 %1268, %v1264
      %v1270 = vpop.permute.xlu0 %1269
      %v1271 = vlaneseq
      %v1272 = vshrl.u32 %v1271, 7
      %v1273 = vadd.s32 %v1272, 8
      %1274 = vset.pattern.permute.xlu0 %v1273
      %1275 = vperm.xlu0 %1274, %v1264
      %v1276 = vpop.permute.xlu0 %1275
      %v1277 = vlaneseq
      %v1278 = vshrl.u32 %v1277, 7
      %v1279 = vadd.s32 %v1278, 16
      %1280 = vset.pattern.permute.xlu0 %v1279
      %1281 = vperm.xlu0 %1280, %v1264
      %v1282 = vpop.permute.xlu0 %1281
      %v1283 = vlaneseq
      %v1284 = vshrl.u32 %v1283, 7
      %v1285 = vadd.s32 %v1284, 24
      %1286 = vset.pattern.permute.xlu0 %v1285
      %1287 = vperm.xlu0 %1286, %v1264
      %v1288 = vpop.permute.xlu0 %1287
      %v1289 = vlaneseq
      %v1290 = vshrl.u32 %v1289, 7
      %v1291 = vadd.s32 %v1290, 32
      %1292 = vset.pattern.permute.xlu0 %v1291
      %1293 = vperm.xlu0 %1292, %v1264
      %v1294 = vpop.permute.xlu0 %1293
      %v1295 = vlaneseq
      %v1296 = vshrl.u32 %v1295, 7
      %v1297 = vadd.s32 %v1296, 40
      %1298 = vset.pattern.permute.xlu0 %v1297
      %1299 = vperm.xlu0 %1298, %v1264
      %v1300 = vpop.permute.xlu0 %1299
      %v1301 = vlaneseq
      %v1302 = vshrl.u32 %v1301, 7
      %v1303 = vadd.s32 %v1302, 48
      %1304 = vset.pattern.permute.xlu0 %v1303
      %1305 = vperm.xlu0 %1304, %v1264
      %v1306 = vpop.permute.xlu0 %1305
      %v1307 = vlaneseq
      %v1308 = vshrl.u32 %v1307, 7
      %v1309 = vadd.s32 %v1308, 56
      %1310 = vset.pattern.permute.xlu0 %v1309
      %1311 = vperm.xlu0 %1310, %v1264
      %v1312 = vpop.permute.xlu0 %1311
      %v1313 = vlaneseq
      %v1314 = vshrl.u32 %v1313, 7
      %v1315 = vadd.s32 %v1314, 64
      %1316 = vset.pattern.permute.xlu0 %v1315
      %1317 = vperm.xlu0 %1316, %v1264
      %v1318 = vpop.permute.xlu0 %1317
      %v1319 = vlaneseq
      %v1320 = vshrl.u32 %v1319, 7
      %v1321 = vadd.s32 %v1320, 72
      %1322 = vset.pattern.permute.xlu0 %v1321
      %1323 = vperm.xlu0 %1322, %v1264
      %v1324 = vpop.permute.xlu0 %1323
      %v1325 = vlaneseq
      %v1326 = vshrl.u32 %v1325, 7
      %v1327 = vadd.s32 %v1326, 80
      %1328 = vset.pattern.permute.xlu0 %v1327
      %1329 = vperm.xlu0 %1328, %v1264
      %v1330 = vpop.permute.xlu0 %1329
      %v1331 = vlaneseq
      %v1332 = vshrl.u32 %v1331, 7
      %v1333 = vadd.s32 %v1332, 88
      %1334 = vset.pattern.permute.xlu0 %v1333
      %1335 = vperm.xlu0 %1334, %v1264
      %v1336 = vpop.permute.xlu0 %1335
      %v1337 = vlaneseq
      %v1338 = vshrl.u32 %v1337, 7
      %v1339 = vadd.s32 %v1338, 96
      %1340 = vset.pattern.permute.xlu0 %v1339
      %1341 = vperm.xlu0 %1340, %v1264
      %v1342 = vpop.permute.xlu0 %1341
      %v1343 = vlaneseq
      %v1344 = vshrl.u32 %v1343, 7
      %v1345 = vadd.s32 %v1344, 104
      %1346 = vset.pattern.permute.xlu0 %v1345
      %1347 = vperm.xlu0 %1346, %v1264
      %v1348 = vpop.permute.xlu0 %1347
      %v1349 = vlaneseq
      %v1350 = vshrl.u32 %v1349, 7
      %v1351 = vadd.s32 %v1350, 112
      %1352 = vset.pattern.permute.xlu0 %v1351
      %1353 = vperm.xlu0 %1352, %v1264
      %v1354 = vpop.permute.xlu0 %1353
      %v1355 = vlaneseq
      %v1356 = vshrl.u32 %v1355, 7
      %v1357 = vadd.s32 %v1356, 120
      %1358 = vset.pattern.permute.xlu0 %v1357
      %1359 = vperm.xlu0 %1358, %v1264
      %v1360 = vpop.permute.xlu0 %1359
      %v1361 = vperm.slane %v1165, 2
      %v1362 = vlaneseq
      %v1363 = vshrl.u32 %v1362, 7
      %1365 = vset.pattern.permute.xlu0 %v1363
      %1366 = vperm.xlu0 %1365, %v1361
      %v1367 = vpop.permute.xlu0 %1366
      %v1368 = vlaneseq
      %v1369 = vshrl.u32 %v1368, 7
      %v1370 = vadd.s32 %v1369, 8
      %1371 = vset.pattern.permute.xlu0 %v1370
      %1372 = vperm.xlu0 %1371, %v1361
      %v1373 = vpop.permute.xlu0 %1372
      %v1374 = vlaneseq
      %v1375 = vshrl.u32 %v1374, 7
      %v1376 = vadd.s32 %v1375, 16
      %1377 = vset.pattern.permute.xlu0 %v1376
      %1378 = vperm.xlu0 %1377, %v1361
      %v1379 = vpop.permute.xlu0 %1378
      %v1380 = vlaneseq
      %v1381 = vshrl.u32 %v1380, 7
      %v1382 = vadd.s32 %v1381, 24
      %1383 = vset.pattern.permute.xlu0 %v1382
      %1384 = vperm.xlu0 %1383, %v1361
      %v1385 = vpop.permute.xlu0 %1384
      %v1386 = vlaneseq
      %v1387 = vshrl.u32 %v1386, 7
      %v1388 = vadd.s32 %v1387, 32
      %1389 = vset.pattern.permute.xlu0 %v1388
      %1390 = vperm.xlu0 %1389, %v1361
      %v1391 = vpop.permute.xlu0 %1390
      %v1392 = vlaneseq
      %v1393 = vshrl.u32 %v1392, 7
      %v1394 = vadd.s32 %v1393, 40
      %1395 = vset.pattern.permute.xlu0 %v1394
      %1396 = vperm.xlu0 %1395, %v1361
      %v1397 = vpop.permute.xlu0 %1396
      %v1398 = vlaneseq
      %v1399 = vshrl.u32 %v1398, 7
      %v1400 = vadd.s32 %v1399, 48
      %1401 = vset.pattern.permute.xlu0 %v1400
      %1402 = vperm.xlu0 %1401, %v1361
      %v1403 = vpop.permute.xlu0 %1402
      %v1404 = vlaneseq
      %v1405 = vshrl.u32 %v1404, 7
      %v1406 = vadd.s32 %v1405, 56
      %1407 = vset.pattern.permute.xlu0 %v1406
      %1408 = vperm.xlu0 %1407, %v1361
      %v1409 = vpop.permute.xlu0 %1408
      %v1410 = vlaneseq
      %v1411 = vshrl.u32 %v1410, 7
      %v1412 = vadd.s32 %v1411, 64
      %1413 = vset.pattern.permute.xlu0 %v1412
      %1414 = vperm.xlu0 %1413, %v1361
      %v1415 = vpop.permute.xlu0 %1414
      %v1416 = vlaneseq
      %v1417 = vshrl.u32 %v1416, 7
      %v1418 = vadd.s32 %v1417, 72
      %1419 = vset.pattern.permute.xlu0 %v1418
      %1420 = vperm.xlu0 %1419, %v1361
      %v1421 = vpop.permute.xlu0 %1420
      %v1422 = vlaneseq
      %v1423 = vshrl.u32 %v1422, 7
      %v1424 = vadd.s32 %v1423, 80
      %1425 = vset.pattern.permute.xlu0 %v1424
      %1426 = vperm.xlu0 %1425, %v1361
      %v1427 = vpop.permute.xlu0 %1426
      %v1428 = vlaneseq
      %v1429 = vshrl.u32 %v1428, 7
      %v1430 = vadd.s32 %v1429, 88
      %1431 = vset.pattern.permute.xlu0 %v1430
      %1432 = vperm.xlu0 %1431, %v1361
      %v1433 = vpop.permute.xlu0 %1432
      %v1434 = vlaneseq
      %v1435 = vshrl.u32 %v1434, 7
      %v1436 = vadd.s32 %v1435, 96
      %1437 = vset.pattern.permute.xlu0 %v1436
      %1438 = vperm.xlu0 %1437, %v1361
      %v1439 = vpop.permute.xlu0 %1438
      %v1440 = vlaneseq
      %v1441 = vshrl.u32 %v1440, 7
      %v1442 = vadd.s32 %v1441, 104
      %1443 = vset.pattern.permute.xlu0 %v1442
      %1444 = vperm.xlu0 %1443, %v1361
      %v1445 = vpop.permute.xlu0 %1444
      %v1446 = vlaneseq
      %v1447 = vshrl.u32 %v1446, 7
      %v1448 = vadd.s32 %v1447, 112
      %1449 = vset.pattern.permute.xlu0 %v1448
      %1450 = vperm.xlu0 %1449, %v1361
      %v1451 = vpop.permute.xlu0 %1450
      %v1452 = vlaneseq
      %v1453 = vshrl.u32 %v1452, 7
      %v1454 = vadd.s32 %v1453, 120
      %1455 = vset.pattern.permute.xlu0 %v1454
      %1456 = vperm.xlu0 %1455, %v1361
      %v1457 = vpop.permute.xlu0 %1456
      %v1458 = vperm.slane %v1165, 3
      %v1459 = vlaneseq
      %v1460 = vshrl.u32 %v1459, 7
      %1462 = vset.pattern.permute.xlu0 %v1460
      %1463 = vperm.xlu0 %1462, %v1458
      %v1464 = vpop.permute.xlu0 %1463
      %v1465 = vlaneseq
      %v1466 = vshrl.u32 %v1465, 7
      %v1467 = vadd.s32 %v1466, 8
      %1468 = vset.pattern.permute.xlu0 %v1467
      %1469 = vperm.xlu0 %1468, %v1458
      %v1470 = vpop.permute.xlu0 %1469
      %v1471 = vlaneseq
      %v1472 = vshrl.u32 %v1471, 7
      %v1473 = vadd.s32 %v1472, 16
      %1474 = vset.pattern.permute.xlu0 %v1473
      %1475 = vperm.xlu0 %1474, %v1458
      %v1476 = vpop.permute.xlu0 %1475
      %v1477 = vlaneseq
      %v1478 = vshrl.u32 %v1477, 7
      %v1479 = vadd.s32 %v1478, 24
      %1480 = vset.pattern.permute.xlu0 %v1479
      %1481 = vperm.xlu0 %1480, %v1458
      %v1482 = vpop.permute.xlu0 %1481
      %v1483 = vlaneseq
      %v1484 = vshrl.u32 %v1483, 7
      %v1485 = vadd.s32 %v1484, 32
      %1486 = vset.pattern.permute.xlu0 %v1485
      %1487 = vperm.xlu0 %1486, %v1458
      %v1488 = vpop.permute.xlu0 %1487
      %v1489 = vlaneseq
      %v1490 = vshrl.u32 %v1489, 7
      %v1491 = vadd.s32 %v1490, 40
      %1492 = vset.pattern.permute.xlu0 %v1491
      %1493 = vperm.xlu0 %1492, %v1458
      %v1494 = vpop.permute.xlu0 %1493
      %v1495 = vlaneseq
      %v1496 = vshrl.u32 %v1495, 7
      %v1497 = vadd.s32 %v1496, 48
      %1498 = vset.pattern.permute.xlu0 %v1497
      %1499 = vperm.xlu0 %1498, %v1458
      %v1500 = vpop.permute.xlu0 %1499
      %v1501 = vlaneseq
      %v1502 = vshrl.u32 %v1501, 7
      %v1503 = vadd.s32 %v1502, 56
      %1504 = vset.pattern.permute.xlu0 %v1503
      %1505 = vperm.xlu0 %1504, %v1458
      %v1506 = vpop.permute.xlu0 %1505
      %v1507 = vlaneseq
      %v1508 = vshrl.u32 %v1507, 7
      %v1509 = vadd.s32 %v1508, 64
      %1510 = vset.pattern.permute.xlu0 %v1509
      %1511 = vperm.xlu0 %1510, %v1458
      %v1512 = vpop.permute.xlu0 %1511
      %v1513 = vlaneseq
      %v1514 = vshrl.u32 %v1513, 7
      %v1515 = vadd.s32 %v1514, 72
      %1516 = vset.pattern.permute.xlu0 %v1515
      %1517 = vperm.xlu0 %1516, %v1458
      %v1518 = vpop.permute.xlu0 %1517
      %v1519 = vlaneseq
      %v1520 = vshrl.u32 %v1519, 7
      %v1521 = vadd.s32 %v1520, 80
      %1522 = vset.pattern.permute.xlu0 %v1521
      %1523 = vperm.xlu0 %1522, %v1458
      %v1524 = vpop.permute.xlu0 %1523
      %v1525 = vlaneseq
      %v1526 = vshrl.u32 %v1525, 7
      %v1527 = vadd.s32 %v1526, 88
      %1528 = vset.pattern.permute.xlu0 %v1527
      %1529 = vperm.xlu0 %1528, %v1458
      %v1530 = vpop.permute.xlu0 %1529
      %v1531 = vlaneseq
      %v1532 = vshrl.u32 %v1531, 7
      %v1533 = vadd.s32 %v1532, 96
      %1534 = vset.pattern.permute.xlu0 %v1533
      %1535 = vperm.xlu0 %1534, %v1458
      %v1536 = vpop.permute.xlu0 %1535
      %v1537 = vlaneseq
      %v1538 = vshrl.u32 %v1537, 7
      %v1539 = vadd.s32 %v1538, 104
      %1540 = vset.pattern.permute.xlu0 %v1539
      %1541 = vperm.xlu0 %1540, %v1458
      %v1542 = vpop.permute.xlu0 %1541
      %v1543 = vlaneseq
      %v1544 = vshrl.u32 %v1543, 7
      %v1545 = vadd.s32 %v1544, 112
      %1546 = vset.pattern.permute.xlu0 %v1545
      %1547 = vperm.xlu0 %1546, %v1458
      %v1548 = vpop.permute.xlu0 %1547
      %v1549 = vlaneseq
      %v1550 = vshrl.u32 %v1549, 7
      %v1551 = vadd.s32 %v1550, 120
      %1552 = vset.pattern.permute.xlu0 %v1551
      %1553 = vperm.xlu0 %1552, %v1458
      %v1554 = vpop.permute.xlu0 %1553
      %v1555 = vperm.slane %v1165, 4
      %v1556 = vlaneseq
      %v1557 = vshrl.u32 %v1556, 7
      %1559 = vset.pattern.permute.xlu0 %v1557
      %1560 = vperm.xlu0 %1559, %v1555
      %v1561 = vpop.permute.xlu0 %1560
      %v1562 = vlaneseq
      %v1563 = vshrl.u32 %v1562, 7
      %v1564 = vadd.s32 %v1563, 8
      %1565 = vset.pattern.permute.xlu0 %v1564
      %1566 = vperm.xlu0 %1565, %v1555
      %v1567 = vpop.permute.xlu0 %1566
      %v1568 = vlaneseq
      %v1569 = vshrl.u32 %v1568, 7
      %v1570 = vadd.s32 %v1569, 16
      %1571 = vset.pattern.permute.xlu0 %v1570
      %1572 = vperm.xlu0 %1571, %v1555
      %v1573 = vpop.permute.xlu0 %1572
      %v1574 = vlaneseq
      %v1575 = vshrl.u32 %v1574, 7
      %v1576 = vadd.s32 %v1575, 24
      %1577 = vset.pattern.permute.xlu0 %v1576
      %1578 = vperm.xlu0 %1577, %v1555
      %v1579 = vpop.permute.xlu0 %1578
      %v1580 = vlaneseq
      %v1581 = vshrl.u32 %v1580, 7
      %v1582 = vadd.s32 %v1581, 32
      %1583 = vset.pattern.permute.xlu0 %v1582
      %1584 = vperm.xlu0 %1583, %v1555
      %v1585 = vpop.permute.xlu0 %1584
      %v1586 = vlaneseq
      %v1587 = vshrl.u32 %v1586, 7
      %v1588 = vadd.s32 %v1587, 40
      %1589 = vset.pattern.permute.xlu0 %v1588
      %1590 = vperm.xlu0 %1589, %v1555
      %v1591 = vpop.permute.xlu0 %1590
      %v1592 = vlaneseq
      %v1593 = vshrl.u32 %v1592, 7
      %v1594 = vadd.s32 %v1593, 48
      %1595 = vset.pattern.permute.xlu0 %v1594
      %1596 = vperm.xlu0 %1595, %v1555
      %v1597 = vpop.permute.xlu0 %1596
      %v1598 = vlaneseq
      %v1599 = vshrl.u32 %v1598, 7
      %v1600 = vadd.s32 %v1599, 56
      %1601 = vset.pattern.permute.xlu0 %v1600
      %1602 = vperm.xlu0 %1601, %v1555
      %v1603 = vpop.permute.xlu0 %1602
      %v1604 = vlaneseq
      %v1605 = vshrl.u32 %v1604, 7
      %v1606 = vadd.s32 %v1605, 64
      %1607 = vset.pattern.permute.xlu0 %v1606
      %1608 = vperm.xlu0 %1607, %v1555
      %v1609 = vpop.permute.xlu0 %1608
      %v1610 = vlaneseq
      %v1611 = vshrl.u32 %v1610, 7
      %v1612 = vadd.s32 %v1611, 72
      %1613 = vset.pattern.permute.xlu0 %v1612
      %1614 = vperm.xlu0 %1613, %v1555
      %v1615 = vpop.permute.xlu0 %1614
      %v1616 = vlaneseq
      %v1617 = vshrl.u32 %v1616, 7
      %v1618 = vadd.s32 %v1617, 80
      %1619 = vset.pattern.permute.xlu0 %v1618
      %1620 = vperm.xlu0 %1619, %v1555
      %v1621 = vpop.permute.xlu0 %1620
      %v1622 = vlaneseq
      %v1623 = vshrl.u32 %v1622, 7
      %v1624 = vadd.s32 %v1623, 88
      %1625 = vset.pattern.permute.xlu0 %v1624
      %1626 = vperm.xlu0 %1625, %v1555
      %v1627 = vpop.permute.xlu0 %1626
      %v1628 = vlaneseq
      %v1629 = vshrl.u32 %v1628, 7
      %v1630 = vadd.s32 %v1629, 96
      %1631 = vset.pattern.permute.xlu0 %v1630
      %1632 = vperm.xlu0 %1631, %v1555
      %v1633 = vpop.permute.xlu0 %1632
      %v1634 = vlaneseq
      %v1635 = vshrl.u32 %v1634, 7
      %v1636 = vadd.s32 %v1635, 104
      %1637 = vset.pattern.permute.xlu0 %v1636
      %1638 = vperm.xlu0 %1637, %v1555
      %v1639 = vpop.permute.xlu0 %1638
      %v1640 = vlaneseq
      %v1641 = vshrl.u32 %v1640, 7
      %v1642 = vadd.s32 %v1641, 112
      %1643 = vset.pattern.permute.xlu0 %v1642
      %1644 = vperm.xlu0 %1643, %v1555
      %v1645 = vpop.permute.xlu0 %1644
      %v1646 = vlaneseq
      %v1647 = vshrl.u32 %v1646, 7
      %v1648 = vadd.s32 %v1647, 120
      %1649 = vset.pattern.permute.xlu0 %v1648
      %1650 = vperm.xlu0 %1649, %v1555
      %v1651 = vpop.permute.xlu0 %1650
      %v1652 = vperm.slane %v1165, 5
      %v1653 = vlaneseq
      %v1654 = vshrl.u32 %v1653, 7
      %1656 = vset.pattern.permute.xlu0 %v1654
      %1657 = vperm.xlu0 %1656, %v1652
      %v1658 = vpop.permute.xlu0 %1657
      %v1659 = vlaneseq
      %v1660 = vshrl.u32 %v1659, 7
      %v1661 = vadd.s32 %v1660, 8
      %1662 = vset.pattern.permute.xlu0 %v1661
      %1663 = vperm.xlu0 %1662, %v1652
      %v1664 = vpop.permute.xlu0 %1663
      %v1665 = vlaneseq
      %v1666 = vshrl.u32 %v1665, 7
      %v1667 = vadd.s32 %v1666, 16
      %1668 = vset.pattern.permute.xlu0 %v1667
      %1669 = vperm.xlu0 %1668, %v1652
      %v1670 = vpop.permute.xlu0 %1669
      %v1671 = vlaneseq
      %v1672 = vshrl.u32 %v1671, 7
      %v1673 = vadd.s32 %v1672, 24
      %1674 = vset.pattern.permute.xlu0 %v1673
      %1675 = vperm.xlu0 %1674, %v1652
      %v1676 = vpop.permute.xlu0 %1675
      %v1677 = vlaneseq
      %v1678 = vshrl.u32 %v1677, 7
      %v1679 = vadd.s32 %v1678, 32
      %1680 = vset.pattern.permute.xlu0 %v1679
      %1681 = vperm.xlu0 %1680, %v1652
      %v1682 = vpop.permute.xlu0 %1681
      %v1683 = vlaneseq
      %v1684 = vshrl.u32 %v1683, 7
      %v1685 = vadd.s32 %v1684, 40
      %1686 = vset.pattern.permute.xlu0 %v1685
      %1687 = vperm.xlu0 %1686, %v1652
      %v1688 = vpop.permute.xlu0 %1687
      %v1689 = vlaneseq
      %v1690 = vshrl.u32 %v1689, 7
      %v1691 = vadd.s32 %v1690, 48
      %1692 = vset.pattern.permute.xlu0 %v1691
      %1693 = vperm.xlu0 %1692, %v1652
      %v1694 = vpop.permute.xlu0 %1693
      %v1695 = vlaneseq
      %v1696 = vshrl.u32 %v1695, 7
      %v1697 = vadd.s32 %v1696, 56
      %1698 = vset.pattern.permute.xlu0 %v1697
      %1699 = vperm.xlu0 %1698, %v1652
      %v1700 = vpop.permute.xlu0 %1699
      %v1701 = vlaneseq
      %v1702 = vshrl.u32 %v1701, 7
      %v1703 = vadd.s32 %v1702, 64
      %1704 = vset.pattern.permute.xlu0 %v1703
      %1705 = vperm.xlu0 %1704, %v1652
      %v1706 = vpop.permute.xlu0 %1705
      %v1707 = vlaneseq
      %v1708 = vshrl.u32 %v1707, 7
      %v1709 = vadd.s32 %v1708, 72
      %1710 = vset.pattern.permute.xlu0 %v1709
      %1711 = vperm.xlu0 %1710, %v1652
      %v1712 = vpop.permute.xlu0 %1711
      %v1713 = vlaneseq
      %v1714 = vshrl.u32 %v1713, 7
      %v1715 = vadd.s32 %v1714, 80
      %1716 = vset.pattern.permute.xlu0 %v1715
      %1717 = vperm.xlu0 %1716, %v1652
      %v1718 = vpop.permute.xlu0 %1717
      %v1719 = vlaneseq
      %v1720 = vshrl.u32 %v1719, 7
      %v1721 = vadd.s32 %v1720, 88
      %1722 = vset.pattern.permute.xlu0 %v1721
      %1723 = vperm.xlu0 %1722, %v1652
      %v1724 = vpop.permute.xlu0 %1723
      %v1725 = vlaneseq
      %v1726 = vshrl.u32 %v1725, 7
      %v1727 = vadd.s32 %v1726, 96
      %1728 = vset.pattern.permute.xlu0 %v1727
      %1729 = vperm.xlu0 %1728, %v1652
      %v1730 = vpop.permute.xlu0 %1729
      %v1731 = vlaneseq
      %v1732 = vshrl.u32 %v1731, 7
      %v1733 = vadd.s32 %v1732, 104
      %1734 = vset.pattern.permute.xlu0 %v1733
      %1735 = vperm.xlu0 %1734, %v1652
      %v1736 = vpop.permute.xlu0 %1735
      %v1737 = vlaneseq
      %v1738 = vshrl.u32 %v1737, 7
      %v1739 = vadd.s32 %v1738, 112
      %1740 = vset.pattern.permute.xlu0 %v1739
      %1741 = vperm.xlu0 %1740, %v1652
      %v1742 = vpop.permute.xlu0 %1741
      %v1743 = vlaneseq
      %v1744 = vshrl.u32 %v1743, 7
      %v1745 = vadd.s32 %v1744, 120
      %1746 = vset.pattern.permute.xlu0 %v1745
      %1747 = vperm.xlu0 %1746, %v1652
      %v1748 = vpop.permute.xlu0 %1747
      %v1749 = vperm.slane %v1165, 6
      %v1750 = vlaneseq
      %v1751 = vshrl.u32 %v1750, 7
      %1753 = vset.pattern.permute.xlu0 %v1751
      %1754 = vperm.xlu0 %1753, %v1749
      %v1755 = vpop.permute.xlu0 %1754
      %v1756 = vlaneseq
      %v1757 = vshrl.u32 %v1756, 7
      %v1758 = vadd.s32 %v1757, 8
      %1759 = vset.pattern.permute.xlu0 %v1758
      %1760 = vperm.xlu0 %1759, %v1749
      %v1761 = vpop.permute.xlu0 %1760
      %v1762 = vlaneseq
      %v1763 = vshrl.u32 %v1762, 7
      %v1764 = vadd.s32 %v1763, 16
      %1765 = vset.pattern.permute.xlu0 %v1764
      %1766 = vperm.xlu0 %1765, %v1749
      %v1767 = vpop.permute.xlu0 %1766
      %v1768 = vlaneseq
      %v1769 = vshrl.u32 %v1768, 7
      %v1770 = vadd.s32 %v1769, 24
      %1771 = vset.pattern.permute.xlu0 %v1770
      %1772 = vperm.xlu0 %1771, %v1749
      %v1773 = vpop.permute.xlu0 %1772
      %v1774 = vlaneseq
      %v1775 = vshrl.u32 %v1774, 7
      %v1776 = vadd.s32 %v1775, 32
      %1777 = vset.pattern.permute.xlu0 %v1776
      %1778 = vperm.xlu0 %1777, %v1749
      %v1779 = vpop.permute.xlu0 %1778
      %v1780 = vlaneseq
      %v1781 = vshrl.u32 %v1780, 7
      %v1782 = vadd.s32 %v1781, 40
      %1783 = vset.pattern.permute.xlu0 %v1782
      %1784 = vperm.xlu0 %1783, %v1749
      %v1785 = vpop.permute.xlu0 %1784
      %v1786 = vlaneseq
      %v1787 = vshrl.u32 %v1786, 7
      %v1788 = vadd.s32 %v1787, 48
      %1789 = vset.pattern.permute.xlu0 %v1788
      %1790 = vperm.xlu0 %1789, %v1749
      %v1791 = vpop.permute.xlu0 %1790
      %v1792 = vlaneseq
      %v1793 = vshrl.u32 %v1792, 7
      %v1794 = vadd.s32 %v1793, 56
      %1795 = vset.pattern.permute.xlu0 %v1794
      %1796 = vperm.xlu0 %1795, %v1749
      %v1797 = vpop.permute.xlu0 %1796
      %v1798 = vlaneseq
      %v1799 = vshrl.u32 %v1798, 7
      %v1800 = vadd.s32 %v1799, 64
      %1801 = vset.pattern.permute.xlu0 %v1800
      %1802 = vperm.xlu0 %1801, %v1749
      %v1803 = vpop.permute.xlu0 %1802
      %v1804 = vlaneseq
      %v1805 = vshrl.u32 %v1804, 7
      %v1806 = vadd.s32 %v1805, 72
      %1807 = vset.pattern.permute.xlu0 %v1806
      %1808 = vperm.xlu0 %1807, %v1749
      %v1809 = vpop.permute.xlu0 %1808
      %v1810 = vlaneseq
      %v1811 = vshrl.u32 %v1810, 7
      %v1812 = vadd.s32 %v1811, 80
      %1813 = vset.pattern.permute.xlu0 %v1812
      %1814 = vperm.xlu0 %1813, %v1749
      %v1815 = vpop.permute.xlu0 %1814
      %v1816 = vlaneseq
      %v1817 = vshrl.u32 %v1816, 7
      %v1818 = vadd.s32 %v1817, 88
      %1819 = vset.pattern.permute.xlu0 %v1818
      %1820 = vperm.xlu0 %1819, %v1749
      %v1821 = vpop.permute.xlu0 %1820
      %v1822 = vlaneseq
      %v1823 = vshrl.u32 %v1822, 7
      %v1824 = vadd.s32 %v1823, 96
      %1825 = vset.pattern.permute.xlu0 %v1824
      %1826 = vperm.xlu0 %1825, %v1749
      %v1827 = vpop.permute.xlu0 %1826
      %v1828 = vlaneseq
      %v1829 = vshrl.u32 %v1828, 7
      %v1830 = vadd.s32 %v1829, 104
      %1831 = vset.pattern.permute.xlu0 %v1830
      %1832 = vperm.xlu0 %1831, %v1749
      %v1833 = vpop.permute.xlu0 %1832
      %v1834 = vlaneseq
      %v1835 = vshrl.u32 %v1834, 7
      %v1836 = vadd.s32 %v1835, 112
      %1837 = vset.pattern.permute.xlu0 %v1836
      %1838 = vperm.xlu0 %1837, %v1749
      %v1839 = vpop.permute.xlu0 %1838
      %v1840 = vlaneseq
      %v1841 = vshrl.u32 %v1840, 7
      %v1842 = vadd.s32 %v1841, 120
      %1843 = vset.pattern.permute.xlu0 %v1842
      %1844 = vperm.xlu0 %1843, %v1749
      %v1845 = vpop.permute.xlu0 %1844
      %v1846 = vperm.slane %v1165, 7
      %v1847 = vlaneseq
      %v1848 = vshrl.u32 %v1847, 7
      %1850 = vset.pattern.permute.xlu0 %v1848
      %1851 = vperm.xlu0 %1850, %v1846
      %v1852 = vpop.permute.xlu0 %1851
      %v1853 = vlaneseq
      %v1854 = vshrl.u32 %v1853, 7
      %v1855 = vadd.s32 %v1854, 8
      %1856 = vset.pattern.permute.xlu0 %v1855
      %1857 = vperm.xlu0 %1856, %v1846
      %v1858 = vpop.permute.xlu0 %1857
      %v1859 = vlaneseq
      %v1860 = vshrl.u32 %v1859, 7
      %v1861 = vadd.s32 %v1860, 16
      %1862 = vset.pattern.permute.xlu0 %v1861
      %1863 = vperm.xlu0 %1862, %v1846
      %v1864 = vpop.permute.xlu0 %1863
      %v1865 = vlaneseq
      %v1866 = vshrl.u32 %v1865, 7
      %v1867 = vadd.s32 %v1866, 24
      %1868 = vset.pattern.permute.xlu0 %v1867
      %1869 = vperm.xlu0 %1868, %v1846
      %v1870 = vpop.permute.xlu0 %1869
      %v1871 = vlaneseq
      %v1872 = vshrl.u32 %v1871, 7
      %v1873 = vadd.s32 %v1872, 32
      %1874 = vset.pattern.permute.xlu0 %v1873
      %1875 = vperm.xlu0 %1874, %v1846
      %v1876 = vpop.permute.xlu0 %1875
      %v1877 = vlaneseq
      %v1878 = vshrl.u32 %v1877, 7
      %v1879 = vadd.s32 %v1878, 40
      %1880 = vset.pattern.permute.xlu0 %v1879
      %1881 = vperm.xlu0 %1880, %v1846
      %v1882 = vpop.permute.xlu0 %1881
      %v1883 = vlaneseq
      %v1884 = vshrl.u32 %v1883, 7
      %v1885 = vadd.s32 %v1884, 48
      %1886 = vset.pattern.permute.xlu0 %v1885
      %1887 = vperm.xlu0 %1886, %v1846
      %v1888 = vpop.permute.xlu0 %1887
      %v1889 = vlaneseq
      %v1890 = vshrl.u32 %v1889, 7
      %v1891 = vadd.s32 %v1890, 56
      %1892 = vset.pattern.permute.xlu0 %v1891
      %1893 = vperm.xlu0 %1892, %v1846
      %v1894 = vpop.permute.xlu0 %1893
      %v1895 = vlaneseq
      %v1896 = vshrl.u32 %v1895, 7
      %v1897 = vadd.s32 %v1896, 64
      %1898 = vset.pattern.permute.xlu0 %v1897
      %1899 = vperm.xlu0 %1898, %v1846
      %v1900 = vpop.permute.xlu0 %1899
      %v1901 = vlaneseq
      %v1902 = vshrl.u32 %v1901, 7
      %v1903 = vadd.s32 %v1902, 72
      %1904 = vset.pattern.permute.xlu0 %v1903
      %1905 = vperm.xlu0 %1904, %v1846
      %v1906 = vpop.permute.xlu0 %1905
      %v1907 = vlaneseq
      %v1908 = vshrl.u32 %v1907, 7
      %v1909 = vadd.s32 %v1908, 80
      %1910 = vset.pattern.permute.xlu0 %v1909
      %1911 = vperm.xlu0 %1910, %v1846
      %v1912 = vpop.permute.xlu0 %1911
      %v1913 = vlaneseq
      %v1914 = vshrl.u32 %v1913, 7
      %v1915 = vadd.s32 %v1914, 88
      %1916 = vset.pattern.permute.xlu0 %v1915
      %1917 = vperm.xlu0 %1916, %v1846
      %v1918 = vpop.permute.xlu0 %1917
      %v1919 = vlaneseq
      %v1920 = vshrl.u32 %v1919, 7
      %v1921 = vadd.s32 %v1920, 96
      %1922 = vset.pattern.permute.xlu0 %v1921
      %1923 = vperm.xlu0 %1922, %v1846
      %v1924 = vpop.permute.xlu0 %1923
      %v1925 = vlaneseq
      %v1926 = vshrl.u32 %v1925, 7
      %v1927 = vadd.s32 %v1926, 104
      %1928 = vset.pattern.permute.xlu0 %v1927
      %1929 = vperm.xlu0 %1928, %v1846
      %v1930 = vpop.permute.xlu0 %1929
      %v1931 = vlaneseq
      %v1932 = vshrl.u32 %v1931, 7
      %v1933 = vadd.s32 %v1932, 112
      %1934 = vset.pattern.permute.xlu0 %v1933
      %1935 = vperm.xlu0 %1934, %v1846
      %v1936 = vpop.permute.xlu0 %1935
      %v1937 = vlaneseq
      %v1938 = vshrl.u32 %v1937, 7
      %v1939 = vadd.s32 %v1938, 120
      %1940 = vset.pattern.permute.xlu0 %v1939
      %1941 = vperm.xlu0 %1940, %v1846
      %v1942 = vpop.permute.xlu0 %1941
      %v2071 = vadd.f32 %v783, %v1173
      %v2072 = vadd.f32 %v786, %v1179
      %v2073 = vadd.f32 %v789, %v1185
      %v2074 = vadd.f32 %v792, %v1191
      %v2075 = vadd.f32 %v795, %v1197
      %v2076 = vadd.f32 %v798, %v1203
      %v2077 = vadd.f32 %v801, %v1209
      %v2078 = vadd.f32 %v804, %v1215
      %v2079 = vadd.f32 %v807, %v1221
      %v2080 = vadd.f32 %v810, %v1227
      %v2081 = vadd.f32 %v813, %v1233
      %v2082 = vadd.f32 %v816, %v1239
      %v2083 = vadd.f32 %v819, %v1245
      %v2084 = vadd.f32 %v822, %v1251
      %v2085 = vadd.f32 %v825, %v1257
      %v2086 = vadd.f32 %v828, %v1263
      %v2087 = vadd.f32 %v831, %v1270
      %v2088 = vadd.f32 %v834, %v1276
      %v2089 = vadd.f32 %v837, %v1282
      %v2090 = vadd.f32 %v840, %v1288
      %v2091 = vadd.f32 %v843, %v1294
      %v2092 = vadd.f32 %v846, %v1300
      %v2093 = vadd.f32 %v849, %v1306
      %v2094 = vadd.f32 %v852, %v1312
      %v2095 = vadd.f32 %v855, %v1318
      %v2096 = vadd.f32 %v858, %v1324
      %v2097 = vadd.f32 %v861, %v1330
      %v2098 = vadd.f32 %v864, %v1336
      %v2099 = vadd.f32 %v867, %v1342
      %v2100 = vadd.f32 %v870, %v1348
      %v2101 = vadd.f32 %v873, %v1354
      %v2102 = vadd.f32 %v876, %v1360
      %v2103 = vadd.f32 %v879, %v1367
      %v2104 = vadd.f32 %v882, %v1373
      %v2105 = vadd.f32 %v885, %v1379
      %v2106 = vadd.f32 %v888, %v1385
      %v2107 = vadd.f32 %v891, %v1391
      %v2108 = vadd.f32 %v894, %v1397
      %v2109 = vadd.f32 %v897, %v1403
      %v2110 = vadd.f32 %v900, %v1409
      %v2111 = vadd.f32 %v903, %v1415
      %v2112 = vadd.f32 %v906, %v1421
      %v2113 = vadd.f32 %v909, %v1427
      %v2114 = vadd.f32 %v912, %v1433
      %v2115 = vadd.f32 %v915, %v1439
      %v2116 = vadd.f32 %v918, %v1445
      %v2117 = vadd.f32 %v921, %v1451
      %v2118 = vadd.f32 %v924, %v1457
      %v2119 = vadd.f32 %v927, %v1464
      %v2120 = vadd.f32 %v930, %v1470
      %v2121 = vadd.f32 %v933, %v1476
      %v2122 = vadd.f32 %v936, %v1482
      %v2123 = vadd.f32 %v939, %v1488
      %v2124 = vadd.f32 %v942, %v1494
      %v2125 = vadd.f32 %v945, %v1500
      %v2126 = vadd.f32 %v948, %v1506
      %v2127 = vadd.f32 %v951, %v1512
      %v2128 = vadd.f32 %v954, %v1518
      %v2129 = vadd.f32 %v957, %v1524
      %v2130 = vadd.f32 %v960, %v1530
      %v2131 = vadd.f32 %v963, %v1536
      %v2132 = vadd.f32 %v966, %v1542
      %v2133 = vadd.f32 %v969, %v1548
      %v2134 = vadd.f32 %v972, %v1554
      %v2135 = vadd.f32 %v975, %v1561
      %v2136 = vadd.f32 %v978, %v1567
      %v2137 = vadd.f32 %v981, %v1573
      %v2138 = vadd.f32 %v984, %v1579
      %v2139 = vadd.f32 %v987, %v1585
      %v2140 = vadd.f32 %v990, %v1591
      %v2141 = vadd.f32 %v993, %v1597
      %v2142 = vadd.f32 %v996, %v1603
      %v2143 = vadd.f32 %v999, %v1609
      %v2144 = vadd.f32 %v1002, %v1615
      %v2145 = vadd.f32 %v1005, %v1621
      %v2146 = vadd.f32 %v1008, %v1627
      %v2147 = vadd.f32 %v1011, %v1633
      %v2148 = vadd.f32 %v1014, %v1639
      %v2149 = vadd.f32 %v1017, %v1645
      %v2150 = vadd.f32 %v1020, %v1651
      %v2151 = vadd.f32 %v1023, %v1658
      %v2152 = vadd.f32 %v1026, %v1664
      %v2153 = vadd.f32 %v1029, %v1670
      %v2154 = vadd.f32 %v1032, %v1676
      %v2155 = vadd.f32 %v1035, %v1682
      %v2156 = vadd.f32 %v1038, %v1688
      %v2157 = vadd.f32 %v1041, %v1694
      %v2158 = vadd.f32 %v1044, %v1700
      %v2159 = vadd.f32 %v1047, %v1706
      %v2160 = vadd.f32 %v1050, %v1712
      %v2161 = vadd.f32 %v1053, %v1718
      %v2162 = vadd.f32 %v1056, %v1724
      %v2163 = vadd.f32 %v1059, %v1730
      %v2164 = vadd.f32 %v1062, %v1736
      %v2165 = vadd.f32 %v1065, %v1742
      %v2166 = vadd.f32 %v1068, %v1748
      %v2167 = vadd.f32 %v1071, %v1755
      %v2168 = vadd.f32 %v1074, %v1761
      %v2169 = vadd.f32 %v1077, %v1767
      %v2170 = vadd.f32 %v1080, %v1773
      %v2171 = vadd.f32 %v1083, %v1779
      %v2172 = vadd.f32 %v1086, %v1785
      %v2173 = vadd.f32 %v1089, %v1791
      %v2174 = vadd.f32 %v1092, %v1797
      %v2175 = vadd.f32 %v1095, %v1803
      %v2176 = vadd.f32 %v1098, %v1809
      %v2177 = vadd.f32 %v1101, %v1815
      %v2178 = vadd.f32 %v1104, %v1821
      %v2179 = vadd.f32 %v1107, %v1827
      %v2180 = vadd.f32 %v1110, %v1833
      %v2181 = vadd.f32 %v1113, %v1839
      %v2182 = vadd.f32 %v1116, %v1845
      %v2183 = vadd.f32 %v1119, %v1852
      %v2184 = vadd.f32 %v1122, %v1858
      %v2185 = vadd.f32 %v1125, %v1864
      %v2186 = vadd.f32 %v1128, %v1870
      %v2187 = vadd.f32 %v1131, %v1876
      %v2188 = vadd.f32 %v1134, %v1882
      %v2189 = vadd.f32 %v1137, %v1888
      %v2190 = vadd.f32 %v1140, %v1894
      %v2191 = vadd.f32 %v1143, %v1900
      %v2192 = vadd.f32 %v1146, %v1906
      %v2193 = vadd.f32 %v1149, %v1912
      %v2194 = vadd.f32 %v1152, %v1918
      %v2195 = vadd.f32 %v1155, %v1924
      %v2196 = vadd.f32 %v1158, %v1930
      %v2197 = vadd.f32 %v1161, %v1936
      %v2198 = vadd.f32 %v1164, %v1942
      %2327 = vset.pattern.permute.xlu0 0
      %2328 = vperm.xlu0 %2327, %v2071
      %v2329 = vpop.permute.xlu0 %2328
      %2330 = vset.pattern.permute.xlu0 0
      %2331 = vperm.xlu0 %2330, %v2072
      %v2332 = vpop.permute.xlu0 %2331
      %2333 = vset.pattern.permute.xlu0 0
      %2334 = vperm.xlu0 %2333, %v2073
      %v2335 = vpop.permute.xlu0 %2334
      %2336 = vset.pattern.permute.xlu0 0
      %2337 = vperm.xlu0 %2336, %v2074
      %v2338 = vpop.permute.xlu0 %2337
      %2339 = vset.pattern.permute.xlu0 0
      %2340 = vperm.xlu0 %2339, %v2075
      %v2341 = vpop.permute.xlu0 %2340
      %2342 = vset.pattern.permute.xlu0 0
      %2343 = vperm.xlu0 %2342, %v2076
      %v2344 = vpop.permute.xlu0 %2343
      %2345 = vset.pattern.permute.xlu0 0
      %2346 = vperm.xlu0 %2345, %v2077
      %v2347 = vpop.permute.xlu0 %2346
      %2348 = vset.pattern.permute.xlu0 0
      %2349 = vperm.xlu0 %2348, %v2078
      %v2350 = vpop.permute.xlu0 %2349
      %2351 = vset.pattern.permute.xlu0 0
      %2352 = vperm.xlu0 %2351, %v2079
      %v2353 = vpop.permute.xlu0 %2352
      %2354 = vset.pattern.permute.xlu0 0
      %2355 = vperm.xlu0 %2354, %v2080
      %v2356 = vpop.permute.xlu0 %2355
      %2357 = vset.pattern.permute.xlu0 0
      %2358 = vperm.xlu0 %2357, %v2081
      %v2359 = vpop.permute.xlu0 %2358
      %2360 = vset.pattern.permute.xlu0 0
      %2361 = vperm.xlu0 %2360, %v2082
      %v2362 = vpop.permute.xlu0 %2361
      %2363 = vset.pattern.permute.xlu0 0
      %2364 = vperm.xlu0 %2363, %v2083
      %v2365 = vpop.permute.xlu0 %2364
      %2366 = vset.pattern.permute.xlu0 0
      %2367 = vperm.xlu0 %2366, %v2084
      %v2368 = vpop.permute.xlu0 %2367
      %2369 = vset.pattern.permute.xlu0 0
      %2370 = vperm.xlu0 %2369, %v2085
      %v2371 = vpop.permute.xlu0 %2370
      %2372 = vset.pattern.permute.xlu0 0
      %2373 = vperm.xlu0 %2372, %v2086
      %v2374 = vpop.permute.xlu0 %2373
      %2375 = vset.pattern.permute.xlu0 0
      %2376 = vperm.xlu0 %2375, %v2087
      %v2377 = vpop.permute.xlu0 %2376
      %2378 = vset.pattern.permute.xlu0 0
      %2379 = vperm.xlu0 %2378, %v2088
      %v2380 = vpop.permute.xlu0 %2379
      %2381 = vset.pattern.permute.xlu0 0
      %2382 = vperm.xlu0 %2381, %v2089
      %v2383 = vpop.permute.xlu0 %2382
      %2384 = vset.pattern.permute.xlu0 0
      %2385 = vperm.xlu0 %2384, %v2090
      %v2386 = vpop.permute.xlu0 %2385
      %2387 = vset.pattern.permute.xlu0 0
      %2388 = vperm.xlu0 %2387, %v2091
      %v2389 = vpop.permute.xlu0 %2388
      %2390 = vset.pattern.permute.xlu0 0
      %2391 = vperm.xlu0 %2390, %v2092
      %v2392 = vpop.permute.xlu0 %2391
      %2393 = vset.pattern.permute.xlu0 0
      %2394 = vperm.xlu0 %2393, %v2093
      %v2395 = vpop.permute.xlu0 %2394
      %2396 = vset.pattern.permute.xlu0 0
      %2397 = vperm.xlu0 %2396, %v2094
      %v2398 = vpop.permute.xlu0 %2397
      %2399 = vset.pattern.permute.xlu0 0
      %2400 = vperm.xlu0 %2399, %v2095
      %v2401 = vpop.permute.xlu0 %2400
      %2402 = vset.pattern.permute.xlu0 0
      %2403 = vperm.xlu0 %2402, %v2096
      %v2404 = vpop.permute.xlu0 %2403
      %2405 = vset.pattern.permute.xlu0 0
      %2406 = vperm.xlu0 %2405, %v2097
      %v2407 = vpop.permute.xlu0 %2406
      %2408 = vset.pattern.permute.xlu0 0
      %2409 = vperm.xlu0 %2408, %v2098
      %v2410 = vpop.permute.xlu0 %2409
      %2411 = vset.pattern.permute.xlu0 0
      %2412 = vperm.xlu0 %2411, %v2099
      %v2413 = vpop.permute.xlu0 %2412
      %2414 = vset.pattern.permute.xlu0 0
      %2415 = vperm.xlu0 %2414, %v2100
      %v2416 = vpop.permute.xlu0 %2415
      %2417 = vset.pattern.permute.xlu0 0
      %2418 = vperm.xlu0 %2417, %v2101
      %v2419 = vpop.permute.xlu0 %2418
      %2420 = vset.pattern.permute.xlu0 0
      %2421 = vperm.xlu0 %2420, %v2102
      %v2422 = vpop.permute.xlu0 %2421
      %2423 = vset.pattern.permute.xlu0 0
      %2424 = vperm.xlu0 %2423, %v2103
      %v2425 = vpop.permute.xlu0 %2424
      %2426 = vset.pattern.permute.xlu0 0
      %2427 = vperm.xlu0 %2426, %v2104
      %v2428 = vpop.permute.xlu0 %2427
      %2429 = vset.pattern.permute.xlu0 0
      %2430 = vperm.xlu0 %2429, %v2105
      %v2431 = vpop.permute.xlu0 %2430
      %2432 = vset.pattern.permute.xlu0 0
      %2433 = vperm.xlu0 %2432, %v2106
      %v2434 = vpop.permute.xlu0 %2433
      %2435 = vset.pattern.permute.xlu0 0
      %2436 = vperm.xlu0 %2435, %v2107
      %v2437 = vpop.permute.xlu0 %2436
      %2438 = vset.pattern.permute.xlu0 0
      %2439 = vperm.xlu0 %2438, %v2108
      %v2440 = vpop.permute.xlu0 %2439
      %2441 = vset.pattern.permute.xlu0 0
      %2442 = vperm.xlu0 %2441, %v2109
      %v2443 = vpop.permute.xlu0 %2442
      %2444 = vset.pattern.permute.xlu0 0
      %2445 = vperm.xlu0 %2444, %v2110
      %v2446 = vpop.permute.xlu0 %2445
      %2447 = vset.pattern.permute.xlu0 0
      %2448 = vperm.xlu0 %2447, %v2111
      %v2449 = vpop.permute.xlu0 %2448
      %2450 = vset.pattern.permute.xlu0 0
      %2451 = vperm.xlu0 %2450, %v2112
      %v2452 = vpop.permute.xlu0 %2451
      %2453 = vset.pattern.permute.xlu0 0
      %2454 = vperm.xlu0 %2453, %v2113
      %v2455 = vpop.permute.xlu0 %2454
      %2456 = vset.pattern.permute.xlu0 0
      %2457 = vperm.xlu0 %2456, %v2114
      %v2458 = vpop.permute.xlu0 %2457
      %2459 = vset.pattern.permute.xlu0 0
      %2460 = vperm.xlu0 %2459, %v2115
      %v2461 = vpop.permute.xlu0 %2460
      %2462 = vset.pattern.permute.xlu0 0
      %2463 = vperm.xlu0 %2462, %v2116
      %v2464 = vpop.permute.xlu0 %2463
      %2465 = vset.pattern.permute.xlu0 0
      %2466 = vperm.xlu0 %2465, %v2117
      %v2467 = vpop.permute.xlu0 %2466
      %2468 = vset.pattern.permute.xlu0 0
      %2469 = vperm.xlu0 %2468, %v2118
      %v2470 = vpop.permute.xlu0 %2469
      %2471 = vset.pattern.permute.xlu0 0
      %2472 = vperm.xlu0 %2471, %v2119
      %v2473 = vpop.permute.xlu0 %2472
      %2474 = vset.pattern.permute.xlu0 0
      %2475 = vperm.xlu0 %2474, %v2120
      %v2476 = vpop.permute.xlu0 %2475
      %2477 = vset.pattern.permute.xlu0 0
      %2478 = vperm.xlu0 %2477, %v2121
      %v2479 = vpop.permute.xlu0 %2478
      %2480 = vset.pattern.permute.xlu0 0
      %2481 = vperm.xlu0 %2480, %v2122
      %v2482 = vpop.permute.xlu0 %2481
      %2483 = vset.pattern.permute.xlu0 0
      %2484 = vperm.xlu0 %2483, %v2123
      %v2485 = vpop.permute.xlu0 %2484
      %2486 = vset.pattern.permute.xlu0 0
      %2487 = vperm.xlu0 %2486, %v2124
      %v2488 = vpop.permute.xlu0 %2487
      %2489 = vset.pattern.permute.xlu0 0
      %2490 = vperm.xlu0 %2489, %v2125
      %v2491 = vpop.permute.xlu0 %2490
      %2492 = vset.pattern.permute.xlu0 0
      %2493 = vperm.xlu0 %2492, %v2126
      %v2494 = vpop.permute.xlu0 %2493
      %2495 = vset.pattern.permute.xlu0 0
      %2496 = vperm.xlu0 %2495, %v2127
      %v2497 = vpop.permute.xlu0 %2496
      %2498 = vset.pattern.permute.xlu0 0
      %2499 = vperm.xlu0 %2498, %v2128
      %v2500 = vpop.permute.xlu0 %2499
      %2501 = vset.pattern.permute.xlu0 0
      %2502 = vperm.xlu0 %2501, %v2129
      %v2503 = vpop.permute.xlu0 %2502
      %2504 = vset.pattern.permute.xlu0 0
      %2505 = vperm.xlu0 %2504, %v2130
      %v2506 = vpop.permute.xlu0 %2505
      %2507 = vset.pattern.permute.xlu0 0
      %2508 = vperm.xlu0 %2507, %v2131
      %v2509 = vpop.permute.xlu0 %2508
      %2510 = vset.pattern.permute.xlu0 0
      %2511 = vperm.xlu0 %2510, %v2132
      %v2512 = vpop.permute.xlu0 %2511
      %2513 = vset.pattern.permute.xlu0 0
      %2514 = vperm.xlu0 %2513, %v2133
      %v2515 = vpop.permute.xlu0 %2514
      %2516 = vset.pattern.permute.xlu0 0
      %2517 = vperm.xlu0 %2516, %v2134
      %v2518 = vpop.permute.xlu0 %2517
      %2519 = vset.pattern.permute.xlu0 0
      %2520 = vperm.xlu0 %2519, %v2135
      %v2521 = vpop.permute.xlu0 %2520
      %2522 = vset.pattern.permute.xlu0 0
      %2523 = vperm.xlu0 %2522, %v2136
      %v2524 = vpop.permute.xlu0 %2523
      %2525 = vset.pattern.permute.xlu0 0
      %2526 = vperm.xlu0 %2525, %v2137
      %v2527 = vpop.permute.xlu0 %2526
      %2528 = vset.pattern.permute.xlu0 0
      %2529 = vperm.xlu0 %2528, %v2138
      %v2530 = vpop.permute.xlu0 %2529
      %2531 = vset.pattern.permute.xlu0 0
      %2532 = vperm.xlu0 %2531, %v2139
      %v2533 = vpop.permute.xlu0 %2532
      %2534 = vset.pattern.permute.xlu0 0
      %2535 = vperm.xlu0 %2534, %v2140
      %v2536 = vpop.permute.xlu0 %2535
      %2537 = vset.pattern.permute.xlu0 0
      %2538 = vperm.xlu0 %2537, %v2141
      %v2539 = vpop.permute.xlu0 %2538
      %2540 = vset.pattern.permute.xlu0 0
      %2541 = vperm.xlu0 %2540, %v2142
      %v2542 = vpop.permute.xlu0 %2541
      %2543 = vset.pattern.permute.xlu0 0
      %2544 = vperm.xlu0 %2543, %v2143
      %v2545 = vpop.permute.xlu0 %2544
      %2546 = vset.pattern.permute.xlu0 0
      %2547 = vperm.xlu0 %2546, %v2144
      %v2548 = vpop.permute.xlu0 %2547
      %2549 = vset.pattern.permute.xlu0 0
      %2550 = vperm.xlu0 %2549, %v2145
      %v2551 = vpop.permute.xlu0 %2550
      %2552 = vset.pattern.permute.xlu0 0
      %2553 = vperm.xlu0 %2552, %v2146
      %v2554 = vpop.permute.xlu0 %2553
      %2555 = vset.pattern.permute.xlu0 0
      %2556 = vperm.xlu0 %2555, %v2147
      %v2557 = vpop.permute.xlu0 %2556
      %2558 = vset.pattern.permute.xlu0 0
      %2559 = vperm.xlu0 %2558, %v2148
      %v2560 = vpop.permute.xlu0 %2559
      %2561 = vset.pattern.permute.xlu0 0
      %2562 = vperm.xlu0 %2561, %v2149
      %v2563 = vpop.permute.xlu0 %2562
      %2564 = vset.pattern.permute.xlu0 0
      %2565 = vperm.xlu0 %2564, %v2150
      %v2566 = vpop.permute.xlu0 %2565
      %2567 = vset.pattern.permute.xlu0 0
      %2568 = vperm.xlu0 %2567, %v2151
      %v2569 = vpop.permute.xlu0 %2568
      %2570 = vset.pattern.permute.xlu0 0
      %2571 = vperm.xlu0 %2570, %v2152
      %v2572 = vpop.permute.xlu0 %2571
      %2573 = vset.pattern.permute.xlu0 0
      %2574 = vperm.xlu0 %2573, %v2153
      %v2575 = vpop.permute.xlu0 %2574
      %2576 = vset.pattern.permute.xlu0 0
      %2577 = vperm.xlu0 %2576, %v2154
      %v2578 = vpop.permute.xlu0 %2577
      %2579 = vset.pattern.permute.xlu0 0
      %2580 = vperm.xlu0 %2579, %v2155
      %v2581 = vpop.permute.xlu0 %2580
      %2582 = vset.pattern.permute.xlu0 0
      %2583 = vperm.xlu0 %2582, %v2156
      %v2584 = vpop.permute.xlu0 %2583
      %2585 = vset.pattern.permute.xlu0 0
      %2586 = vperm.xlu0 %2585, %v2157
      %v2587 = vpop.permute.xlu0 %2586
      %2588 = vset.pattern.permute.xlu0 0
      %2589 = vperm.xlu0 %2588, %v2158
      %v2590 = vpop.permute.xlu0 %2589
      %2591 = vset.pattern.permute.xlu0 0
      %2592 = vperm.xlu0 %2591, %v2159
      %v2593 = vpop.permute.xlu0 %2592
      %2594 = vset.pattern.permute.xlu0 0
      %2595 = vperm.xlu0 %2594, %v2160
      %v2596 = vpop.permute.xlu0 %2595
      %2597 = vset.pattern.permute.xlu0 0
      %2598 = vperm.xlu0 %2597, %v2161
      %v2599 = vpop.permute.xlu0 %2598
      %2600 = vset.pattern.permute.xlu0 0
      %2601 = vperm.xlu0 %2600, %v2162
      %v2602 = vpop.permute.xlu0 %2601
      %2603 = vset.pattern.permute.xlu0 0
      %2604 = vperm.xlu0 %2603, %v2163
      %v2605 = vpop.permute.xlu0 %2604
      %2606 = vset.pattern.permute.xlu0 0
      %2607 = vperm.xlu0 %2606, %v2164
      %v2608 = vpop.permute.xlu0 %2607
      %2609 = vset.pattern.permute.xlu0 0
      %2610 = vperm.xlu0 %2609, %v2165
      %v2611 = vpop.permute.xlu0 %2610
      %2612 = vset.pattern.permute.xlu0 0
      %2613 = vperm.xlu0 %2612, %v2166
      %v2614 = vpop.permute.xlu0 %2613
      %2615 = vset.pattern.permute.xlu0 0
      %2616 = vperm.xlu0 %2615, %v2167
      %v2617 = vpop.permute.xlu0 %2616
      %2618 = vset.pattern.permute.xlu0 0
      %2619 = vperm.xlu0 %2618, %v2168
      %v2620 = vpop.permute.xlu0 %2619
      %2621 = vset.pattern.permute.xlu0 0
      %2622 = vperm.xlu0 %2621, %v2169
      %v2623 = vpop.permute.xlu0 %2622
      %2624 = vset.pattern.permute.xlu0 0
      %2625 = vperm.xlu0 %2624, %v2170
      %v2626 = vpop.permute.xlu0 %2625
      %2627 = vset.pattern.permute.xlu0 0
      %2628 = vperm.xlu0 %2627, %v2171
      %v2629 = vpop.permute.xlu0 %2628
      %2630 = vset.pattern.permute.xlu0 0
      %2631 = vperm.xlu0 %2630, %v2172
      %v2632 = vpop.permute.xlu0 %2631
      %2633 = vset.pattern.permute.xlu0 0
      %2634 = vperm.xlu0 %2633, %v2173
      %v2635 = vpop.permute.xlu0 %2634
      %2636 = vset.pattern.permute.xlu0 0
      %2637 = vperm.xlu0 %2636, %v2174
      %v2638 = vpop.permute.xlu0 %2637
      %2639 = vset.pattern.permute.xlu0 0
      %2640 = vperm.xlu0 %2639, %v2175
      %v2641 = vpop.permute.xlu0 %2640
      %2642 = vset.pattern.permute.xlu0 0
      %2643 = vperm.xlu0 %2642, %v2176
      %v2644 = vpop.permute.xlu0 %2643
      %2645 = vset.pattern.permute.xlu0 0
      %2646 = vperm.xlu0 %2645, %v2177
      %v2647 = vpop.permute.xlu0 %2646
      %2648 = vset.pattern.permute.xlu0 0
      %2649 = vperm.xlu0 %2648, %v2178
      %v2650 = vpop.permute.xlu0 %2649
      %2651 = vset.pattern.permute.xlu0 0
      %2652 = vperm.xlu0 %2651, %v2179
      %v2653 = vpop.permute.xlu0 %2652
      %2654 = vset.pattern.permute.xlu0 0
      %2655 = vperm.xlu0 %2654, %v2180
      %v2656 = vpop.permute.xlu0 %2655
      %2657 = vset.pattern.permute.xlu0 0
      %2658 = vperm.xlu0 %2657, %v2181
      %v2659 = vpop.permute.xlu0 %2658
      %2660 = vset.pattern.permute.xlu0 0
      %2661 = vperm.xlu0 %2660, %v2182
      %v2662 = vpop.permute.xlu0 %2661
      %2663 = vset.pattern.permute.xlu0 0
      %2664 = vperm.xlu0 %2663, %v2183
      %v2665 = vpop.permute.xlu0 %2664
      %2666 = vset.pattern.permute.xlu0 0
      %2667 = vperm.xlu0 %2666, %v2184
      %v2668 = vpop.permute.xlu0 %2667
      %2669 = vset.pattern.permute.xlu0 0
      %2670 = vperm.xlu0 %2669, %v2185
      %v2671 = vpop.permute.xlu0 %2670
      %2672 = vset.pattern.permute.xlu0 0
      %2673 = vperm.xlu0 %2672, %v2186
      %v2674 = vpop.permute.xlu0 %2673
      %2675 = vset.pattern.permute.xlu0 0
      %2676 = vperm.xlu0 %2675, %v2187
      %v2677 = vpop.permute.xlu0 %2676
      %2678 = vset.pattern.permute.xlu0 0
      %2679 = vperm.xlu0 %2678, %v2188
      %v2680 = vpop.permute.xlu0 %2679
      %2681 = vset.pattern.permute.xlu0 0
      %2682 = vperm.xlu0 %2681, %v2189
      %v2683 = vpop.permute.xlu0 %2682
      %2684 = vset.pattern.permute.xlu0 0
      %2685 = vperm.xlu0 %2684, %v2190
      %v2686 = vpop.permute.xlu0 %2685
      %2687 = vset.pattern.permute.xlu0 0
      %2688 = vperm.xlu0 %2687, %v2191
      %v2689 = vpop.permute.xlu0 %2688
      %2690 = vset.pattern.permute.xlu0 0
      %2691 = vperm.xlu0 %2690, %v2192
      %v2692 = vpop.permute.xlu0 %2691
      %2693 = vset.pattern.permute.xlu0 0
      %2694 = vperm.xlu0 %2693, %v2193
      %v2695 = vpop.permute.xlu0 %2694
      %2696 = vset.pattern.permute.xlu0 0
      %2697 = vperm.xlu0 %2696, %v2194
      %v2698 = vpop.permute.xlu0 %2697
      %2699 = vset.pattern.permute.xlu0 0
      %2700 = vperm.xlu0 %2699, %v2195
      %v2701 = vpop.permute.xlu0 %2700
      %2702 = vset.pattern.permute.xlu0 0
      %2703 = vperm.xlu0 %2702, %v2196
      %v2704 = vpop.permute.xlu0 %2703
      %2705 = vset.pattern.permute.xlu0 0
      %2706 = vperm.xlu0 %2705, %v2197
      %v2707 = vpop.permute.xlu0 %2706
      %2708 = vset.pattern.permute.xlu0 0
      %2709 = vperm.xlu0 %2708, %v2198
      %v2710 = vpop.permute.xlu0 %2709
      %v2711 = vlaneseq
      %v2712 = vand.u32 %v2711, 127
      %v2713 = vperm.slane %v2329, %v2712
      %v2714 = vadd.s32 %v2712, 4294967288
      %v2715 = vperm.slane %v2332, %v2714
      %vm2716 = vcmask 130112
      %v2717 = vsel %vm2716, %v2715, %v2713
      %v2718 = vadd.s32 %v2712, 4294967280
      %v2719 = vperm.slane %v2335, %v2718
      %vm2720 = vcmask 195712
      %v2721 = vsel %vm2720, %v2719, %v2717
      %v2722 = vadd.s32 %v2712, 4294967272
      %v2723 = vperm.slane %v2338, %v2722
      %vm2724 = vcmask 261312
      %v2725 = vsel %vm2724, %v2723, %v2721
      %v2726 = vadd.s32 %v2712, 4294967264
      %v2727 = vperm.slane %v2341, %v2726
      %vm2728 = vcmask 326912
      %v2729 = vsel %vm2728, %v2727, %v2725
      %v2730 = vadd.s32 %v2712, 4294967256
      %v2731 = vperm.slane %v2344, %v2730
      %vm2732 = vcmask 392512
      %v2733 = vsel %vm2732, %v2731, %v2729
      %v2734 = vadd.s32 %v2712, 4294967248
      %v2735 = vperm.slane %v2347, %v2734
      %vm2736 = vcmask 458112
      %v2737 = vsel %vm2736, %v2735, %v2733
      %v2738 = vadd.s32 %v2712, 4294967240
      %v2739 = vperm.slane %v2350, %v2738
      %vm2740 = vcmask 523712
      %v2741 = vsel %vm2740, %v2739, %v2737
      %v2742 = vadd.s32 %v2712, 4294967232
      %v2743 = vperm.slane %v2353, %v2742
      %vm2744 = vcmask 589312
      %v2745 = vsel %vm2744, %v2743, %v2741
      %v2746 = vadd.s32 %v2712, 4294967224
      %v2747 = vperm.slane %v2356, %v2746
      %vm2748 = vcmask 654912
      %v2749 = vsel %vm2748, %v2747, %v2745
      %v2750 = vadd.s32 %v2712, 4294967216
      %v2751 = vperm.slane %v2359, %v2750
      %vm2752 = vcmask 720512
      %v2753 = vsel %vm2752, %v2751, %v2749
      %v2754 = vadd.s32 %v2712, 4294967208
      %v2755 = vperm.slane %v2362, %v2754
      %vm2756 = vcmask 786112
      %v2757 = vsel %vm2756, %v2755, %v2753
      %v2758 = vadd.s32 %v2712, 4294967200
      %v2759 = vperm.slane %v2365, %v2758
      %vm2760 = vcmask 851712
      %v2761 = vsel %vm2760, %v2759, %v2757
      %v2762 = vadd.s32 %v2712, 4294967192
      %v2763 = vperm.slane %v2368, %v2762
      %vm2764 = vcmask 917312
      %v2765 = vsel %vm2764, %v2763, %v2761
      %v2766 = vadd.s32 %v2712, 4294967184
      %v2767 = vperm.slane %v2371, %v2766
      %vm2768 = vcmask 982912
      %v2769 = vsel %vm2768, %v2767, %v2765
      %v2770 = vadd.s32 %v2712, 4294967176
      %v2771 = vperm.slane %v2374, %v2770
      %vm2772 = vcmask 1048512
      %v2773 = vsel %vm2772, %v2771, %v2769
      %v2774 = vperm.slane %v2377, %v2712
      %v2775 = vperm.slane %v2380, %v2714
      %v2776 = vsel %vm2716, %v2775, %v2774
      %v2777 = vperm.slane %v2383, %v2718
      %v2778 = vsel %vm2720, %v2777, %v2776
      %v2779 = vperm.slane %v2386, %v2722
      %v2780 = vsel %vm2724, %v2779, %v2778
      %v2781 = vperm.slane %v2389, %v2726
      %v2782 = vsel %vm2728, %v2781, %v2780
      %v2783 = vperm.slane %v2392, %v2730
      %v2784 = vsel %vm2732, %v2783, %v2782
      %v2785 = vperm.slane %v2395, %v2734
      %v2786 = vsel %vm2736, %v2785, %v2784
      %v2787 = vperm.slane %v2398, %v2738
      %v2788 = vsel %vm2740, %v2787, %v2786
      %v2789 = vperm.slane %v2401, %v2742
      %v2790 = vsel %vm2744, %v2789, %v2788
      %v2791 = vperm.slane %v2404, %v2746
      %v2792 = vsel %vm2748, %v2791, %v2790
      %v2793 = vperm.slane %v2407, %v2750
      %v2794 = vsel %vm2752, %v2793, %v2792
      %v2795 = vperm.slane %v2410, %v2754
      %v2796 = vsel %vm2756, %v2795, %v2794
      %v2797 = vperm.slane %v2413, %v2758
      %v2798 = vsel %vm2760, %v2797, %v2796
      %v2799 = vperm.slane %v2416, %v2762
      %v2800 = vsel %vm2764, %v2799, %v2798
      %v2801 = vperm.slane %v2419, %v2766
      %v2802 = vsel %vm2768, %v2801, %v2800
      %v2803 = vperm.slane %v2422, %v2770
      %v2804 = vsel %vm2772, %v2803, %v2802
      %v2805 = vperm.slane %v2425, %v2712
      %v2806 = vperm.slane %v2428, %v2714
      %v2807 = vsel %vm2716, %v2806, %v2805
      %v2808 = vperm.slane %v2431, %v2718
      %v2809 = vsel %vm2720, %v2808, %v2807
      %v2810 = vperm.slane %v2434, %v2722
      %v2811 = vsel %vm2724, %v2810, %v2809
      %v2812 = vperm.slane %v2437, %v2726
      %v2813 = vsel %vm2728, %v2812, %v2811
      %v2814 = vperm.slane %v2440, %v2730
      %v2815 = vsel %vm2732, %v2814, %v2813
      %v2816 = vperm.slane %v2443, %v2734
      %v2817 = vsel %vm2736, %v2816, %v2815
      %v2818 = vperm.slane %v2446, %v2738
      %v2819 = vsel %vm2740, %v2818, %v2817
      %v2820 = vperm.slane %v2449, %v2742
      %v2821 = vsel %vm2744, %v2820, %v2819
      %v2822 = vperm.slane %v2452, %v2746
      %v2823 = vsel %vm2748, %v2822, %v2821
      %v2824 = vperm.slane %v2455, %v2750
      %v2825 = vsel %vm2752, %v2824, %v2823
      %v2826 = vperm.slane %v2458, %v2754
      %v2827 = vsel %vm2756, %v2826, %v2825
      %v2828 = vperm.slane %v2461, %v2758
      %v2829 = vsel %vm2760, %v2828, %v2827
      %v2830 = vperm.slane %v2464, %v2762
      %v2831 = vsel %vm2764, %v2830, %v2829
      %v2832 = vperm.slane %v2467, %v2766
      %v2833 = vsel %vm2768, %v2832, %v2831
      %v2834 = vperm.slane %v2470, %v2770
      %v2835 = vsel %vm2772, %v2834, %v2833
      %v2836 = vperm.slane %v2473, %v2712
      %v2837 = vperm.slane %v2476, %v2714
      %v2838 = vsel %vm2716, %v2837, %v2836
      %v2839 = vperm.slane %v2479, %v2718
      %v2840 = vsel %vm2720, %v2839, %v2838
      %v2841 = vperm.slane %v2482, %v2722
      %v2842 = vsel %vm2724, %v2841, %v2840
      %v2843 = vperm.slane %v2485, %v2726
      %v2844 = vsel %vm2728, %v2843, %v2842
      %v2845 = vperm.slane %v2488, %v2730
      %v2846 = vsel %vm2732, %v2845, %v2844
      %v2847 = vperm.slane %v2491, %v2734
      %v2848 = vsel %vm2736, %v2847, %v2846
      %v2849 = vperm.slane %v2494, %v2738
      %v2850 = vsel %vm2740, %v2849, %v2848
      %v2851 = vperm.slane %v2497, %v2742
      %v2852 = vsel %vm2744, %v2851, %v2850
      %v2853 = vperm.slane %v2500, %v2746
      %v2854 = vsel %vm2748, %v2853, %v2852
      %v2855 = vperm.slane %v2503, %v2750
      %v2856 = vsel %vm2752, %v2855, %v2854
      %v2857 = vperm.slane %v2506, %v2754
      %v2858 = vsel %vm2756, %v2857, %v2856
      %v2859 = vperm.slane %v2509, %v2758
      %v2860 = vsel %vm2760, %v2859, %v2858
      %v2861 = vperm.slane %v2512, %v2762
      %v2862 = vsel %vm2764, %v2861, %v2860
      %v2863 = vperm.slane %v2515, %v2766
      %v2864 = vsel %vm2768, %v2863, %v2862
      %v2865 = vperm.slane %v2518, %v2770
      %v2866 = vsel %vm2772, %v2865, %v2864
      %v2867 = vperm.slane %v2521, %v2712
      %v2868 = vperm.slane %v2524, %v2714
      %v2869 = vsel %vm2716, %v2868, %v2867
      %v2870 = vperm.slane %v2527, %v2718
      %v2871 = vsel %vm2720, %v2870, %v2869
      %v2872 = vperm.slane %v2530, %v2722
      %v2873 = vsel %vm2724, %v2872, %v2871
      %v2874 = vperm.slane %v2533, %v2726
      %v2875 = vsel %vm2728, %v2874, %v2873
      %v2876 = vperm.slane %v2536, %v2730
      %v2877 = vsel %vm2732, %v2876, %v2875
      %v2878 = vperm.slane %v2539, %v2734
      %v2879 = vsel %vm2736, %v2878, %v2877
      %v2880 = vperm.slane %v2542, %v2738
      %v2881 = vsel %vm2740, %v2880, %v2879
      %v2882 = vperm.slane %v2545, %v2742
      %v2883 = vsel %vm2744, %v2882, %v2881
      %v2884 = vperm.slane %v2548, %v2746
      %v2885 = vsel %vm2748, %v2884, %v2883
      %v2886 = vperm.slane %v2551, %v2750
      %v2887 = vsel %vm2752, %v2886, %v2885
      %v2888 = vperm.slane %v2554, %v2754
      %v2889 = vsel %vm2756, %v2888, %v2887
      %v2890 = vperm.slane %v2557, %v2758
      %v2891 = vsel %vm2760, %v2890, %v2889
      %v2892 = vperm.slane %v2560, %v2762
      %v2893 = vsel %vm2764, %v2892, %v2891
      %v2894 = vperm.slane %v2563, %v2766
      %v2895 = vsel %vm2768, %v2894, %v2893
      %v2896 = vperm.slane %v2566, %v2770
      %v2897 = vsel %vm2772, %v2896, %v2895
      %v2898 = vperm.slane %v2569, %v2712
      %v2899 = vperm.slane %v2572, %v2714
      %v2900 = vsel %vm2716, %v2899, %v2898
      %v2901 = vperm.slane %v2575, %v2718
      %v2902 = vsel %vm2720, %v2901, %v2900
      %v2903 = vperm.slane %v2578, %v2722
      %v2904 = vsel %vm2724, %v2903, %v2902
      %v2905 = vperm.slane %v2581, %v2726
      %v2906 = vsel %vm2728, %v2905, %v2904
      %v2907 = vperm.slane %v2584, %v2730
      %v2908 = vsel %vm2732, %v2907, %v2906
      %v2909 = vperm.slane %v2587, %v2734
      %v2910 = vsel %vm2736, %v2909, %v2908
      %v2911 = vperm.slane %v2590, %v2738
      %v2912 = vsel %vm2740, %v2911, %v2910
      %v2913 = vperm.slane %v2593, %v2742
      %v2914 = vsel %vm2744, %v2913, %v2912
      %v2915 = vperm.slane %v2596, %v2746
      %v2916 = vsel %vm2748, %v2915, %v2914
      %v2917 = vperm.slane %v2599, %v2750
      %v2918 = vsel %vm2752, %v2917, %v2916
      %v2919 = vperm.slane %v2602, %v2754
      %v2920 = vsel %vm2756, %v2919, %v2918
      %v2921 = vperm.slane %v2605, %v2758
      %v2922 = vsel %vm2760, %v2921, %v2920
      %v2923 = vperm.slane %v2608, %v2762
      %v2924 = vsel %vm2764, %v2923, %v2922
      %v2925 = vperm.slane %v2611, %v2766
      %v2926 = vsel %vm2768, %v2925, %v2924
      %v2927 = vperm.slane %v2614, %v2770
      %v2928 = vsel %vm2772, %v2927, %v2926
      %v2929 = vperm.slane %v2617, %v2712
      %v2930 = vperm.slane %v2620, %v2714
      %v2931 = vsel %vm2716, %v2930, %v2929
      %v2932 = vperm.slane %v2623, %v2718
      %v2933 = vsel %vm2720, %v2932, %v2931
      %v2934 = vperm.slane %v2626, %v2722
      %v2935 = vsel %vm2724, %v2934, %v2933
      %v2936 = vperm.slane %v2629, %v2726
      %v2937 = vsel %vm2728, %v2936, %v2935
      %v2938 = vperm.slane %v2632, %v2730
      %v2939 = vsel %vm2732, %v2938, %v2937
      %v2940 = vperm.slane %v2635, %v2734
      %v2941 = vsel %vm2736, %v2940, %v2939
      %v2942 = vperm.slane %v2638, %v2738
      %v2943 = vsel %vm2740, %v2942, %v2941
      %v2944 = vperm.slane %v2641, %v2742
      %v2945 = vsel %vm2744, %v2944, %v2943
      %v2946 = vperm.slane %v2644, %v2746
      %v2947 = vsel %vm2748, %v2946, %v2945
      %v2948 = vperm.slane %v2647, %v2750
      %v2949 = vsel %vm2752, %v2948, %v2947
      %v2950 = vperm.slane %v2650, %v2754
      %v2951 = vsel %vm2756, %v2950, %v2949
      %v2952 = vperm.slane %v2653, %v2758
      %v2953 = vsel %vm2760, %v2952, %v2951
      %v2954 = vperm.slane %v2656, %v2762
      %v2955 = vsel %vm2764, %v2954, %v2953
      %v2956 = vperm.slane %v2659, %v2766
      %v2957 = vsel %vm2768, %v2956, %v2955
      %v2958 = vperm.slane %v2662, %v2770
      %v2959 = vsel %vm2772, %v2958, %v2957
      %v2960 = vperm.slane %v2665, %v2712
      %v2961 = vperm.slane %v2668, %v2714
      %v2962 = vsel %vm2716, %v2961, %v2960
      %v2963 = vperm.slane %v2671, %v2718
      %v2964 = vsel %vm2720, %v2963, %v2962
      %v2965 = vperm.slane %v2674, %v2722
      %v2966 = vsel %vm2724, %v2965, %v2964
      %v2967 = vperm.slane %v2677, %v2726
      %v2968 = vsel %vm2728, %v2967, %v2966
      %v2969 = vperm.slane %v2680, %v2730
      %v2970 = vsel %vm2732, %v2969, %v2968
      %v2971 = vperm.slane %v2683, %v2734
      %v2972 = vsel %vm2736, %v2971, %v2970
      %v2973 = vperm.slane %v2686, %v2738
      %v2974 = vsel %vm2740, %v2973, %v2972
      %v2975 = vperm.slane %v2689, %v2742
      %v2976 = vsel %vm2744, %v2975, %v2974
      %v2977 = vperm.slane %v2692, %v2746
      %v2978 = vsel %vm2748, %v2977, %v2976
      %v2979 = vperm.slane %v2695, %v2750
      %v2980 = vsel %vm2752, %v2979, %v2978
      %v2981 = vperm.slane %v2698, %v2754
      %v2982 = vsel %vm2756, %v2981, %v2980
      %v2983 = vperm.slane %v2701, %v2758
      %v2984 = vsel %vm2760, %v2983, %v2982
      %v2985 = vperm.slane %v2704, %v2762
      %v2986 = vsel %vm2764, %v2985, %v2984
      %v2987 = vperm.slane %v2707, %v2766
      %v2988 = vsel %vm2768, %v2987, %v2986
      %v2989 = vperm.slane %v2710, %v2770
      %v2990 = vsel %vm2772, %v2989, %v2988
      %vm2991 = vcmask 1041409
      %v2992 = vsel %vm2991, %v2804, %v2773
      %vm2993 = vcmask 1042434
      %v2994 = vsel %vm2993, %v2835, %v2992
      %vm2995 = vcmask 1043459
      %v2996 = vsel %vm2995, %v2866, %v2994
      %vm2997 = vcmask 1044484
      %v2998 = vsel %vm2997, %v2897, %v2996
      %vm2999 = vcmask 1045509
      %v3000 = vsel %vm2999, %v2928, %v2998
      %vm3001 = vcmask 1046534
      %v3002 = vsel %vm3001, %v2959, %v3000
      %vm3003 = vcmask 1047559
      %v3004 = vsel %vm3003, %v2990, %v3002
      %3006 = vmax.xlane.f32.xlu0 %v3004
      %v3007 = vpop.xlane.xlu0 %3006
      %v3009 = vperm.slane %v3007, 0
      %v3010 = vperm.slane %v3007, 1
      %v3011 = vperm.slane %v3007, 2
      %v3012 = vperm.slane %v3007, 3
      %v3013 = vperm.slane %v3007, 4
      %v3014 = vperm.slane %v3007, 5
      %v3015 = vperm.slane %v3007, 6
      %v3016 = vperm.slane %v3007, 7
      %v3025 = vsub.f32 %v2071, %v3009
      %v3026 = vsub.f32 %v2072, %v3009
      %v3027 = vsub.f32 %v2073, %v3009
      %v3028 = vsub.f32 %v2074, %v3009
      %v3029 = vsub.f32 %v2075, %v3009
      %v3030 = vsub.f32 %v2076, %v3009
      %v3031 = vsub.f32 %v2077, %v3009
      %v3032 = vsub.f32 %v2078, %v3009
      %v3033 = vsub.f32 %v2079, %v3009
      %v3034 = vsub.f32 %v2080, %v3009
      %v3035 = vsub.f32 %v2081, %v3009
      %v3036 = vsub.f32 %v2082, %v3009
      %v3037 = vsub.f32 %v2083, %v3009
      %v3038 = vsub.f32 %v2084, %v3009
      %v3039 = vsub.f32 %v2085, %v3009
      %v3040 = vsub.f32 %v2086, %v3009
      %v3041 = vsub.f32 %v2087, %v3010
      %v3042 = vsub.f32 %v2088, %v3010
      %v3043 = vsub.f32 %v2089, %v3010
      %v3044 = vsub.f32 %v2090, %v3010
      %v3045 = vsub.f32 %v2091, %v3010
      %v3046 = vsub.f32 %v2092, %v3010
      %v3047 = vsub.f32 %v2093, %v3010
      %v3048 = vsub.f32 %v2094, %v3010
      %v3049 = vsub.f32 %v2095, %v3010
      %v3050 = vsub.f32 %v2096, %v3010
      %v3051 = vsub.f32 %v2097, %v3010
      %v3052 = vsub.f32 %v2098, %v3010
      %v3053 = vsub.f32 %v2099, %v3010
      %v3054 = vsub.f32 %v2100, %v3010
      %v3055 = vsub.f32 %v2101, %v3010
      %v3056 = vsub.f32 %v2102, %v3010
      %v3057 = vsub.f32 %v2103, %v3011
      %v3058 = vsub.f32 %v2104, %v3011
      %v3059 = vsub.f32 %v2105, %v3011
      %v3060 = vsub.f32 %v2106, %v3011
      %v3061 = vsub.f32 %v2107, %v3011
      %v3062 = vsub.f32 %v2108, %v3011
      %v3063 = vsub.f32 %v2109, %v3011
      %v3064 = vsub.f32 %v2110, %v3011
      %v3065 = vsub.f32 %v2111, %v3011
      %v3066 = vsub.f32 %v2112, %v3011
      %v3067 = vsub.f32 %v2113, %v3011
      %v3068 = vsub.f32 %v2114, %v3011
      %v3069 = vsub.f32 %v2115, %v3011
      %v3070 = vsub.f32 %v2116, %v3011
      %v3071 = vsub.f32 %v2117, %v3011
      %v3072 = vsub.f32 %v2118, %v3011
      %v3073 = vsub.f32 %v2119, %v3012
      %v3074 = vsub.f32 %v2120, %v3012
      %v3075 = vsub.f32 %v2121, %v3012
      %v3076 = vsub.f32 %v2122, %v3012
      %v3077 = vsub.f32 %v2123, %v3012
      %v3078 = vsub.f32 %v2124, %v3012
      %v3079 = vsub.f32 %v2125, %v3012
      %v3080 = vsub.f32 %v2126, %v3012
      %v3081 = vsub.f32 %v2127, %v3012
      %v3082 = vsub.f32 %v2128, %v3012
      %v3083 = vsub.f32 %v2129, %v3012
      %v3084 = vsub.f32 %v2130, %v3012
      %v3085 = vsub.f32 %v2131, %v3012
      %v3086 = vsub.f32 %v2132, %v3012
      %v3087 = vsub.f32 %v2133, %v3012
      %v3088 = vsub.f32 %v2134, %v3012
      %v3089 = vsub.f32 %v2135, %v3013
      %v3090 = vsub.f32 %v2136, %v3013
      %v3091 = vsub.f32 %v2137, %v3013
      %v3092 = vsub.f32 %v2138, %v3013
      %v3093 = vsub.f32 %v2139, %v3013
      %v3094 = vsub.f32 %v2140, %v3013
      %v3095 = vsub.f32 %v2141, %v3013
      %v3096 = vsub.f32 %v2142, %v3013
      %v3097 = vsub.f32 %v2143, %v3013
      %v3098 = vsub.f32 %v2144, %v3013
      %v3099 = vsub.f32 %v2145, %v3013
      %v3100 = vsub.f32 %v2146, %v3013
      %v3101 = vsub.f32 %v2147, %v3013
      %v3102 = vsub.f32 %v2148, %v3013
      %v3103 = vsub.f32 %v2149, %v3013
      %v3104 = vsub.f32 %v2150, %v3013
      %v3105 = vsub.f32 %v2151, %v3014
      %v3106 = vsub.f32 %v2152, %v3014
      %v3107 = vsub.f32 %v2153, %v3014
      %v3108 = vsub.f32 %v2154, %v3014
      %v3109 = vsub.f32 %v2155, %v3014
      %v3110 = vsub.f32 %v2156, %v3014
      %v3111 = vsub.f32 %v2157, %v3014
      %v3112 = vsub.f32 %v2158, %v3014
      %v3113 = vsub.f32 %v2159, %v3014
      %v3114 = vsub.f32 %v2160, %v3014
      %v3115 = vsub.f32 %v2161, %v3014
      %v3116 = vsub.f32 %v2162, %v3014
      %v3117 = vsub.f32 %v2163, %v3014
      %v3118 = vsub.f32 %v2164, %v3014
      %v3119 = vsub.f32 %v2165, %v3014
      %v3120 = vsub.f32 %v2166, %v3014
      %v3121 = vsub.f32 %v2167, %v3015
      %v3122 = vsub.f32 %v2168, %v3015
      %v3123 = vsub.f32 %v2169, %v3015
      %v3124 = vsub.f32 %v2170, %v3015
      %v3125 = vsub.f32 %v2171, %v3015
      %v3126 = vsub.f32 %v2172, %v3015
      %v3127 = vsub.f32 %v2173, %v3015
      %v3128 = vsub.f32 %v2174, %v3015
      %v3129 = vsub.f32 %v2175, %v3015
      %v3130 = vsub.f32 %v2176, %v3015
      %v3131 = vsub.f32 %v2177, %v3015
      %v3132 = vsub.f32 %v2178, %v3015
      %v3133 = vsub.f32 %v2179, %v3015
      %v3134 = vsub.f32 %v2180, %v3015
      %v3135 = vsub.f32 %v2181, %v3015
      %v3136 = vsub.f32 %v2182, %v3015
      %v3137 = vsub.f32 %v2183, %v3016
      %v3138 = vsub.f32 %v2184, %v3016
      %v3139 = vsub.f32 %v2185, %v3016
      %v3140 = vsub.f32 %v2186, %v3016
      %v3141 = vsub.f32 %v2187, %v3016
      %v3142 = vsub.f32 %v2188, %v3016
      %v3143 = vsub.f32 %v2189, %v3016
      %v3144 = vsub.f32 %v2190, %v3016
      %v3145 = vsub.f32 %v2191, %v3016
      %v3146 = vsub.f32 %v2192, %v3016
      %v3147 = vsub.f32 %v2193, %v3016
      %v3148 = vsub.f32 %v2194, %v3016
      %v3149 = vsub.f32 %v2195, %v3016
      %v3150 = vsub.f32 %v2196, %v3016
      %v3151 = vsub.f32 %v2197, %v3016
      %v3152 = vsub.f32 %v2198, %v3016
      %v3153 = vmul.f32 %v3025, 1.442695
      %v3154 = vpow.pop %v3153
      %v3155 = vmul.f32 %v3026, 1.442695
      %v3156 = vpow.pop %v3155
      %v3157 = vmul.f32 %v3027, 1.442695
      %v3158 = vpow.pop %v3157
      %v3159 = vmul.f32 %v3028, 1.442695
      %v3160 = vpow.pop %v3159
      %v3161 = vmul.f32 %v3029, 1.442695
      %v3162 = vpow.pop %v3161
      %v3163 = vmul.f32 %v3030, 1.442695
      %v3164 = vpow.pop %v3163
      %v3165 = vmul.f32 %v3031, 1.442695
      %v3166 = vpow.pop %v3165
      %v3167 = vmul.f32 %v3032, 1.442695
      %v3168 = vpow.pop %v3167
      %v3169 = vmul.f32 %v3033, 1.442695
      %v3170 = vpow.pop %v3169
      %v3171 = vmul.f32 %v3034, 1.442695
      %v3172 = vpow.pop %v3171
      %v3173 = vmul.f32 %v3035, 1.442695
      %v3174 = vpow.pop %v3173
      %v3175 = vmul.f32 %v3036, 1.442695
      %v3176 = vpow.pop %v3175
      %v3177 = vmul.f32 %v3037, 1.442695
      %v3178 = vpow.pop %v3177
      %v3179 = vmul.f32 %v3038, 1.442695
      %v3180 = vpow.pop %v3179
      %v3181 = vmul.f32 %v3039, 1.442695
      %v3182 = vpow.pop %v3181
      %v3183 = vmul.f32 %v3040, 1.442695
      %v3184 = vpow.pop %v3183
      %v3185 = vmul.f32 %v3041, 1.442695
      %v3186 = vpow.pop %v3185
      %v3187 = vmul.f32 %v3042, 1.442695
      %v3188 = vpow.pop %v3187
      %v3189 = vmul.f32 %v3043, 1.442695
      %v3190 = vpow.pop %v3189
      %v3191 = vmul.f32 %v3044, 1.442695
      %v3192 = vpow.pop %v3191
      %v3193 = vmul.f32 %v3045, 1.442695
      %v3194 = vpow.pop %v3193
      %v3195 = vmul.f32 %v3046, 1.442695
      %v3196 = vpow.pop %v3195
      %v3197 = vmul.f32 %v3047, 1.442695
      %v3198 = vpow.pop %v3197
      %v3199 = vmul.f32 %v3048, 1.442695
      %v3200 = vpow.pop %v3199
      %v3201 = vmul.f32 %v3049, 1.442695
      %v3202 = vpow.pop %v3201
      %v3203 = vmul.f32 %v3050, 1.442695
      %v3204 = vpow.pop %v3203
      %v3205 = vmul.f32 %v3051, 1.442695
      %v3206 = vpow.pop %v3205
      %v3207 = vmul.f32 %v3052, 1.442695
      %v3208 = vpow.pop %v3207
      %v3209 = vmul.f32 %v3053, 1.442695
      %v3210 = vpow.pop %v3209
      %v3211 = vmul.f32 %v3054, 1.442695
      %v3212 = vpow.pop %v3211
      %v3213 = vmul.f32 %v3055, 1.442695
      %v3214 = vpow.pop %v3213
      %v3215 = vmul.f32 %v3056, 1.442695
      %v3216 = vpow.pop %v3215
      %v3217 = vmul.f32 %v3057, 1.442695
      %v3218 = vpow.pop %v3217
      %v3219 = vmul.f32 %v3058, 1.442695
      %v3220 = vpow.pop %v3219
      %v3221 = vmul.f32 %v3059, 1.442695
      %v3222 = vpow.pop %v3221
      %v3223 = vmul.f32 %v3060, 1.442695
      %v3224 = vpow.pop %v3223
      %v3225 = vmul.f32 %v3061, 1.442695
      %v3226 = vpow.pop %v3225
      %v3227 = vmul.f32 %v3062, 1.442695
      %v3228 = vpow.pop %v3227
      %v3229 = vmul.f32 %v3063, 1.442695
      %v3230 = vpow.pop %v3229
      %v3231 = vmul.f32 %v3064, 1.442695
      %v3232 = vpow.pop %v3231
      %v3233 = vmul.f32 %v3065, 1.442695
      %v3234 = vpow.pop %v3233
      %v3235 = vmul.f32 %v3066, 1.442695
      %v3236 = vpow.pop %v3235
      %v3237 = vmul.f32 %v3067, 1.442695
      %v3238 = vpow.pop %v3237
      %v3239 = vmul.f32 %v3068, 1.442695
      %v3240 = vpow.pop %v3239
      %v3241 = vmul.f32 %v3069, 1.442695
      %v3242 = vpow.pop %v3241
      %v3243 = vmul.f32 %v3070, 1.442695
      %v3244 = vpow.pop %v3243
      %v3245 = vmul.f32 %v3071, 1.442695
      %v3246 = vpow.pop %v3245
      %v3247 = vmul.f32 %v3072, 1.442695
      %v3248 = vpow.pop %v3247
      %v3249 = vmul.f32 %v3073, 1.442695
      %v3250 = vpow.pop %v3249
      %v3251 = vmul.f32 %v3074, 1.442695
      %v3252 = vpow.pop %v3251
      %v3253 = vmul.f32 %v3075, 1.442695
      %v3254 = vpow.pop %v3253
      %v3255 = vmul.f32 %v3076, 1.442695
      %v3256 = vpow.pop %v3255
      %v3257 = vmul.f32 %v3077, 1.442695
      %v3258 = vpow.pop %v3257
      %v3259 = vmul.f32 %v3078, 1.442695
      %v3260 = vpow.pop %v3259
      %v3261 = vmul.f32 %v3079, 1.442695
      %v3262 = vpow.pop %v3261
      %v3263 = vmul.f32 %v3080, 1.442695
      %v3264 = vpow.pop %v3263
      %v3265 = vmul.f32 %v3081, 1.442695
      %v3266 = vpow.pop %v3265
      %v3267 = vmul.f32 %v3082, 1.442695
      %v3268 = vpow.pop %v3267
      %v3269 = vmul.f32 %v3083, 1.442695
      %v3270 = vpow.pop %v3269
      %v3271 = vmul.f32 %v3084, 1.442695
      %v3272 = vpow.pop %v3271
      %v3273 = vmul.f32 %v3085, 1.442695
      %v3274 = vpow.pop %v3273
      %v3275 = vmul.f32 %v3086, 1.442695
      %v3276 = vpow.pop %v3275
      %v3277 = vmul.f32 %v3087, 1.442695
      %v3278 = vpow.pop %v3277
      %v3279 = vmul.f32 %v3088, 1.442695
      %v3280 = vpow.pop %v3279
      %v3281 = vmul.f32 %v3089, 1.442695
      %v3282 = vpow.pop %v3281
      %v3283 = vmul.f32 %v3090, 1.442695
      %v3284 = vpow.pop %v3283
      %v3285 = vmul.f32 %v3091, 1.442695
      %v3286 = vpow.pop %v3285
      %v3287 = vmul.f32 %v3092, 1.442695
      %v3288 = vpow.pop %v3287
      %v3289 = vmul.f32 %v3093, 1.442695
      %v3290 = vpow.pop %v3289
      %v3291 = vmul.f32 %v3094, 1.442695
      %v3292 = vpow.pop %v3291
      %v3293 = vmul.f32 %v3095, 1.442695
      %v3294 = vpow.pop %v3293
      %v3295 = vmul.f32 %v3096, 1.442695
      %v3296 = vpow.pop %v3295
      %v3297 = vmul.f32 %v3097, 1.442695
      %v3298 = vpow.pop %v3297
      %v3299 = vmul.f32 %v3098, 1.442695
      %v3300 = vpow.pop %v3299
      %v3301 = vmul.f32 %v3099, 1.442695
      %v3302 = vpow.pop %v3301
      %v3303 = vmul.f32 %v3100, 1.442695
      %v3304 = vpow.pop %v3303
      %v3305 = vmul.f32 %v3101, 1.442695
      %v3306 = vpow.pop %v3305
      %v3307 = vmul.f32 %v3102, 1.442695
      %v3308 = vpow.pop %v3307
      %v3309 = vmul.f32 %v3103, 1.442695
      %v3310 = vpow.pop %v3309
      %v3311 = vmul.f32 %v3104, 1.442695
      %v3312 = vpow.pop %v3311
      %v3313 = vmul.f32 %v3105, 1.442695
      %v3314 = vpow.pop %v3313
      %v3315 = vmul.f32 %v3106, 1.442695
      %v3316 = vpow.pop %v3315
      %v3317 = vmul.f32 %v3107, 1.442695
      %v3318 = vpow.pop %v3317
      %v3319 = vmul.f32 %v3108, 1.442695
      %v3320 = vpow.pop %v3319
      %v3321 = vmul.f32 %v3109, 1.442695
      %v3322 = vpow.pop %v3321
      %v3323 = vmul.f32 %v3110, 1.442695
      %v3324 = vpow.pop %v3323
      %v3325 = vmul.f32 %v3111, 1.442695
      %v3326 = vpow.pop %v3325
      %v3327 = vmul.f32 %v3112, 1.442695
      %v3328 = vpow.pop %v3327
      %v3329 = vmul.f32 %v3113, 1.442695
      %v3330 = vpow.pop %v3329
      %v3331 = vmul.f32 %v3114, 1.442695
      %v3332 = vpow.pop %v3331
      %v3333 = vmul.f32 %v3115, 1.442695
      %v3334 = vpow.pop %v3333
      %v3335 = vmul.f32 %v3116, 1.442695
      %v3336 = vpow.pop %v3335
      %v3337 = vmul.f32 %v3117, 1.442695
      %v3338 = vpow.pop %v3337
      %v3339 = vmul.f32 %v3118, 1.442695
      %v3340 = vpow.pop %v3339
      %v3341 = vmul.f32 %v3119, 1.442695
      %v3342 = vpow.pop %v3341
      %v3343 = vmul.f32 %v3120, 1.442695
      %v3344 = vpow.pop %v3343
      %v3345 = vmul.f32 %v3121, 1.442695
      %v3346 = vpow.pop %v3345
      %v3347 = vmul.f32 %v3122, 1.442695
      %v3348 = vpow.pop %v3347
      %v3349 = vmul.f32 %v3123, 1.442695
      %v3350 = vpow.pop %v3349
      %v3351 = vmul.f32 %v3124, 1.442695
      %v3352 = vpow.pop %v3351
      %v3353 = vmul.f32 %v3125, 1.442695
      %v3354 = vpow.pop %v3353
      %v3355 = vmul.f32 %v3126, 1.442695
      %v3356 = vpow.pop %v3355
      %v3357 = vmul.f32 %v3127, 1.442695
      %v3358 = vpow.pop %v3357
      %v3359 = vmul.f32 %v3128, 1.442695
      %v3360 = vpow.pop %v3359
      %v3361 = vmul.f32 %v3129, 1.442695
      %v3362 = vpow.pop %v3361
      %v3363 = vmul.f32 %v3130, 1.442695
      %v3364 = vpow.pop %v3363
      %v3365 = vmul.f32 %v3131, 1.442695
      %v3366 = vpow.pop %v3365
      %v3367 = vmul.f32 %v3132, 1.442695
      %v3368 = vpow.pop %v3367
      %v3369 = vmul.f32 %v3133, 1.442695
      %v3370 = vpow.pop %v3369
      %v3371 = vmul.f32 %v3134, 1.442695
      %v3372 = vpow.pop %v3371
      %v3373 = vmul.f32 %v3135, 1.442695
      %v3374 = vpow.pop %v3373
      %v3375 = vmul.f32 %v3136, 1.442695
      %v3376 = vpow.pop %v3375
      %v3377 = vmul.f32 %v3137, 1.442695
      %v3378 = vpow.pop %v3377
      %v3379 = vmul.f32 %v3138, 1.442695
      %v3380 = vpow.pop %v3379
      %v3381 = vmul.f32 %v3139, 1.442695
      %v3382 = vpow.pop %v3381
      %v3383 = vmul.f32 %v3140, 1.442695
      %v3384 = vpow.pop %v3383
      %v3385 = vmul.f32 %v3141, 1.442695
      %v3386 = vpow.pop %v3385
      %v3387 = vmul.f32 %v3142, 1.442695
      %v3388 = vpow.pop %v3387
      %v3389 = vmul.f32 %v3143, 1.442695
      %v3390 = vpow.pop %v3389
      %v3391 = vmul.f32 %v3144, 1.442695
      %v3392 = vpow.pop %v3391
      %v3393 = vmul.f32 %v3145, 1.442695
      %v3394 = vpow.pop %v3393
      %v3395 = vmul.f32 %v3146, 1.442695
      %v3396 = vpow.pop %v3395
      %v3397 = vmul.f32 %v3147, 1.442695
      %v3398 = vpow.pop %v3397
      %v3399 = vmul.f32 %v3148, 1.442695
      %v3400 = vpow.pop %v3399
      %v3401 = vmul.f32 %v3149, 1.442695
      %v3402 = vpow.pop %v3401
      %v3403 = vmul.f32 %v3150, 1.442695
      %v3404 = vpow.pop %v3403
      %v3405 = vmul.f32 %v3151, 1.442695
      %v3406 = vpow.pop %v3405
      %v3407 = vmul.f32 %v3152, 1.442695
      %v3408 = vpow.pop %v3407
      %3537 = vset.pattern.permute.xlu0 0
      %3538 = vperm.xlu0 %3537, %v3154
      %v3539 = vpop.permute.xlu0 %3538
      %3540 = vset.pattern.permute.xlu0 0
      %3541 = vperm.xlu0 %3540, %v3156
      %v3542 = vpop.permute.xlu0 %3541
      %3543 = vset.pattern.permute.xlu0 0
      %3544 = vperm.xlu0 %3543, %v3158
      %v3545 = vpop.permute.xlu0 %3544
      %3546 = vset.pattern.permute.xlu0 0
      %3547 = vperm.xlu0 %3546, %v3160
      %v3548 = vpop.permute.xlu0 %3547
      %3549 = vset.pattern.permute.xlu0 0
      %3550 = vperm.xlu0 %3549, %v3162
      %v3551 = vpop.permute.xlu0 %3550
      %3552 = vset.pattern.permute.xlu0 0
      %3553 = vperm.xlu0 %3552, %v3164
      %v3554 = vpop.permute.xlu0 %3553
      %3555 = vset.pattern.permute.xlu0 0
      %3556 = vperm.xlu0 %3555, %v3166
      %v3557 = vpop.permute.xlu0 %3556
      %3558 = vset.pattern.permute.xlu0 0
      %3559 = vperm.xlu0 %3558, %v3168
      %v3560 = vpop.permute.xlu0 %3559
      %3561 = vset.pattern.permute.xlu0 0
      %3562 = vperm.xlu0 %3561, %v3170
      %v3563 = vpop.permute.xlu0 %3562
      %3564 = vset.pattern.permute.xlu0 0
      %3565 = vperm.xlu0 %3564, %v3172
      %v3566 = vpop.permute.xlu0 %3565
      %3567 = vset.pattern.permute.xlu0 0
      %3568 = vperm.xlu0 %3567, %v3174
      %v3569 = vpop.permute.xlu0 %3568
      %3570 = vset.pattern.permute.xlu0 0
      %3571 = vperm.xlu0 %3570, %v3176
      %v3572 = vpop.permute.xlu0 %3571
      %3573 = vset.pattern.permute.xlu0 0
      %3574 = vperm.xlu0 %3573, %v3178
      %v3575 = vpop.permute.xlu0 %3574
      %3576 = vset.pattern.permute.xlu0 0
      %3577 = vperm.xlu0 %3576, %v3180
      %v3578 = vpop.permute.xlu0 %3577
      %3579 = vset.pattern.permute.xlu0 0
      %3580 = vperm.xlu0 %3579, %v3182
      %v3581 = vpop.permute.xlu0 %3580
      %3582 = vset.pattern.permute.xlu0 0
      %3583 = vperm.xlu0 %3582, %v3184
      %v3584 = vpop.permute.xlu0 %3583
      %3585 = vset.pattern.permute.xlu0 0
      %3586 = vperm.xlu0 %3585, %v3186
      %v3587 = vpop.permute.xlu0 %3586
      %3588 = vset.pattern.permute.xlu0 0
      %3589 = vperm.xlu0 %3588, %v3188
      %v3590 = vpop.permute.xlu0 %3589
      %3591 = vset.pattern.permute.xlu0 0
      %3592 = vperm.xlu0 %3591, %v3190
      %v3593 = vpop.permute.xlu0 %3592
      %3594 = vset.pattern.permute.xlu0 0
      %3595 = vperm.xlu0 %3594, %v3192
      %v3596 = vpop.permute.xlu0 %3595
      %3597 = vset.pattern.permute.xlu0 0
      %3598 = vperm.xlu0 %3597, %v3194
      %v3599 = vpop.permute.xlu0 %3598
      %3600 = vset.pattern.permute.xlu0 0
      %3601 = vperm.xlu0 %3600, %v3196
      %v3602 = vpop.permute.xlu0 %3601
      %3603 = vset.pattern.permute.xlu0 0
      %3604 = vperm.xlu0 %3603, %v3198
      %v3605 = vpop.permute.xlu0 %3604
      %3606 = vset.pattern.permute.xlu0 0
      %3607 = vperm.xlu0 %3606, %v3200
      %v3608 = vpop.permute.xlu0 %3607
      %3609 = vset.pattern.permute.xlu0 0
      %3610 = vperm.xlu0 %3609, %v3202
      %v3611 = vpop.permute.xlu0 %3610
      %3612 = vset.pattern.permute.xlu0 0
      %3613 = vperm.xlu0 %3612, %v3204
      %v3614 = vpop.permute.xlu0 %3613
      %3615 = vset.pattern.permute.xlu0 0
      %3616 = vperm.xlu0 %3615, %v3206
      %v3617 = vpop.permute.xlu0 %3616
      %3618 = vset.pattern.permute.xlu0 0
      %3619 = vperm.xlu0 %3618, %v3208
      %v3620 = vpop.permute.xlu0 %3619
      %3621 = vset.pattern.permute.xlu0 0
      %3622 = vperm.xlu0 %3621, %v3210
      %v3623 = vpop.permute.xlu0 %3622
      %3624 = vset.pattern.permute.xlu0 0
      %3625 = vperm.xlu0 %3624, %v3212
      %v3626 = vpop.permute.xlu0 %3625
      %3627 = vset.pattern.permute.xlu0 0
      %3628 = vperm.xlu0 %3627, %v3214
      %v3629 = vpop.permute.xlu0 %3628
      %3630 = vset.pattern.permute.xlu0 0
      %3631 = vperm.xlu0 %3630, %v3216
      %v3632 = vpop.permute.xlu0 %3631
      %3633 = vset.pattern.permute.xlu0 0
      %3634 = vperm.xlu0 %3633, %v3218
      %v3635 = vpop.permute.xlu0 %3634
      %3636 = vset.pattern.permute.xlu0 0
      %3637 = vperm.xlu0 %3636, %v3220
      %v3638 = vpop.permute.xlu0 %3637
      %3639 = vset.pattern.permute.xlu0 0
      %3640 = vperm.xlu0 %3639, %v3222
      %v3641 = vpop.permute.xlu0 %3640
      %3642 = vset.pattern.permute.xlu0 0
      %3643 = vperm.xlu0 %3642, %v3224
      %v3644 = vpop.permute.xlu0 %3643
      %3645 = vset.pattern.permute.xlu0 0
      %3646 = vperm.xlu0 %3645, %v3226
      %v3647 = vpop.permute.xlu0 %3646
      %3648 = vset.pattern.permute.xlu0 0
      %3649 = vperm.xlu0 %3648, %v3228
      %v3650 = vpop.permute.xlu0 %3649
      %3651 = vset.pattern.permute.xlu0 0
      %3652 = vperm.xlu0 %3651, %v3230
      %v3653 = vpop.permute.xlu0 %3652
      %3654 = vset.pattern.permute.xlu0 0
      %3655 = vperm.xlu0 %3654, %v3232
      %v3656 = vpop.permute.xlu0 %3655
      %3657 = vset.pattern.permute.xlu0 0
      %3658 = vperm.xlu0 %3657, %v3234
      %v3659 = vpop.permute.xlu0 %3658
      %3660 = vset.pattern.permute.xlu0 0
      %3661 = vperm.xlu0 %3660, %v3236
      %v3662 = vpop.permute.xlu0 %3661
      %3663 = vset.pattern.permute.xlu0 0
      %3664 = vperm.xlu0 %3663, %v3238
      %v3665 = vpop.permute.xlu0 %3664
      %3666 = vset.pattern.permute.xlu0 0
      %3667 = vperm.xlu0 %3666, %v3240
      %v3668 = vpop.permute.xlu0 %3667
      %3669 = vset.pattern.permute.xlu0 0
      %3670 = vperm.xlu0 %3669, %v3242
      %v3671 = vpop.permute.xlu0 %3670
      %3672 = vset.pattern.permute.xlu0 0
      %3673 = vperm.xlu0 %3672, %v3244
      %v3674 = vpop.permute.xlu0 %3673
      %3675 = vset.pattern.permute.xlu0 0
      %3676 = vperm.xlu0 %3675, %v3246
      %v3677 = vpop.permute.xlu0 %3676
      %3678 = vset.pattern.permute.xlu0 0
      %3679 = vperm.xlu0 %3678, %v3248
      %v3680 = vpop.permute.xlu0 %3679
      %3681 = vset.pattern.permute.xlu0 0
      %3682 = vperm.xlu0 %3681, %v3250
      %v3683 = vpop.permute.xlu0 %3682
      %3684 = vset.pattern.permute.xlu0 0
      %3685 = vperm.xlu0 %3684, %v3252
      %v3686 = vpop.permute.xlu0 %3685
      %3687 = vset.pattern.permute.xlu0 0
      %3688 = vperm.xlu0 %3687, %v3254
      %v3689 = vpop.permute.xlu0 %3688
      %3690 = vset.pattern.permute.xlu0 0
      %3691 = vperm.xlu0 %3690, %v3256
      %v3692 = vpop.permute.xlu0 %3691
      %3693 = vset.pattern.permute.xlu0 0
      %3694 = vperm.xlu0 %3693, %v3258
      %v3695 = vpop.permute.xlu0 %3694
      %3696 = vset.pattern.permute.xlu0 0
      %3697 = vperm.xlu0 %3696, %v3260
      %v3698 = vpop.permute.xlu0 %3697
      %3699 = vset.pattern.permute.xlu0 0
      %3700 = vperm.xlu0 %3699, %v3262
      %v3701 = vpop.permute.xlu0 %3700
      %3702 = vset.pattern.permute.xlu0 0
      %3703 = vperm.xlu0 %3702, %v3264
      %v3704 = vpop.permute.xlu0 %3703
      %3705 = vset.pattern.permute.xlu0 0
      %3706 = vperm.xlu0 %3705, %v3266
      %v3707 = vpop.permute.xlu0 %3706
      %3708 = vset.pattern.permute.xlu0 0
      %3709 = vperm.xlu0 %3708, %v3268
      %v3710 = vpop.permute.xlu0 %3709
      %3711 = vset.pattern.permute.xlu0 0
      %3712 = vperm.xlu0 %3711, %v3270
      %v3713 = vpop.permute.xlu0 %3712
      %3714 = vset.pattern.permute.xlu0 0
      %3715 = vperm.xlu0 %3714, %v3272
      %v3716 = vpop.permute.xlu0 %3715
      %3717 = vset.pattern.permute.xlu0 0
      %3718 = vperm.xlu0 %3717, %v3274
      %v3719 = vpop.permute.xlu0 %3718
      %3720 = vset.pattern.permute.xlu0 0
      %3721 = vperm.xlu0 %3720, %v3276
      %v3722 = vpop.permute.xlu0 %3721
      %3723 = vset.pattern.permute.xlu0 0
      %3724 = vperm.xlu0 %3723, %v3278
      %v3725 = vpop.permute.xlu0 %3724
      %3726 = vset.pattern.permute.xlu0 0
      %3727 = vperm.xlu0 %3726, %v3280
      %v3728 = vpop.permute.xlu0 %3727
      %3729 = vset.pattern.permute.xlu0 0
      %3730 = vperm.xlu0 %3729, %v3282
      %v3731 = vpop.permute.xlu0 %3730
      %3732 = vset.pattern.permute.xlu0 0
      %3733 = vperm.xlu0 %3732, %v3284
      %v3734 = vpop.permute.xlu0 %3733
      %3735 = vset.pattern.permute.xlu0 0
      %3736 = vperm.xlu0 %3735, %v3286
      %v3737 = vpop.permute.xlu0 %3736
      %3738 = vset.pattern.permute.xlu0 0
      %3739 = vperm.xlu0 %3738, %v3288
      %v3740 = vpop.permute.xlu0 %3739
      %3741 = vset.pattern.permute.xlu0 0
      %3742 = vperm.xlu0 %3741, %v3290
      %v3743 = vpop.permute.xlu0 %3742
      %3744 = vset.pattern.permute.xlu0 0
      %3745 = vperm.xlu0 %3744, %v3292
      %v3746 = vpop.permute.xlu0 %3745
      %3747 = vset.pattern.permute.xlu0 0
      %3748 = vperm.xlu0 %3747, %v3294
      %v3749 = vpop.permute.xlu0 %3748
      %3750 = vset.pattern.permute.xlu0 0
      %3751 = vperm.xlu0 %3750, %v3296
      %v3752 = vpop.permute.xlu0 %3751
      %3753 = vset.pattern.permute.xlu0 0
      %3754 = vperm.xlu0 %3753, %v3298
      %v3755 = vpop.permute.xlu0 %3754
      %3756 = vset.pattern.permute.xlu0 0
      %3757 = vperm.xlu0 %3756, %v3300
      %v3758 = vpop.permute.xlu0 %3757
      %3759 = vset.pattern.permute.xlu0 0
      %3760 = vperm.xlu0 %3759, %v3302
      %v3761 = vpop.permute.xlu0 %3760
      %3762 = vset.pattern.permute.xlu0 0
      %3763 = vperm.xlu0 %3762, %v3304
      %v3764 = vpop.permute.xlu0 %3763
      %3765 = vset.pattern.permute.xlu0 0
      %3766 = vperm.xlu0 %3765, %v3306
      %v3767 = vpop.permute.xlu0 %3766
      %3768 = vset.pattern.permute.xlu0 0
      %3769 = vperm.xlu0 %3768, %v3308
      %v3770 = vpop.permute.xlu0 %3769
      %3771 = vset.pattern.permute.xlu0 0
      %3772 = vperm.xlu0 %3771, %v3310
      %v3773 = vpop.permute.xlu0 %3772
      %3774 = vset.pattern.permute.xlu0 0
      %3775 = vperm.xlu0 %3774, %v3312
      %v3776 = vpop.permute.xlu0 %3775
      %3777 = vset.pattern.permute.xlu0 0
      %3778 = vperm.xlu0 %3777, %v3314
      %v3779 = vpop.permute.xlu0 %3778
      %3780 = vset.pattern.permute.xlu0 0
      %3781 = vperm.xlu0 %3780, %v3316
      %v3782 = vpop.permute.xlu0 %3781
      %3783 = vset.pattern.permute.xlu0 0
      %3784 = vperm.xlu0 %3783, %v3318
      %v3785 = vpop.permute.xlu0 %3784
      %3786 = vset.pattern.permute.xlu0 0
      %3787 = vperm.xlu0 %3786, %v3320
      %v3788 = vpop.permute.xlu0 %3787
      %3789 = vset.pattern.permute.xlu0 0
      %3790 = vperm.xlu0 %3789, %v3322
      %v3791 = vpop.permute.xlu0 %3790
      %3792 = vset.pattern.permute.xlu0 0
      %3793 = vperm.xlu0 %3792, %v3324
      %v3794 = vpop.permute.xlu0 %3793
      %3795 = vset.pattern.permute.xlu0 0
      %3796 = vperm.xlu0 %3795, %v3326
      %v3797 = vpop.permute.xlu0 %3796
      %3798 = vset.pattern.permute.xlu0 0
      %3799 = vperm.xlu0 %3798, %v3328
      %v3800 = vpop.permute.xlu0 %3799
      %3801 = vset.pattern.permute.xlu0 0
      %3802 = vperm.xlu0 %3801, %v3330
      %v3803 = vpop.permute.xlu0 %3802
      %3804 = vset.pattern.permute.xlu0 0
      %3805 = vperm.xlu0 %3804, %v3332
      %v3806 = vpop.permute.xlu0 %3805
      %3807 = vset.pattern.permute.xlu0 0
      %3808 = vperm.xlu0 %3807, %v3334
      %v3809 = vpop.permute.xlu0 %3808
      %3810 = vset.pattern.permute.xlu0 0
      %3811 = vperm.xlu0 %3810, %v3336
      %v3812 = vpop.permute.xlu0 %3811
      %3813 = vset.pattern.permute.xlu0 0
      %3814 = vperm.xlu0 %3813, %v3338
      %v3815 = vpop.permute.xlu0 %3814
      %3816 = vset.pattern.permute.xlu0 0
      %3817 = vperm.xlu0 %3816, %v3340
      %v3818 = vpop.permute.xlu0 %3817
      %3819 = vset.pattern.permute.xlu0 0
      %3820 = vperm.xlu0 %3819, %v3342
      %v3821 = vpop.permute.xlu0 %3820
      %3822 = vset.pattern.permute.xlu0 0
      %3823 = vperm.xlu0 %3822, %v3344
      %v3824 = vpop.permute.xlu0 %3823
      %3825 = vset.pattern.permute.xlu0 0
      %3826 = vperm.xlu0 %3825, %v3346
      %v3827 = vpop.permute.xlu0 %3826
      %3828 = vset.pattern.permute.xlu0 0
      %3829 = vperm.xlu0 %3828, %v3348
      %v3830 = vpop.permute.xlu0 %3829
      %3831 = vset.pattern.permute.xlu0 0
      %3832 = vperm.xlu0 %3831, %v3350
      %v3833 = vpop.permute.xlu0 %3832
      %3834 = vset.pattern.permute.xlu0 0
      %3835 = vperm.xlu0 %3834, %v3352
      %v3836 = vpop.permute.xlu0 %3835
      %3837 = vset.pattern.permute.xlu0 0
      %3838 = vperm.xlu0 %3837, %v3354
      %v3839 = vpop.permute.xlu0 %3838
      %3840 = vset.pattern.permute.xlu0 0
      %3841 = vperm.xlu0 %3840, %v3356
      %v3842 = vpop.permute.xlu0 %3841
      %3843 = vset.pattern.permute.xlu0 0
      %3844 = vperm.xlu0 %3843, %v3358
      %v3845 = vpop.permute.xlu0 %3844
      %3846 = vset.pattern.permute.xlu0 0
      %3847 = vperm.xlu0 %3846, %v3360
      %v3848 = vpop.permute.xlu0 %3847
      %3849 = vset.pattern.permute.xlu0 0
      %3850 = vperm.xlu0 %3849, %v3362
      %v3851 = vpop.permute.xlu0 %3850
      %3852 = vset.pattern.permute.xlu0 0
      %3853 = vperm.xlu0 %3852, %v3364
      %v3854 = vpop.permute.xlu0 %3853
      %3855 = vset.pattern.permute.xlu0 0
      %3856 = vperm.xlu0 %3855, %v3366
      %v3857 = vpop.permute.xlu0 %3856
      %3858 = vset.pattern.permute.xlu0 0
      %3859 = vperm.xlu0 %3858, %v3368
      %v3860 = vpop.permute.xlu0 %3859
      %3861 = vset.pattern.permute.xlu0 0
      %3862 = vperm.xlu0 %3861, %v3370
      %v3863 = vpop.permute.xlu0 %3862
      %3864 = vset.pattern.permute.xlu0 0
      %3865 = vperm.xlu0 %3864, %v3372
      %v3866 = vpop.permute.xlu0 %3865
      %3867 = vset.pattern.permute.xlu0 0
      %3868 = vperm.xlu0 %3867, %v3374
      %v3869 = vpop.permute.xlu0 %3868
      %3870 = vset.pattern.permute.xlu0 0
      %3871 = vperm.xlu0 %3870, %v3376
      %v3872 = vpop.permute.xlu0 %3871
      %3873 = vset.pattern.permute.xlu0 0
      %3874 = vperm.xlu0 %3873, %v3378
      %v3875 = vpop.permute.xlu0 %3874
      %3876 = vset.pattern.permute.xlu0 0
      %3877 = vperm.xlu0 %3876, %v3380
      %v3878 = vpop.permute.xlu0 %3877
      %3879 = vset.pattern.permute.xlu0 0
      %3880 = vperm.xlu0 %3879, %v3382
      %v3881 = vpop.permute.xlu0 %3880
      %3882 = vset.pattern.permute.xlu0 0
      %3883 = vperm.xlu0 %3882, %v3384
      %v3884 = vpop.permute.xlu0 %3883
      %3885 = vset.pattern.permute.xlu0 0
      %3886 = vperm.xlu0 %3885, %v3386
      %v3887 = vpop.permute.xlu0 %3886
      %3888 = vset.pattern.permute.xlu0 0
      %3889 = vperm.xlu0 %3888, %v3388
      %v3890 = vpop.permute.xlu0 %3889
      %3891 = vset.pattern.permute.xlu0 0
      %3892 = vperm.xlu0 %3891, %v3390
      %v3893 = vpop.permute.xlu0 %3892
      %3894 = vset.pattern.permute.xlu0 0
      %3895 = vperm.xlu0 %3894, %v3392
      %v3896 = vpop.permute.xlu0 %3895
      %3897 = vset.pattern.permute.xlu0 0
      %3898 = vperm.xlu0 %3897, %v3394
      %v3899 = vpop.permute.xlu0 %3898
      %3900 = vset.pattern.permute.xlu0 0
      %3901 = vperm.xlu0 %3900, %v3396
      %v3902 = vpop.permute.xlu0 %3901
      %3903 = vset.pattern.permute.xlu0 0
      %3904 = vperm.xlu0 %3903, %v3398
      %v3905 = vpop.permute.xlu0 %3904
      %3906 = vset.pattern.permute.xlu0 0
      %3907 = vperm.xlu0 %3906, %v3400
      %v3908 = vpop.permute.xlu0 %3907
      %3909 = vset.pattern.permute.xlu0 0
      %3910 = vperm.xlu0 %3909, %v3402
      %v3911 = vpop.permute.xlu0 %3910
      %3912 = vset.pattern.permute.xlu0 0
      %3913 = vperm.xlu0 %3912, %v3404
      %v3914 = vpop.permute.xlu0 %3913
      %3915 = vset.pattern.permute.xlu0 0
      %3916 = vperm.xlu0 %3915, %v3406
      %v3917 = vpop.permute.xlu0 %3916
      %3918 = vset.pattern.permute.xlu0 0
      %3919 = vperm.xlu0 %3918, %v3408
      %v3920 = vpop.permute.xlu0 %3919
      %v3921 = vperm.slane %v3539, %v2712
      %v3922 = vperm.slane %v3542, %v2714
      %v3923 = vsel %vm2716, %v3922, %v3921
      %v3924 = vperm.slane %v3545, %v2718
      %v3925 = vsel %vm2720, %v3924, %v3923
      %v3926 = vperm.slane %v3548, %v2722
      %v3927 = vsel %vm2724, %v3926, %v3925
      %v3928 = vperm.slane %v3551, %v2726
      %v3929 = vsel %vm2728, %v3928, %v3927
      %v3930 = vperm.slane %v3554, %v2730
      %v3931 = vsel %vm2732, %v3930, %v3929
      %v3932 = vperm.slane %v3557, %v2734
      %v3933 = vsel %vm2736, %v3932, %v3931
      %v3934 = vperm.slane %v3560, %v2738
      %v3935 = vsel %vm2740, %v3934, %v3933
      %v3936 = vperm.slane %v3563, %v2742
      %v3937 = vsel %vm2744, %v3936, %v3935
      %v3938 = vperm.slane %v3566, %v2746
      %v3939 = vsel %vm2748, %v3938, %v3937
      %v3940 = vperm.slane %v3569, %v2750
      %v3941 = vsel %vm2752, %v3940, %v3939
      %v3942 = vperm.slane %v3572, %v2754
      %v3943 = vsel %vm2756, %v3942, %v3941
      %v3944 = vperm.slane %v3575, %v2758
      %v3945 = vsel %vm2760, %v3944, %v3943
      %v3946 = vperm.slane %v3578, %v2762
      %v3947 = vsel %vm2764, %v3946, %v3945
      %v3948 = vperm.slane %v3581, %v2766
      %v3949 = vsel %vm2768, %v3948, %v3947
      %v3950 = vperm.slane %v3584, %v2770
      %v3951 = vsel %vm2772, %v3950, %v3949
      %v3952 = vperm.slane %v3587, %v2712
      %v3953 = vperm.slane %v3590, %v2714
      %v3954 = vsel %vm2716, %v3953, %v3952
      %v3955 = vperm.slane %v3593, %v2718
      %v3956 = vsel %vm2720, %v3955, %v3954
      %v3957 = vperm.slane %v3596, %v2722
      %v3958 = vsel %vm2724, %v3957, %v3956
      %v3959 = vperm.slane %v3599, %v2726
      %v3960 = vsel %vm2728, %v3959, %v3958
      %v3961 = vperm.slane %v3602, %v2730
      %v3962 = vsel %vm2732, %v3961, %v3960
      %v3963 = vperm.slane %v3605, %v2734
      %v3964 = vsel %vm2736, %v3963, %v3962
      %v3965 = vperm.slane %v3608, %v2738
      %v3966 = vsel %vm2740, %v3965, %v3964
      %v3967 = vperm.slane %v3611, %v2742
      %v3968 = vsel %vm2744, %v3967, %v3966
      %v3969 = vperm.slane %v3614, %v2746
      %v3970 = vsel %vm2748, %v3969, %v3968
      %v3971 = vperm.slane %v3617, %v2750
      %v3972 = vsel %vm2752, %v3971, %v3970
      %v3973 = vperm.slane %v3620, %v2754
      %v3974 = vsel %vm2756, %v3973, %v3972
      %v3975 = vperm.slane %v3623, %v2758
      %v3976 = vsel %vm2760, %v3975, %v3974
      %v3977 = vperm.slane %v3626, %v2762
      %v3978 = vsel %vm2764, %v3977, %v3976
      %v3979 = vperm.slane %v3629, %v2766
      %v3980 = vsel %vm2768, %v3979, %v3978
      %v3981 = vperm.slane %v3632, %v2770
      %v3982 = vsel %vm2772, %v3981, %v3980
      %v3983 = vperm.slane %v3635, %v2712
      %v3984 = vperm.slane %v3638, %v2714
      %v3985 = vsel %vm2716, %v3984, %v3983
      %v3986 = vperm.slane %v3641, %v2718
      %v3987 = vsel %vm2720, %v3986, %v3985
      %v3988 = vperm.slane %v3644, %v2722
      %v3989 = vsel %vm2724, %v3988, %v3987
      %v3990 = vperm.slane %v3647, %v2726
      %v3991 = vsel %vm2728, %v3990, %v3989
      %v3992 = vperm.slane %v3650, %v2730
      %v3993 = vsel %vm2732, %v3992, %v3991
      %v3994 = vperm.slane %v3653, %v2734
      %v3995 = vsel %vm2736, %v3994, %v3993
      %v3996 = vperm.slane %v3656, %v2738
      %v3997 = vsel %vm2740, %v3996, %v3995
      %v3998 = vperm.slane %v3659, %v2742
      %v3999 = vsel %vm2744, %v3998, %v3997
      %v4000 = vperm.slane %v3662, %v2746
      %v4001 = vsel %vm2748, %v4000, %v3999
      %v4002 = vperm.slane %v3665, %v2750
      %v4003 = vsel %vm2752, %v4002, %v4001
      %v4004 = vperm.slane %v3668, %v2754
      %v4005 = vsel %vm2756, %v4004, %v4003
      %v4006 = vperm.slane %v3671, %v2758
      %v4007 = vsel %vm2760, %v4006, %v4005
      %v4008 = vperm.slane %v3674, %v2762
      %v4009 = vsel %vm2764, %v4008, %v4007
      %v4010 = vperm.slane %v3677, %v2766
      %v4011 = vsel %vm2768, %v4010, %v4009
      %v4012 = vperm.slane %v3680, %v2770
      %v4013 = vsel %vm2772, %v4012, %v4011
      %v4014 = vperm.slane %v3683, %v2712
      %v4015 = vperm.slane %v3686, %v2714
      %v4016 = vsel %vm2716, %v4015, %v4014
      %v4017 = vperm.slane %v3689, %v2718
      %v4018 = vsel %vm2720, %v4017, %v4016
      %v4019 = vperm.slane %v3692, %v2722
      %v4020 = vsel %vm2724, %v4019, %v4018
      %v4021 = vperm.slane %v3695, %v2726
      %v4022 = vsel %vm2728, %v4021, %v4020
      %v4023 = vperm.slane %v3698, %v2730
      %v4024 = vsel %vm2732, %v4023, %v4022
      %v4025 = vperm.slane %v3701, %v2734
      %v4026 = vsel %vm2736, %v4025, %v4024
      %v4027 = vperm.slane %v3704, %v2738
      %v4028 = vsel %vm2740, %v4027, %v4026
      %v4029 = vperm.slane %v3707, %v2742
      %v4030 = vsel %vm2744, %v4029, %v4028
      %v4031 = vperm.slane %v3710, %v2746
      %v4032 = vsel %vm2748, %v4031, %v4030
      %v4033 = vperm.slane %v3713, %v2750
      %v4034 = vsel %vm2752, %v4033, %v4032
      %v4035 = vperm.slane %v3716, %v2754
      %v4036 = vsel %vm2756, %v4035, %v4034
      %v4037 = vperm.slane %v3719, %v2758
      %v4038 = vsel %vm2760, %v4037, %v4036
      %v4039 = vperm.slane %v3722, %v2762
      %v4040 = vsel %vm2764, %v4039, %v4038
      %v4041 = vperm.slane %v3725, %v2766
      %v4042 = vsel %vm2768, %v4041, %v4040
      %v4043 = vperm.slane %v3728, %v2770
      %v4044 = vsel %vm2772, %v4043, %v4042
      %v4045 = vperm.slane %v3731, %v2712
      %v4046 = vperm.slane %v3734, %v2714
      %v4047 = vsel %vm2716, %v4046, %v4045
      %v4048 = vperm.slane %v3737, %v2718
      %v4049 = vsel %vm2720, %v4048, %v4047
      %v4050 = vperm.slane %v3740, %v2722
      %v4051 = vsel %vm2724, %v4050, %v4049
      %v4052 = vperm.slane %v3743, %v2726
      %v4053 = vsel %vm2728, %v4052, %v4051
      %v4054 = vperm.slane %v3746, %v2730
      %v4055 = vsel %vm2732, %v4054, %v4053
      %v4056 = vperm.slane %v3749, %v2734
      %v4057 = vsel %vm2736, %v4056, %v4055
      %v4058 = vperm.slane %v3752, %v2738
      %v4059 = vsel %vm2740, %v4058, %v4057
      %v4060 = vperm.slane %v3755, %v2742
      %v4061 = vsel %vm2744, %v4060, %v4059
      %v4062 = vperm.slane %v3758, %v2746
      %v4063 = vsel %vm2748, %v4062, %v4061
      %v4064 = vperm.slane %v3761, %v2750
      %v4065 = vsel %vm2752, %v4064, %v4063
      %v4066 = vperm.slane %v3764, %v2754
      %v4067 = vsel %vm2756, %v4066, %v4065
      %v4068 = vperm.slane %v3767, %v2758
      %v4069 = vsel %vm2760, %v4068, %v4067
      %v4070 = vperm.slane %v3770, %v2762
      %v4071 = vsel %vm2764, %v4070, %v4069
      %v4072 = vperm.slane %v3773, %v2766
      %v4073 = vsel %vm2768, %v4072, %v4071
      %v4074 = vperm.slane %v3776, %v2770
      %v4075 = vsel %vm2772, %v4074, %v4073
      %v4076 = vperm.slane %v3779, %v2712
      %v4077 = vperm.slane %v3782, %v2714
      %v4078 = vsel %vm2716, %v4077, %v4076
      %v4079 = vperm.slane %v3785, %v2718
      %v4080 = vsel %vm2720, %v4079, %v4078
      %v4081 = vperm.slane %v3788, %v2722
      %v4082 = vsel %vm2724, %v4081, %v4080
      %v4083 = vperm.slane %v3791, %v2726
      %v4084 = vsel %vm2728, %v4083, %v4082
      %v4085 = vperm.slane %v3794, %v2730
      %v4086 = vsel %vm2732, %v4085, %v4084
      %v4087 = vperm.slane %v3797, %v2734
      %v4088 = vsel %vm2736, %v4087, %v4086
      %v4089 = vperm.slane %v3800, %v2738
      %v4090 = vsel %vm2740, %v4089, %v4088
      %v4091 = vperm.slane %v3803, %v2742
      %v4092 = vsel %vm2744, %v4091, %v4090
      %v4093 = vperm.slane %v3806, %v2746
      %v4094 = vsel %vm2748, %v4093, %v4092
      %v4095 = vperm.slane %v3809, %v2750
      %v4096 = vsel %vm2752, %v4095, %v4094
      %v4097 = vperm.slane %v3812, %v2754
      %v4098 = vsel %vm2756, %v4097, %v4096
      %v4099 = vperm.slane %v3815, %v2758
      %v4100 = vsel %vm2760, %v4099, %v4098
      %v4101 = vperm.slane %v3818, %v2762
      %v4102 = vsel %vm2764, %v4101, %v4100
      %v4103 = vperm.slane %v3821, %v2766
      %v4104 = vsel %vm2768, %v4103, %v4102
      %v4105 = vperm.slane %v3824, %v2770
      %v4106 = vsel %vm2772, %v4105, %v4104
      %v4107 = vperm.slane %v3827, %v2712
      %v4108 = vperm.slane %v3830, %v2714
      %v4109 = vsel %vm2716, %v4108, %v4107
      %v4110 = vperm.slane %v3833, %v2718
      %v4111 = vsel %vm2720, %v4110, %v4109
      %v4112 = vperm.slane %v3836, %v2722
      %v4113 = vsel %vm2724, %v4112, %v4111
      %v4114 = vperm.slane %v3839, %v2726
      %v4115 = vsel %vm2728, %v4114, %v4113
      %v4116 = vperm.slane %v3842, %v2730
      %v4117 = vsel %vm2732, %v4116, %v4115
      %v4118 = vperm.slane %v3845, %v2734
      %v4119 = vsel %vm2736, %v4118, %v4117
      %v4120 = vperm.slane %v3848, %v2738
      %v4121 = vsel %vm2740, %v4120, %v4119
      %v4122 = vperm.slane %v3851, %v2742
      %v4123 = vsel %vm2744, %v4122, %v4121
      %v4124 = vperm.slane %v3854, %v2746
      %v4125 = vsel %vm2748, %v4124, %v4123
      %v4126 = vperm.slane %v3857, %v2750
      %v4127 = vsel %vm2752, %v4126, %v4125
      %v4128 = vperm.slane %v3860, %v2754
      %v4129 = vsel %vm2756, %v4128, %v4127
      %v4130 = vperm.slane %v3863, %v2758
      %v4131 = vsel %vm2760, %v4130, %v4129
      %v4132 = vperm.slane %v3866, %v2762
      %v4133 = vsel %vm2764, %v4132, %v4131
      %v4134 = vperm.slane %v3869, %v2766
      %v4135 = vsel %vm2768, %v4134, %v4133
      %v4136 = vperm.slane %v3872, %v2770
      %v4137 = vsel %vm2772, %v4136, %v4135
      %v4138 = vperm.slane %v3875, %v2712
      %v4139 = vperm.slane %v3878, %v2714
      %v4140 = vsel %vm2716, %v4139, %v4138
      %v4141 = vperm.slane %v3881, %v2718
      %v4142 = vsel %vm2720, %v4141, %v4140
      %v4143 = vperm.slane %v3884, %v2722
      %v4144 = vsel %vm2724, %v4143, %v4142
      %v4145 = vperm.slane %v3887, %v2726
      %v4146 = vsel %vm2728, %v4145, %v4144
      %v4147 = vperm.slane %v3890, %v2730
      %v4148 = vsel %vm2732, %v4147, %v4146
      %v4149 = vperm.slane %v3893, %v2734
      %v4150 = vsel %vm2736, %v4149, %v4148
      %v4151 = vperm.slane %v3896, %v2738
      %v4152 = vsel %vm2740, %v4151, %v4150
      %v4153 = vperm.slane %v3899, %v2742
      %v4154 = vsel %vm2744, %v4153, %v4152
      %v4155 = vperm.slane %v3902, %v2746
      %v4156 = vsel %vm2748, %v4155, %v4154
      %v4157 = vperm.slane %v3905, %v2750
      %v4158 = vsel %vm2752, %v4157, %v4156
      %v4159 = vperm.slane %v3908, %v2754
      %v4160 = vsel %vm2756, %v4159, %v4158
      %v4161 = vperm.slane %v3911, %v2758
      %v4162 = vsel %vm2760, %v4161, %v4160
      %v4163 = vperm.slane %v3914, %v2762
      %v4164 = vsel %vm2764, %v4163, %v4162
      %v4165 = vperm.slane %v3917, %v2766
      %v4166 = vsel %vm2768, %v4165, %v4164
      %v4167 = vperm.slane %v3920, %v2770
      %v4168 = vsel %vm2772, %v4167, %v4166
      %v4169 = vsel %vm2991, %v3982, %v3951
      %v4170 = vsel %vm2993, %v4013, %v4169
      %v4171 = vsel %vm2995, %v4044, %v4170
      %v4172 = vsel %vm2997, %v4075, %v4171
      %v4173 = vsel %vm2999, %v4106, %v4172
      %v4174 = vsel %vm3001, %v4137, %v4173
      %v4175 = vsel %vm3003, %v4168, %v4174
      %4177 = vadd.xlane.f32.xlu0 %v4175
      %v4178 = vpop.xlane.xlu0 %4177
      %v4180 = vperm.slane %v4178, 0
      %v4181 = vperm.slane %v4178, 1
      %v4182 = vperm.slane %v4178, 2
      %v4183 = vperm.slane %v4178, 3
      %v4184 = vperm.slane %v4178, 4
      %v4185 = vperm.slane %v4178, 5
      %v4186 = vperm.slane %v4178, 6
      %v4187 = vperm.slane %v4178, 7
      %v4196 = vrcp.pop %v4180
      %v4197 = vmul.f32 %v4180, %v4196
      %v4198 = vsub.f32 1.0, %v4197
      %v4199 = vmul.f32 %v4196, %v4198
      %v4200 = vadd.f32 %v4196, %v4199
      %vm4201 = vweird.f32 %v4180
      %vm4202 = vweird.f32 %v4196
      %vm4203 = vmor %vm4201, %vm4202
      %v4204 = vsel %vm4203, %v4196, %v4200
      %v4205 = vand.u32 2147483647, %v4180
      %vm4206 = vcmp.eq.f32.partialorder %v4205, 8.507059e+37
      %v4207 = vand.u32 %v4180, 2147483648
      %v4208 = vor.u32 1.1754944e-38, %v4207
      %v4209 = vsel %vm4206, %v4208, %v4204
      %v4210 = vmul.f32 %v3154, %v4209
      %v4211 = vmul.f32 %v3156, %v4209
      %v4212 = vmul.f32 %v3158, %v4209
      %v4213 = vmul.f32 %v3160, %v4209
      %v4214 = vmul.f32 %v3162, %v4209
      %v4215 = vmul.f32 %v3164, %v4209
      %v4216 = vmul.f32 %v3166, %v4209
      %v4217 = vmul.f32 %v3168, %v4209
      %v4218 = vmul.f32 %v3170, %v4209
      %v4219 = vmul.f32 %v3172, %v4209
      %v4220 = vmul.f32 %v3174, %v4209
      %v4221 = vmul.f32 %v3176, %v4209
      %v4222 = vmul.f32 %v3178, %v4209
      %v4223 = vmul.f32 %v3180, %v4209
      %v4224 = vmul.f32 %v3182, %v4209
      %v4225 = vmul.f32 %v3184, %v4209
      %v4226 = vrcp.pop %v4181
      %v4227 = vmul.f32 %v4181, %v4226
      %v4228 = vsub.f32 1.0, %v4227
      %v4229 = vmul.f32 %v4226, %v4228
      %v4230 = vadd.f32 %v4226, %v4229
      %vm4231 = vweird.f32 %v4181
      %vm4232 = vweird.f32 %v4226
      %vm4233 = vmor %vm4231, %vm4232
      %v4234 = vsel %vm4233, %v4226, %v4230
      %v4235 = vand.u32 2147483647, %v4181
      %vm4236 = vcmp.eq.f32.partialorder %v4235, 8.507059e+37
      %v4237 = vand.u32 %v4181, 2147483648
      %v4238 = vor.u32 1.1754944e-38, %v4237
      %v4239 = vsel %vm4236, %v4238, %v4234
      %v4240 = vmul.f32 %v3186, %v4239
      %v4241 = vmul.f32 %v3188, %v4239
      %v4242 = vmul.f32 %v3190, %v4239
      %v4243 = vmul.f32 %v3192, %v4239
      %v4244 = vmul.f32 %v3194, %v4239
      %v4245 = vmul.f32 %v3196, %v4239
      %v4246 = vmul.f32 %v3198, %v4239
      %v4247 = vmul.f32 %v3200, %v4239
      %v4248 = vmul.f32 %v3202, %v4239
      %v4249 = vmul.f32 %v3204, %v4239
      %v4250 = vmul.f32 %v3206, %v4239
      %v4251 = vmul.f32 %v3208, %v4239
      %v4252 = vmul.f32 %v3210, %v4239
      %v4253 = vmul.f32 %v3212, %v4239
      %v4254 = vmul.f32 %v3214, %v4239
      %v4255 = vmul.f32 %v3216, %v4239
      %v4256 = vrcp.pop %v4182
      %v4257 = vmul.f32 %v4182, %v4256
      %v4258 = vsub.f32 1.0, %v4257
      %v4259 = vmul.f32 %v4256, %v4258
      %v4260 = vadd.f32 %v4256, %v4259
      %vm4261 = vweird.f32 %v4182
      %vm4262 = vweird.f32 %v4256
      %vm4263 = vmor %vm4261, %vm4262
      %v4264 = vsel %vm4263, %v4256, %v4260
      %v4265 = vand.u32 2147483647, %v4182
      %vm4266 = vcmp.eq.f32.partialorder %v4265, 8.507059e+37
      %v4267 = vand.u32 %v4182, 2147483648
      %v4268 = vor.u32 1.1754944e-38, %v4267
      %v4269 = vsel %vm4266, %v4268, %v4264
      %v4270 = vmul.f32 %v3218, %v4269
      %v4271 = vmul.f32 %v3220, %v4269
      %v4272 = vmul.f32 %v3222, %v4269
      %v4273 = vmul.f32 %v3224, %v4269
      %v4274 = vmul.f32 %v3226, %v4269
      %v4275 = vmul.f32 %v3228, %v4269
      %v4276 = vmul.f32 %v3230, %v4269
      %v4277 = vmul.f32 %v3232, %v4269
      %v4278 = vmul.f32 %v3234, %v4269
      %v4279 = vmul.f32 %v3236, %v4269
      %v4280 = vmul.f32 %v3238, %v4269
      %v4281 = vmul.f32 %v3240, %v4269
      %v4282 = vmul.f32 %v3242, %v4269
      %v4283 = vmul.f32 %v3244, %v4269
      %v4284 = vmul.f32 %v3246, %v4269
      %v4285 = vmul.f32 %v3248, %v4269
      %v4286 = vrcp.pop %v4183
      %v4287 = vmul.f32 %v4183, %v4286
      %v4288 = vsub.f32 1.0, %v4287
      %v4289 = vmul.f32 %v4286, %v4288
      %v4290 = vadd.f32 %v4286, %v4289
      %vm4291 = vweird.f32 %v4183
      %vm4292 = vweird.f32 %v4286
      %vm4293 = vmor %vm4291, %vm4292
      %v4294 = vsel %vm4293, %v4286, %v4290
      %v4295 = vand.u32 2147483647, %v4183
      %vm4296 = vcmp.eq.f32.partialorder %v4295, 8.507059e+37
      %v4297 = vand.u32 %v4183, 2147483648
      %v4298 = vor.u32 1.1754944e-38, %v4297
      %v4299 = vsel %vm4296, %v4298, %v4294
      %v4300 = vmul.f32 %v3250, %v4299
      %v4301 = vmul.f32 %v3252, %v4299
      %v4302 = vmul.f32 %v3254, %v4299
      %v4303 = vmul.f32 %v3256, %v4299
      %v4304 = vmul.f32 %v3258, %v4299
      %v4305 = vmul.f32 %v3260, %v4299
      %v4306 = vmul.f32 %v3262, %v4299
      %v4307 = vmul.f32 %v3264, %v4299
      %v4308 = vmul.f32 %v3266, %v4299
      %v4309 = vmul.f32 %v3268, %v4299
      %v4310 = vmul.f32 %v3270, %v4299
      %v4311 = vmul.f32 %v3272, %v4299
      %v4312 = vmul.f32 %v3274, %v4299
      %v4313 = vmul.f32 %v3276, %v4299
      %v4314 = vmul.f32 %v3278, %v4299
      %v4315 = vmul.f32 %v3280, %v4299
      %v4316 = vrcp.pop %v4184
      %v4317 = vmul.f32 %v4184, %v4316
      %v4318 = vsub.f32 1.0, %v4317
      %v4319 = vmul.f32 %v4316, %v4318
      %v4320 = vadd.f32 %v4316, %v4319
      %vm4321 = vweird.f32 %v4184
      %vm4322 = vweird.f32 %v4316
      %vm4323 = vmor %vm4321, %vm4322
      %v4324 = vsel %vm4323, %v4316, %v4320
      %v4325 = vand.u32 2147483647, %v4184
      %vm4326 = vcmp.eq.f32.partialorder %v4325, 8.507059e+37
      %v4327 = vand.u32 %v4184, 2147483648
      %v4328 = vor.u32 1.1754944e-38, %v4327
      %v4329 = vsel %vm4326, %v4328, %v4324
      %v4330 = vmul.f32 %v3282, %v4329
      %v4331 = vmul.f32 %v3284, %v4329
      %v4332 = vmul.f32 %v3286, %v4329
      %v4333 = vmul.f32 %v3288, %v4329
      %v4334 = vmul.f32 %v3290, %v4329
      %v4335 = vmul.f32 %v3292, %v4329
      %v4336 = vmul.f32 %v3294, %v4329
      %v4337 = vmul.f32 %v3296, %v4329
      %v4338 = vmul.f32 %v3298, %v4329
      %v4339 = vmul.f32 %v3300, %v4329
      %v4340 = vmul.f32 %v3302, %v4329
      %v4341 = vmul.f32 %v3304, %v4329
      %v4342 = vmul.f32 %v3306, %v4329
      %v4343 = vmul.f32 %v3308, %v4329
      %v4344 = vmul.f32 %v3310, %v4329
      %v4345 = vmul.f32 %v3312, %v4329
      %v4346 = vrcp.pop %v4185
      %v4347 = vmul.f32 %v4185, %v4346
      %v4348 = vsub.f32 1.0, %v4347
      %v4349 = vmul.f32 %v4346, %v4348
      %v4350 = vadd.f32 %v4346, %v4349
      %vm4351 = vweird.f32 %v4185
      %vm4352 = vweird.f32 %v4346
      %vm4353 = vmor %vm4351, %vm4352
      %v4354 = vsel %vm4353, %v4346, %v4350
      %v4355 = vand.u32 2147483647, %v4185
      %vm4356 = vcmp.eq.f32.partialorder %v4355, 8.507059e+37
      %v4357 = vand.u32 %v4185, 2147483648
      %v4358 = vor.u32 1.1754944e-38, %v4357
      %v4359 = vsel %vm4356, %v4358, %v4354
      %v4360 = vmul.f32 %v3314, %v4359
      %v4361 = vmul.f32 %v3316, %v4359
      %v4362 = vmul.f32 %v3318, %v4359
      %v4363 = vmul.f32 %v3320, %v4359
      %v4364 = vmul.f32 %v3322, %v4359
      %v4365 = vmul.f32 %v3324, %v4359
      %v4366 = vmul.f32 %v3326, %v4359
      %v4367 = vmul.f32 %v3328, %v4359
      %v4368 = vmul.f32 %v3330, %v4359
      %v4369 = vmul.f32 %v3332, %v4359
      %v4370 = vmul.f32 %v3334, %v4359
      %v4371 = vmul.f32 %v3336, %v4359
      %v4372 = vmul.f32 %v3338, %v4359
      %v4373 = vmul.f32 %v3340, %v4359
      %v4374 = vmul.f32 %v3342, %v4359
      %v4375 = vmul.f32 %v3344, %v4359
      %v4376 = vrcp.pop %v4186
      %v4377 = vmul.f32 %v4186, %v4376
      %v4378 = vsub.f32 1.0, %v4377
      %v4379 = vmul.f32 %v4376, %v4378
      %v4380 = vadd.f32 %v4376, %v4379
      %vm4381 = vweird.f32 %v4186
      %vm4382 = vweird.f32 %v4376
      %vm4383 = vmor %vm4381, %vm4382
      %v4384 = vsel %vm4383, %v4376, %v4380
      %v4385 = vand.u32 2147483647, %v4186
      %vm4386 = vcmp.eq.f32.partialorder %v4385, 8.507059e+37
      %v4387 = vand.u32 %v4186, 2147483648
      %v4388 = vor.u32 1.1754944e-38, %v4387
      %v4389 = vsel %vm4386, %v4388, %v4384
      %v4390 = vmul.f32 %v3346, %v4389
      %v4391 = vmul.f32 %v3348, %v4389
      %v4392 = vmul.f32 %v3350, %v4389
      %v4393 = vmul.f32 %v3352, %v4389
      %v4394 = vmul.f32 %v3354, %v4389
      %v4395 = vmul.f32 %v3356, %v4389
      %v4396 = vmul.f32 %v3358, %v4389
      %v4397 = vmul.f32 %v3360, %v4389
      %v4398 = vmul.f32 %v3362, %v4389
      %v4399 = vmul.f32 %v3364, %v4389
      %v4400 = vmul.f32 %v3366, %v4389
      %v4401 = vmul.f32 %v3368, %v4389
      %v4402 = vmul.f32 %v3370, %v4389
      %v4403 = vmul.f32 %v3372, %v4389
      %v4404 = vmul.f32 %v3374, %v4389
      %v4405 = vmul.f32 %v3376, %v4389
      %v4406 = vrcp.pop %v4187
      %v4407 = vmul.f32 %v4187, %v4406
      %v4408 = vsub.f32 1.0, %v4407
      %v4409 = vmul.f32 %v4406, %v4408
      %v4410 = vadd.f32 %v4406, %v4409
      %vm4411 = vweird.f32 %v4187
      %vm4412 = vweird.f32 %v4406
      %vm4413 = vmor %vm4411, %vm4412
      %v4414 = vsel %vm4413, %v4406, %v4410
      %v4415 = vand.u32 2147483647, %v4187
      %vm4416 = vcmp.eq.f32.partialorder %v4415, 8.507059e+37
      %v4417 = vand.u32 %v4187, 2147483648
      %v4418 = vor.u32 1.1754944e-38, %v4417
      %v4419 = vsel %vm4416, %v4418, %v4414
      %v4420 = vmul.f32 %v3378, %v4419
      %v4421 = vmul.f32 %v3380, %v4419
      %v4422 = vmul.f32 %v3382, %v4419
      %v4423 = vmul.f32 %v3384, %v4419
      %v4424 = vmul.f32 %v3386, %v4419
      %v4425 = vmul.f32 %v3388, %v4419
      %v4426 = vmul.f32 %v3390, %v4419
      %v4427 = vmul.f32 %v3392, %v4419
      %v4428 = vmul.f32 %v3394, %v4419
      %v4429 = vmul.f32 %v3396, %v4419
      %v4430 = vmul.f32 %v3398, %v4419
      %v4431 = vmul.f32 %v3400, %v4419
      %v4432 = vmul.f32 %v3402, %v4419
      %v4433 = vmul.f32 %v3404, %v4419
      %v4434 = vmul.f32 %v3406, %v4419
      %v4435 = vmul.f32 %v3408, %v4419
      %4564 = vset.pattern.permute.xlu0 0
      %4565 = vperm.xlu0 %4564, %v4210
      %v4566 = vpop.permute.xlu0 %4565
      %4567 = vset.pattern.permute.xlu0 0
      %4568 = vperm.xlu0 %4567, %v4211
      %v4569 = vpop.permute.xlu0 %4568
      %4570 = vset.pattern.permute.xlu0 0
      %4571 = vperm.xlu0 %4570, %v4212
      %v4572 = vpop.permute.xlu0 %4571
      %4573 = vset.pattern.permute.xlu0 0
      %4574 = vperm.xlu0 %4573, %v4213
      %v4575 = vpop.permute.xlu0 %4574
      %4576 = vset.pattern.permute.xlu0 0
      %4577 = vperm.xlu0 %4576, %v4214
      %v4578 = vpop.permute.xlu0 %4577
      %4579 = vset.pattern.permute.xlu0 0
      %4580 = vperm.xlu0 %4579, %v4215
      %v4581 = vpop.permute.xlu0 %4580
      %4582 = vset.pattern.permute.xlu0 0
      %4583 = vperm.xlu0 %4582, %v4216
      %v4584 = vpop.permute.xlu0 %4583
      %4585 = vset.pattern.permute.xlu0 0
      %4586 = vperm.xlu0 %4585, %v4217
      %v4587 = vpop.permute.xlu0 %4586
      %4588 = vset.pattern.permute.xlu0 0
      %4589 = vperm.xlu0 %4588, %v4218
      %v4590 = vpop.permute.xlu0 %4589
      %4591 = vset.pattern.permute.xlu0 0
      %4592 = vperm.xlu0 %4591, %v4219
      %v4593 = vpop.permute.xlu0 %4592
      %4594 = vset.pattern.permute.xlu0 0
      %4595 = vperm.xlu0 %4594, %v4220
      %v4596 = vpop.permute.xlu0 %4595
      %4597 = vset.pattern.permute.xlu0 0
      %4598 = vperm.xlu0 %4597, %v4221
      %v4599 = vpop.permute.xlu0 %4598
      %4600 = vset.pattern.permute.xlu0 0
      %4601 = vperm.xlu0 %4600, %v4222
      %v4602 = vpop.permute.xlu0 %4601
      %4603 = vset.pattern.permute.xlu0 0
      %4604 = vperm.xlu0 %4603, %v4223
      %v4605 = vpop.permute.xlu0 %4604
      %4606 = vset.pattern.permute.xlu0 0
      %4607 = vperm.xlu0 %4606, %v4224
      %v4608 = vpop.permute.xlu0 %4607
      %4609 = vset.pattern.permute.xlu0 0
      %4610 = vperm.xlu0 %4609, %v4225
      %v4611 = vpop.permute.xlu0 %4610
      %4612 = vset.pattern.permute.xlu0 0
      %4613 = vperm.xlu0 %4612, %v4240
      %v4614 = vpop.permute.xlu0 %4613
      %4615 = vset.pattern.permute.xlu0 0
      %4616 = vperm.xlu0 %4615, %v4241
      %v4617 = vpop.permute.xlu0 %4616
      %4618 = vset.pattern.permute.xlu0 0
      %4619 = vperm.xlu0 %4618, %v4242
      %v4620 = vpop.permute.xlu0 %4619
      %4621 = vset.pattern.permute.xlu0 0
      %4622 = vperm.xlu0 %4621, %v4243
      %v4623 = vpop.permute.xlu0 %4622
      %4624 = vset.pattern.permute.xlu0 0
      %4625 = vperm.xlu0 %4624, %v4244
      %v4626 = vpop.permute.xlu0 %4625
      %4627 = vset.pattern.permute.xlu0 0
      %4628 = vperm.xlu0 %4627, %v4245
      %v4629 = vpop.permute.xlu0 %4628
      %4630 = vset.pattern.permute.xlu0 0
      %4631 = vperm.xlu0 %4630, %v4246
      %v4632 = vpop.permute.xlu0 %4631
      %4633 = vset.pattern.permute.xlu0 0
      %4634 = vperm.xlu0 %4633, %v4247
      %v4635 = vpop.permute.xlu0 %4634
      %4636 = vset.pattern.permute.xlu0 0
      %4637 = vperm.xlu0 %4636, %v4248
      %v4638 = vpop.permute.xlu0 %4637
      %4639 = vset.pattern.permute.xlu0 0
      %4640 = vperm.xlu0 %4639, %v4249
      %v4641 = vpop.permute.xlu0 %4640
      %4642 = vset.pattern.permute.xlu0 0
      %4643 = vperm.xlu0 %4642, %v4250
      %v4644 = vpop.permute.xlu0 %4643
      %4645 = vset.pattern.permute.xlu0 0
      %4646 = vperm.xlu0 %4645, %v4251
      %v4647 = vpop.permute.xlu0 %4646
      %4648 = vset.pattern.permute.xlu0 0
      %4649 = vperm.xlu0 %4648, %v4252
      %v4650 = vpop.permute.xlu0 %4649
      %4651 = vset.pattern.permute.xlu0 0
      %4652 = vperm.xlu0 %4651, %v4253
      %v4653 = vpop.permute.xlu0 %4652
      %4654 = vset.pattern.permute.xlu0 0
      %4655 = vperm.xlu0 %4654, %v4254
      %v4656 = vpop.permute.xlu0 %4655
      %4657 = vset.pattern.permute.xlu0 0
      %4658 = vperm.xlu0 %4657, %v4255
      %v4659 = vpop.permute.xlu0 %4658
      %4660 = vset.pattern.permute.xlu0 0
      %4661 = vperm.xlu0 %4660, %v4270
      %v4662 = vpop.permute.xlu0 %4661
      %4663 = vset.pattern.permute.xlu0 0
      %4664 = vperm.xlu0 %4663, %v4271
      %v4665 = vpop.permute.xlu0 %4664
      %4666 = vset.pattern.permute.xlu0 0
      %4667 = vperm.xlu0 %4666, %v4272
      %v4668 = vpop.permute.xlu0 %4667
      %4669 = vset.pattern.permute.xlu0 0
      %4670 = vperm.xlu0 %4669, %v4273
      %v4671 = vpop.permute.xlu0 %4670
      %4672 = vset.pattern.permute.xlu0 0
      %4673 = vperm.xlu0 %4672, %v4274
      %v4674 = vpop.permute.xlu0 %4673
      %4675 = vset.pattern.permute.xlu0 0
      %4676 = vperm.xlu0 %4675, %v4275
      %v4677 = vpop.permute.xlu0 %4676
      %4678 = vset.pattern.permute.xlu0 0
      %4679 = vperm.xlu0 %4678, %v4276
      %v4680 = vpop.permute.xlu0 %4679
      %4681 = vset.pattern.permute.xlu0 0
      %4682 = vperm.xlu0 %4681, %v4277
      %v4683 = vpop.permute.xlu0 %4682
      %4684 = vset.pattern.permute.xlu0 0
      %4685 = vperm.xlu0 %4684, %v4278
      %v4686 = vpop.permute.xlu0 %4685
      %4687 = vset.pattern.permute.xlu0 0
      %4688 = vperm.xlu0 %4687, %v4279
      %v4689 = vpop.permute.xlu0 %4688
      %4690 = vset.pattern.permute.xlu0 0
      %4691 = vperm.xlu0 %4690, %v4280
      %v4692 = vpop.permute.xlu0 %4691
      %4693 = vset.pattern.permute.xlu0 0
      %4694 = vperm.xlu0 %4693, %v4281
      %v4695 = vpop.permute.xlu0 %4694
      %4696 = vset.pattern.permute.xlu0 0
      %4697 = vperm.xlu0 %4696, %v4282
      %v4698 = vpop.permute.xlu0 %4697
      %4699 = vset.pattern.permute.xlu0 0
      %4700 = vperm.xlu0 %4699, %v4283
      %v4701 = vpop.permute.xlu0 %4700
      %4702 = vset.pattern.permute.xlu0 0
      %4703 = vperm.xlu0 %4702, %v4284
      %v4704 = vpop.permute.xlu0 %4703
      %4705 = vset.pattern.permute.xlu0 0
      %4706 = vperm.xlu0 %4705, %v4285
      %v4707 = vpop.permute.xlu0 %4706
      %4708 = vset.pattern.permute.xlu0 0
      %4709 = vperm.xlu0 %4708, %v4300
      %v4710 = vpop.permute.xlu0 %4709
      %4711 = vset.pattern.permute.xlu0 0
      %4712 = vperm.xlu0 %4711, %v4301
      %v4713 = vpop.permute.xlu0 %4712
      %4714 = vset.pattern.permute.xlu0 0
      %4715 = vperm.xlu0 %4714, %v4302
      %v4716 = vpop.permute.xlu0 %4715
      %4717 = vset.pattern.permute.xlu0 0
      %4718 = vperm.xlu0 %4717, %v4303
      %v4719 = vpop.permute.xlu0 %4718
      %4720 = vset.pattern.permute.xlu0 0
      %4721 = vperm.xlu0 %4720, %v4304
      %v4722 = vpop.permute.xlu0 %4721
      %4723 = vset.pattern.permute.xlu0 0
      %4724 = vperm.xlu0 %4723, %v4305
      %v4725 = vpop.permute.xlu0 %4724
      %4726 = vset.pattern.permute.xlu0 0
      %4727 = vperm.xlu0 %4726, %v4306
      %v4728 = vpop.permute.xlu0 %4727
      %4729 = vset.pattern.permute.xlu0 0
      %4730 = vperm.xlu0 %4729, %v4307
      %v4731 = vpop.permute.xlu0 %4730
      %4732 = vset.pattern.permute.xlu0 0
      %4733 = vperm.xlu0 %4732, %v4308
      %v4734 = vpop.permute.xlu0 %4733
      %4735 = vset.pattern.permute.xlu0 0
      %4736 = vperm.xlu0 %4735, %v4309
      %v4737 = vpop.permute.xlu0 %4736
      %4738 = vset.pattern.permute.xlu0 0
      %4739 = vperm.xlu0 %4738, %v4310
      %v4740 = vpop.permute.xlu0 %4739
      %4741 = vset.pattern.permute.xlu0 0
      %4742 = vperm.xlu0 %4741, %v4311
      %v4743 = vpop.permute.xlu0 %4742
      %4744 = vset.pattern.permute.xlu0 0
      %4745 = vperm.xlu0 %4744, %v4312
      %v4746 = vpop.permute.xlu0 %4745
      %4747 = vset.pattern.permute.xlu0 0
      %4748 = vperm.xlu0 %4747, %v4313
      %v4749 = vpop.permute.xlu0 %4748
      %4750 = vset.pattern.permute.xlu0 0
      %4751 = vperm.xlu0 %4750, %v4314
      %v4752 = vpop.permute.xlu0 %4751
      %4753 = vset.pattern.permute.xlu0 0
      %4754 = vperm.xlu0 %4753, %v4315
      %v4755 = vpop.permute.xlu0 %4754
      %4756 = vset.pattern.permute.xlu0 0
      %4757 = vperm.xlu0 %4756, %v4330
      %v4758 = vpop.permute.xlu0 %4757
      %4759 = vset.pattern.permute.xlu0 0
      %4760 = vperm.xlu0 %4759, %v4331
      %v4761 = vpop.permute.xlu0 %4760
      %4762 = vset.pattern.permute.xlu0 0
      %4763 = vperm.xlu0 %4762, %v4332
      %v4764 = vpop.permute.xlu0 %4763
      %4765 = vset.pattern.permute.xlu0 0
      %4766 = vperm.xlu0 %4765, %v4333
      %v4767 = vpop.permute.xlu0 %4766
      %4768 = vset.pattern.permute.xlu0 0
      %4769 = vperm.xlu0 %4768, %v4334
      %v4770 = vpop.permute.xlu0 %4769
      %4771 = vset.pattern.permute.xlu0 0
      %4772 = vperm.xlu0 %4771, %v4335
      %v4773 = vpop.permute.xlu0 %4772
      %4774 = vset.pattern.permute.xlu0 0
      %4775 = vperm.xlu0 %4774, %v4336
      %v4776 = vpop.permute.xlu0 %4775
      %4777 = vset.pattern.permute.xlu0 0
      %4778 = vperm.xlu0 %4777, %v4337
      %v4779 = vpop.permute.xlu0 %4778
      %4780 = vset.pattern.permute.xlu0 0
      %4781 = vperm.xlu0 %4780, %v4338
      %v4782 = vpop.permute.xlu0 %4781
      %4783 = vset.pattern.permute.xlu0 0
      %4784 = vperm.xlu0 %4783, %v4339
      %v4785 = vpop.permute.xlu0 %4784
      %4786 = vset.pattern.permute.xlu0 0
      %4787 = vperm.xlu0 %4786, %v4340
      %v4788 = vpop.permute.xlu0 %4787
      %4789 = vset.pattern.permute.xlu0 0
      %4790 = vperm.xlu0 %4789, %v4341
      %v4791 = vpop.permute.xlu0 %4790
      %4792 = vset.pattern.permute.xlu0 0
      %4793 = vperm.xlu0 %4792, %v4342
      %v4794 = vpop.permute.xlu0 %4793
      %4795 = vset.pattern.permute.xlu0 0
      %4796 = vperm.xlu0 %4795, %v4343
      %v4797 = vpop.permute.xlu0 %4796
      %4798 = vset.pattern.permute.xlu0 0
      %4799 = vperm.xlu0 %4798, %v4344
      %v4800 = vpop.permute.xlu0 %4799
      %4801 = vset.pattern.permute.xlu0 0
      %4802 = vperm.xlu0 %4801, %v4345
      %v4803 = vpop.permute.xlu0 %4802
      %4804 = vset.pattern.permute.xlu0 0
      %4805 = vperm.xlu0 %4804, %v4360
      %v4806 = vpop.permute.xlu0 %4805
      %4807 = vset.pattern.permute.xlu0 0
      %4808 = vperm.xlu0 %4807, %v4361
      %v4809 = vpop.permute.xlu0 %4808
      %4810 = vset.pattern.permute.xlu0 0
      %4811 = vperm.xlu0 %4810, %v4362
      %v4812 = vpop.permute.xlu0 %4811
      %4813 = vset.pattern.permute.xlu0 0
      %4814 = vperm.xlu0 %4813, %v4363
      %v4815 = vpop.permute.xlu0 %4814
      %4816 = vset.pattern.permute.xlu0 0
      %4817 = vperm.xlu0 %4816, %v4364
      %v4818 = vpop.permute.xlu0 %4817
      %4819 = vset.pattern.permute.xlu0 0
      %4820 = vperm.xlu0 %4819, %v4365
      %v4821 = vpop.permute.xlu0 %4820
      %4822 = vset.pattern.permute.xlu0 0
      %4823 = vperm.xlu0 %4822, %v4366
      %v4824 = vpop.permute.xlu0 %4823
      %4825 = vset.pattern.permute.xlu0 0
      %4826 = vperm.xlu0 %4825, %v4367
      %v4827 = vpop.permute.xlu0 %4826
      %4828 = vset.pattern.permute.xlu0 0
      %4829 = vperm.xlu0 %4828, %v4368
      %v4830 = vpop.permute.xlu0 %4829
      %4831 = vset.pattern.permute.xlu0 0
      %4832 = vperm.xlu0 %4831, %v4369
      %v4833 = vpop.permute.xlu0 %4832
      %4834 = vset.pattern.permute.xlu0 0
      %4835 = vperm.xlu0 %4834, %v4370
      %v4836 = vpop.permute.xlu0 %4835
      %4837 = vset.pattern.permute.xlu0 0
      %4838 = vperm.xlu0 %4837, %v4371
      %v4839 = vpop.permute.xlu0 %4838
      %4840 = vset.pattern.permute.xlu0 0
      %4841 = vperm.xlu0 %4840, %v4372
      %v4842 = vpop.permute.xlu0 %4841
      %4843 = vset.pattern.permute.xlu0 0
      %4844 = vperm.xlu0 %4843, %v4373
      %v4845 = vpop.permute.xlu0 %4844
      %4846 = vset.pattern.permute.xlu0 0
      %4847 = vperm.xlu0 %4846, %v4374
      %v4848 = vpop.permute.xlu0 %4847
      %4849 = vset.pattern.permute.xlu0 0
      %4850 = vperm.xlu0 %4849, %v4375
      %v4851 = vpop.permute.xlu0 %4850
      %4852 = vset.pattern.permute.xlu0 0
      %4853 = vperm.xlu0 %4852, %v4390
      %v4854 = vpop.permute.xlu0 %4853
      %4855 = vset.pattern.permute.xlu0 0
      %4856 = vperm.xlu0 %4855, %v4391
      %v4857 = vpop.permute.xlu0 %4856
      %4858 = vset.pattern.permute.xlu0 0
      %4859 = vperm.xlu0 %4858, %v4392
      %v4860 = vpop.permute.xlu0 %4859
      %4861 = vset.pattern.permute.xlu0 0
      %4862 = vperm.xlu0 %4861, %v4393
      %v4863 = vpop.permute.xlu0 %4862
      %4864 = vset.pattern.permute.xlu0 0
      %4865 = vperm.xlu0 %4864, %v4394
      %v4866 = vpop.permute.xlu0 %4865
      %4867 = vset.pattern.permute.xlu0 0
      %4868 = vperm.xlu0 %4867, %v4395
      %v4869 = vpop.permute.xlu0 %4868
      %4870 = vset.pattern.permute.xlu0 0
      %4871 = vperm.xlu0 %4870, %v4396
      %v4872 = vpop.permute.xlu0 %4871
      %4873 = vset.pattern.permute.xlu0 0
      %4874 = vperm.xlu0 %4873, %v4397
      %v4875 = vpop.permute.xlu0 %4874
      %4876 = vset.pattern.permute.xlu0 0
      %4877 = vperm.xlu0 %4876, %v4398
      %v4878 = vpop.permute.xlu0 %4877
      %4879 = vset.pattern.permute.xlu0 0
      %4880 = vperm.xlu0 %4879, %v4399
      %v4881 = vpop.permute.xlu0 %4880
      %4882 = vset.pattern.permute.xlu0 0
      %4883 = vperm.xlu0 %4882, %v4400
      %v4884 = vpop.permute.xlu0 %4883
      %4885 = vset.pattern.permute.xlu0 0
      %4886 = vperm.xlu0 %4885, %v4401
      %v4887 = vpop.permute.xlu0 %4886
      %4888 = vset.pattern.permute.xlu0 0
      %4889 = vperm.xlu0 %4888, %v4402
      %v4890 = vpop.permute.xlu0 %4889
      %4891 = vset.pattern.permute.xlu0 0
      %4892 = vperm.xlu0 %4891, %v4403
      %v4893 = vpop.permute.xlu0 %4892
      %4894 = vset.pattern.permute.xlu0 0
      %4895 = vperm.xlu0 %4894, %v4404
      %v4896 = vpop.permute.xlu0 %4895
      %4897 = vset.pattern.permute.xlu0 0
      %4898 = vperm.xlu0 %4897, %v4405
      %v4899 = vpop.permute.xlu0 %4898
      %4900 = vset.pattern.permute.xlu0 0
      %4901 = vperm.xlu0 %4900, %v4420
      %v4902 = vpop.permute.xlu0 %4901
      %4903 = vset.pattern.permute.xlu0 0
      %4904 = vperm.xlu0 %4903, %v4421
      %v4905 = vpop.permute.xlu0 %4904
      %4906 = vset.pattern.permute.xlu0 0
      %4907 = vperm.xlu0 %4906, %v4422
      %v4908 = vpop.permute.xlu0 %4907
      %4909 = vset.pattern.permute.xlu0 0
      %4910 = vperm.xlu0 %4909, %v4423
      %v4911 = vpop.permute.xlu0 %4910
      %4912 = vset.pattern.permute.xlu0 0
      %4913 = vperm.xlu0 %4912, %v4424
      %v4914 = vpop.permute.xlu0 %4913
      %4915 = vset.pattern.permute.xlu0 0
      %4916 = vperm.xlu0 %4915, %v4425
      %v4917 = vpop.permute.xlu0 %4916
      %4918 = vset.pattern.permute.xlu0 0
      %4919 = vperm.xlu0 %4918, %v4426
      %v4920 = vpop.permute.xlu0 %4919
      %4921 = vset.pattern.permute.xlu0 0
      %4922 = vperm.xlu0 %4921, %v4427
      %v4923 = vpop.permute.xlu0 %4922
      %4924 = vset.pattern.permute.xlu0 0
      %4925 = vperm.xlu0 %4924, %v4428
      %v4926 = vpop.permute.xlu0 %4925
      %4927 = vset.pattern.permute.xlu0 0
      %4928 = vperm.xlu0 %4927, %v4429
      %v4929 = vpop.permute.xlu0 %4928
      %4930 = vset.pattern.permute.xlu0 0
      %4931 = vperm.xlu0 %4930, %v4430
      %v4932 = vpop.permute.xlu0 %4931
      %4933 = vset.pattern.permute.xlu0 0
      %4934 = vperm.xlu0 %4933, %v4431
      %v4935 = vpop.permute.xlu0 %4934
      %4936 = vset.pattern.permute.xlu0 0
      %4937 = vperm.xlu0 %4936, %v4432
      %v4938 = vpop.permute.xlu0 %4937
      %4939 = vset.pattern.permute.xlu0 0
      %4940 = vperm.xlu0 %4939, %v4433
      %v4941 = vpop.permute.xlu0 %4940
      %4942 = vset.pattern.permute.xlu0 0
      %4943 = vperm.xlu0 %4942, %v4434
      %v4944 = vpop.permute.xlu0 %4943
      %4945 = vset.pattern.permute.xlu0 0
      %4946 = vperm.xlu0 %4945, %v4435
      %v4947 = vpop.permute.xlu0 %4946
      %v4948 = vperm.slane %v4566, %v2712
      %v4949 = vperm.slane %v4569, %v2714
      %v4950 = vsel %vm2716, %v4949, %v4948
      %v4951 = vperm.slane %v4572, %v2718
      %v4952 = vsel %vm2720, %v4951, %v4950
      %v4953 = vperm.slane %v4575, %v2722
      %v4954 = vsel %vm2724, %v4953, %v4952
      %v4955 = vperm.slane %v4578, %v2726
      %v4956 = vsel %vm2728, %v4955, %v4954
      %v4957 = vperm.slane %v4581, %v2730
      %v4958 = vsel %vm2732, %v4957, %v4956
      %v4959 = vperm.slane %v4584, %v2734
      %v4960 = vsel %vm2736, %v4959, %v4958
      %v4961 = vperm.slane %v4587, %v2738
      %v4962 = vsel %vm2740, %v4961, %v4960
      %v4963 = vperm.slane %v4590, %v2742
      %v4964 = vsel %vm2744, %v4963, %v4962
      %v4965 = vperm.slane %v4593, %v2746
      %v4966 = vsel %vm2748, %v4965, %v4964
      %v4967 = vperm.slane %v4596, %v2750
      %v4968 = vsel %vm2752, %v4967, %v4966
      %v4969 = vperm.slane %v4599, %v2754
      %v4970 = vsel %vm2756, %v4969, %v4968
      %v4971 = vperm.slane %v4602, %v2758
      %v4972 = vsel %vm2760, %v4971, %v4970
      %v4973 = vperm.slane %v4605, %v2762
      %v4974 = vsel %vm2764, %v4973, %v4972
      %v4975 = vperm.slane %v4608, %v2766
      %v4976 = vsel %vm2768, %v4975, %v4974
      %v4977 = vperm.slane %v4611, %v2770
      %v4978 = vsel %vm2772, %v4977, %v4976
      %v4979 = vperm.slane %v4614, %v2712
      %v4980 = vperm.slane %v4617, %v2714
      %v4981 = vsel %vm2716, %v4980, %v4979
      %v4982 = vperm.slane %v4620, %v2718
      %v4983 = vsel %vm2720, %v4982, %v4981
      %v4984 = vperm.slane %v4623, %v2722
      %v4985 = vsel %vm2724, %v4984, %v4983
      %v4986 = vperm.slane %v4626, %v2726
      %v4987 = vsel %vm2728, %v4986, %v4985
      %v4988 = vperm.slane %v4629, %v2730
      %v4989 = vsel %vm2732, %v4988, %v4987
      %v4990 = vperm.slane %v4632, %v2734
      %v4991 = vsel %vm2736, %v4990, %v4989
      %v4992 = vperm.slane %v4635, %v2738
      %v4993 = vsel %vm2740, %v4992, %v4991
      %v4994 = vperm.slane %v4638, %v2742
      %v4995 = vsel %vm2744, %v4994, %v4993
      %v4996 = vperm.slane %v4641, %v2746
      %v4997 = vsel %vm2748, %v4996, %v4995
      %v4998 = vperm.slane %v4644, %v2750
      %v4999 = vsel %vm2752, %v4998, %v4997
      %v5000 = vperm.slane %v4647, %v2754
      %v5001 = vsel %vm2756, %v5000, %v4999
      %v5002 = vperm.slane %v4650, %v2758
      %v5003 = vsel %vm2760, %v5002, %v5001
      %v5004 = vperm.slane %v4653, %v2762
      %v5005 = vsel %vm2764, %v5004, %v5003
      %v5006 = vperm.slane %v4656, %v2766
      %v5007 = vsel %vm2768, %v5006, %v5005
      %v5008 = vperm.slane %v4659, %v2770
      %v5009 = vsel %vm2772, %v5008, %v5007
      %v5010 = vperm.slane %v4662, %v2712
      %v5011 = vperm.slane %v4665, %v2714
      %v5012 = vsel %vm2716, %v5011, %v5010
      %v5013 = vperm.slane %v4668, %v2718
      %v5014 = vsel %vm2720, %v5013, %v5012
      %v5015 = vperm.slane %v4671, %v2722
      %v5016 = vsel %vm2724, %v5015, %v5014
      %v5017 = vperm.slane %v4674, %v2726
      %v5018 = vsel %vm2728, %v5017, %v5016
      %v5019 = vperm.slane %v4677, %v2730
      %v5020 = vsel %vm2732, %v5019, %v5018
      %v5021 = vperm.slane %v4680, %v2734
      %v5022 = vsel %vm2736, %v5021, %v5020
      %v5023 = vperm.slane %v4683, %v2738
      %v5024 = vsel %vm2740, %v5023, %v5022
      %v5025 = vperm.slane %v4686, %v2742
      %v5026 = vsel %vm2744, %v5025, %v5024
      %v5027 = vperm.slane %v4689, %v2746
      %v5028 = vsel %vm2748, %v5027, %v5026
      %v5029 = vperm.slane %v4692, %v2750
      %v5030 = vsel %vm2752, %v5029, %v5028
      %v5031 = vperm.slane %v4695, %v2754
      %v5032 = vsel %vm2756, %v5031, %v5030
      %v5033 = vperm.slane %v4698, %v2758
      %v5034 = vsel %vm2760, %v5033, %v5032
      %v5035 = vperm.slane %v4701, %v2762
      %v5036 = vsel %vm2764, %v5035, %v5034
      %v5037 = vperm.slane %v4704, %v2766
      %v5038 = vsel %vm2768, %v5037, %v5036
      %v5039 = vperm.slane %v4707, %v2770
      %v5040 = vsel %vm2772, %v5039, %v5038
      %v5041 = vperm.slane %v4710, %v2712
      %v5042 = vperm.slane %v4713, %v2714
      %v5043 = vsel %vm2716, %v5042, %v5041
      %v5044 = vperm.slane %v4716, %v2718
      %v5045 = vsel %vm2720, %v5044, %v5043
      %v5046 = vperm.slane %v4719, %v2722
      %v5047 = vsel %vm2724, %v5046, %v5045
      %v5048 = vperm.slane %v4722, %v2726
      %v5049 = vsel %vm2728, %v5048, %v5047
      %v5050 = vperm.slane %v4725, %v2730
      %v5051 = vsel %vm2732, %v5050, %v5049
      %v5052 = vperm.slane %v4728, %v2734
      %v5053 = vsel %vm2736, %v5052, %v5051
      %v5054 = vperm.slane %v4731, %v2738
      %v5055 = vsel %vm2740, %v5054, %v5053
      %v5056 = vperm.slane %v4734, %v2742
      %v5057 = vsel %vm2744, %v5056, %v5055
      %v5058 = vperm.slane %v4737, %v2746
      %v5059 = vsel %vm2748, %v5058, %v5057
      %v5060 = vperm.slane %v4740, %v2750
      %v5061 = vsel %vm2752, %v5060, %v5059
      %v5062 = vperm.slane %v4743, %v2754
      %v5063 = vsel %vm2756, %v5062, %v5061
      %v5064 = vperm.slane %v4746, %v2758
      %v5065 = vsel %vm2760, %v5064, %v5063
      %v5066 = vperm.slane %v4749, %v2762
      %v5067 = vsel %vm2764, %v5066, %v5065
      %v5068 = vperm.slane %v4752, %v2766
      %v5069 = vsel %vm2768, %v5068, %v5067
      %v5070 = vperm.slane %v4755, %v2770
      %v5071 = vsel %vm2772, %v5070, %v5069
      %v5072 = vperm.slane %v4758, %v2712
      %v5073 = vperm.slane %v4761, %v2714
      %v5074 = vsel %vm2716, %v5073, %v5072
      %v5075 = vperm.slane %v4764, %v2718
      %v5076 = vsel %vm2720, %v5075, %v5074
      %v5077 = vperm.slane %v4767, %v2722
      %v5078 = vsel %vm2724, %v5077, %v5076
      %v5079 = vperm.slane %v4770, %v2726
      %v5080 = vsel %vm2728, %v5079, %v5078
      %v5081 = vperm.slane %v4773, %v2730
      %v5082 = vsel %vm2732, %v5081, %v5080
      %v5083 = vperm.slane %v4776, %v2734
      %v5084 = vsel %vm2736, %v5083, %v5082
      %v5085 = vperm.slane %v4779, %v2738
      %v5086 = vsel %vm2740, %v5085, %v5084
      %v5087 = vperm.slane %v4782, %v2742
      %v5088 = vsel %vm2744, %v5087, %v5086
      %v5089 = vperm.slane %v4785, %v2746
      %v5090 = vsel %vm2748, %v5089, %v5088
      %v5091 = vperm.slane %v4788, %v2750
      %v5092 = vsel %vm2752, %v5091, %v5090
      %v5093 = vperm.slane %v4791, %v2754
      %v5094 = vsel %vm2756, %v5093, %v5092
      %v5095 = vperm.slane %v4794, %v2758
      %v5096 = vsel %vm2760, %v5095, %v5094
      %v5097 = vperm.slane %v4797, %v2762
      %v5098 = vsel %vm2764, %v5097, %v5096
      %v5099 = vperm.slane %v4800, %v2766
      %v5100 = vsel %vm2768, %v5099, %v5098
      %v5101 = vperm.slane %v4803, %v2770
      %v5102 = vsel %vm2772, %v5101, %v5100
      %v5103 = vperm.slane %v4806, %v2712
      %v5104 = vperm.slane %v4809, %v2714
      %v5105 = vsel %vm2716, %v5104, %v5103
      %v5106 = vperm.slane %v4812, %v2718
      %v5107 = vsel %vm2720, %v5106, %v5105
      %v5108 = vperm.slane %v4815, %v2722
      %v5109 = vsel %vm2724, %v5108, %v5107
      %v5110 = vperm.slane %v4818, %v2726
      %v5111 = vsel %vm2728, %v5110, %v5109
      %v5112 = vperm.slane %v4821, %v2730
      %v5113 = vsel %vm2732, %v5112, %v5111
      %v5114 = vperm.slane %v4824, %v2734
      %v5115 = vsel %vm2736, %v5114, %v5113
      %v5116 = vperm.slane %v4827, %v2738
      %v5117 = vsel %vm2740, %v5116, %v5115
      %v5118 = vperm.slane %v4830, %v2742
      %v5119 = vsel %vm2744, %v5118, %v5117
      %v5120 = vperm.slane %v4833, %v2746
      %v5121 = vsel %vm2748, %v5120, %v5119
      %v5122 = vperm.slane %v4836, %v2750
      %v5123 = vsel %vm2752, %v5122, %v5121
      %v5124 = vperm.slane %v4839, %v2754
      %v5125 = vsel %vm2756, %v5124, %v5123
      %v5126 = vperm.slane %v4842, %v2758
      %v5127 = vsel %vm2760, %v5126, %v5125
      %v5128 = vperm.slane %v4845, %v2762
      %v5129 = vsel %vm2764, %v5128, %v5127
      %v5130 = vperm.slane %v4848, %v2766
      %v5131 = vsel %vm2768, %v5130, %v5129
      %v5132 = vperm.slane %v4851, %v2770
      %v5133 = vsel %vm2772, %v5132, %v5131
      %v5134 = vperm.slane %v4854, %v2712
      %v5135 = vperm.slane %v4857, %v2714
      %v5136 = vsel %vm2716, %v5135, %v5134
      %v5137 = vperm.slane %v4860, %v2718
      %v5138 = vsel %vm2720, %v5137, %v5136
      %v5139 = vperm.slane %v4863, %v2722
      %v5140 = vsel %vm2724, %v5139, %v5138
      %v5141 = vperm.slane %v4866, %v2726
      %v5142 = vsel %vm2728, %v5141, %v5140
      %v5143 = vperm.slane %v4869, %v2730
      %v5144 = vsel %vm2732, %v5143, %v5142
      %v5145 = vperm.slane %v4872, %v2734
      %v5146 = vsel %vm2736, %v5145, %v5144
      %v5147 = vperm.slane %v4875, %v2738
      %v5148 = vsel %vm2740, %v5147, %v5146
      %v5149 = vperm.slane %v4878, %v2742
      %v5150 = vsel %vm2744, %v5149, %v5148
      %v5151 = vperm.slane %v4881, %v2746
      %v5152 = vsel %vm2748, %v5151, %v5150
      %v5153 = vperm.slane %v4884, %v2750
      %v5154 = vsel %vm2752, %v5153, %v5152
      %v5155 = vperm.slane %v4887, %v2754
      %v5156 = vsel %vm2756, %v5155, %v5154
      %v5157 = vperm.slane %v4890, %v2758
      %v5158 = vsel %vm2760, %v5157, %v5156
      %v5159 = vperm.slane %v4893, %v2762
      %v5160 = vsel %vm2764, %v5159, %v5158
      %v5161 = vperm.slane %v4896, %v2766
      %v5162 = vsel %vm2768, %v5161, %v5160
      %v5163 = vperm.slane %v4899, %v2770
      %v5164 = vsel %vm2772, %v5163, %v5162
      %v5165 = vperm.slane %v4902, %v2712
      %v5166 = vperm.slane %v4905, %v2714
      %v5167 = vsel %vm2716, %v5166, %v5165
      %v5168 = vperm.slane %v4908, %v2718
      %v5169 = vsel %vm2720, %v5168, %v5167
      %v5170 = vperm.slane %v4911, %v2722
      %v5171 = vsel %vm2724, %v5170, %v5169
      %v5172 = vperm.slane %v4914, %v2726
      %v5173 = vsel %vm2728, %v5172, %v5171
      %v5174 = vperm.slane %v4917, %v2730
      %v5175 = vsel %vm2732, %v5174, %v5173
      %v5176 = vperm.slane %v4920, %v2734
      %v5177 = vsel %vm2736, %v5176, %v5175
      %v5178 = vperm.slane %v4923, %v2738
      %v5179 = vsel %vm2740, %v5178, %v5177
      %v5180 = vperm.slane %v4926, %v2742
      %v5181 = vsel %vm2744, %v5180, %v5179
      %v5182 = vperm.slane %v4929, %v2746
      %v5183 = vsel %vm2748, %v5182, %v5181
      %v5184 = vperm.slane %v4932, %v2750
      %v5185 = vsel %vm2752, %v5184, %v5183
      %v5186 = vperm.slane %v4935, %v2754
      %v5187 = vsel %vm2756, %v5186, %v5185
      %v5188 = vperm.slane %v4938, %v2758
      %v5189 = vsel %vm2760, %v5188, %v5187
      %v5190 = vperm.slane %v4941, %v2762
      %v5191 = vsel %vm2764, %v5190, %v5189
      %v5192 = vperm.slane %v4944, %v2766
      %v5193 = vsel %vm2768, %v5192, %v5191
      %v5194 = vperm.slane %v4947, %v2770
      %v5195 = vsel %vm2772, %v5194, %v5193
      %v5196 = vsel %vm2991, %v5009, %v4978
      %v5197 = vsel %vm2993, %v5040, %v5196
      %v5198 = vsel %vm2995, %v5071, %v5197
      %v5199 = vsel %vm2997, %v5102, %v5198
      %v5200 = vsel %vm2999, %v5133, %v5199
      %v5201 = vsel %vm3001, %v5164, %v5200
      %v5202 = vsel %vm3003, %v5195, %v5201
      %5204 = vst [vmem:[#allocation8] sm:$0xff] %v5202
      %v5205 = vld [vmem:[%s2] sm:$0xf]
      %v5206 = vld [vmem:[%s2 + $0x4] sm:$0xf]
      %v5207 = vld [vmem:[%s2 + $0x8] sm:$0xf]
      %v5208 = vld [vmem:[%s2 + $0xc] sm:$0xf]
      %v5209 = vld [vmem:[%s2 + $0x10] sm:$0xf]
      %v5210 = vld [vmem:[%s2 + $0x14] sm:$0xf]
      %v5211 = vld [vmem:[%s2 + $0x18] sm:$0xf]
      %v5212 = vld [vmem:[%s2 + $0x1c] sm:$0xf]
      %v5213 = vld [vmem:[%s2 + $0x20] sm:$0xf]
      %v5214 = vld [vmem:[%s2 + $0x24] sm:$0xf]
      %v5215 = vld [vmem:[%s2 + $0x28] sm:$0xf]
      %v5216 = vld [vmem:[%s2 + $0x2c] sm:$0xf]
      %v5217 = vld [vmem:[%s2 + $0x30] sm:$0xf]
      %v5218 = vld [vmem:[%s2 + $0x34] sm:$0xf]
      %v5219 = vld [vmem:[%s2 + $0x38] sm:$0xf]
      %v5220 = vld [vmem:[%s2 + $0x3c] sm:$0xf]
      %v5221 = vld [vmem:[%s2 + $0x40] sm:$0xf]
      %v5222 = vld [vmem:[%s2 + $0x44] sm:$0xf]
      %v5223 = vld [vmem:[%s2 + $0x48] sm:$0xf]
      %v5224 = vld [vmem:[%s2 + $0x4c] sm:$0xf]
      %v5225 = vld [vmem:[%s2 + $0x50] sm:$0xf]
      %v5226 = vld [vmem:[%s2 + $0x54] sm:$0xf]
      %v5227 = vld [vmem:[%s2 + $0x58] sm:$0xf]
      %v5228 = vld [vmem:[%s2 + $0x5c] sm:$0xf]
      %v5229 = vld [vmem:[%s2 + $0x60] sm:$0xf]
      %v5230 = vld [vmem:[%s2 + $0x64] sm:$0xf]
      %v5231 = vld [vmem:[%s2 + $0x68] sm:$0xf]
      %v5232 = vld [vmem:[%s2 + $0x6c] sm:$0xf]
      %v5233 = vld [vmem:[%s2 + $0x70] sm:$0xf]
      %v5234 = vld [vmem:[%s2 + $0x74] sm:$0xf]
      %v5235 = vld [vmem:[%s2 + $0x78] sm:$0xf]
      %v5236 = vld [vmem:[%s2 + $0x7c] sm:$0xf]
      %v5237 = vld [vmem:[%s2 + $0x80] sm:$0xf]
      %v5238 = vld [vmem:[%s2 + $0x84] sm:$0xf]
      %v5239 = vld [vmem:[%s2 + $0x88] sm:$0xf]
      %v5240 = vld [vmem:[%s2 + $0x8c] sm:$0xf]
      %v5241 = vld [vmem:[%s2 + $0x90] sm:$0xf]
      %v5242 = vld [vmem:[%s2 + $0x94] sm:$0xf]
      %v5243 = vld [vmem:[%s2 + $0x98] sm:$0xf]
      %v5244 = vld [vmem:[%s2 + $0x9c] sm:$0xf]
      %v5245 = vld [vmem:[%s2 + $0xa0] sm:$0xf]
      %v5246 = vld [vmem:[%s2 + $0xa4] sm:$0xf]
      %v5247 = vld [vmem:[%s2 + $0xa8] sm:$0xf]
      %v5248 = vld [vmem:[%s2 + $0xac] sm:$0xf]
      %v5249 = vld [vmem:[%s2 + $0xb0] sm:$0xf]
      %v5250 = vld [vmem:[%s2 + $0xb4] sm:$0xf]
      %v5251 = vld [vmem:[%s2 + $0xb8] sm:$0xf]
      %v5252 = vld [vmem:[%s2 + $0xbc] sm:$0xf]
      %v5253 = vld [vmem:[%s2 + $0xc0] sm:$0xf]
      %v5254 = vld [vmem:[%s2 + $0xc4] sm:$0xf]
      %v5255 = vld [vmem:[%s2 + $0xc8] sm:$0xf]
      %v5256 = vld [vmem:[%s2 + $0xcc] sm:$0xf]
      %v5257 = vld [vmem:[%s2 + $0xd0] sm:$0xf]
      %v5258 = vld [vmem:[%s2 + $0xd4] sm:$0xf]
      %v5259 = vld [vmem:[%s2 + $0xd8] sm:$0xf]
      %v5260 = vld [vmem:[%s2 + $0xdc] sm:$0xf]
      %v5261 = vld [vmem:[%s2 + $0xe0] sm:$0xf]
      %v5262 = vld [vmem:[%s2 + $0xe4] sm:$0xf]
      %v5263 = vld [vmem:[%s2 + $0xe8] sm:$0xf]
      %v5264 = vld [vmem:[%s2 + $0xec] sm:$0xf]
      %v5265 = vld [vmem:[%s2 + $0xf0] sm:$0xf]
      %v5266 = vld [vmem:[%s2 + $0xf4] sm:$0xf]
      %v5267 = vld [vmem:[%s2 + $0xf8] sm:$0xf]
      %v5268 = vld [vmem:[%s2 + $0xfc] sm:$0xf]
      %v5269 = vld [vmem:[%s2 + $0x100] sm:$0xf]
      %v5270 = vld [vmem:[%s2 + $0x104] sm:$0xf]
      %v5271 = vld [vmem:[%s2 + $0x108] sm:$0xf]
      %v5272 = vld [vmem:[%s2 + $0x10c] sm:$0xf]
      %v5273 = vld [vmem:[%s2 + $0x110] sm:$0xf]
      %v5274 = vld [vmem:[%s2 + $0x114] sm:$0xf]
      %v5275 = vld [vmem:[%s2 + $0x118] sm:$0xf]
      %v5276 = vld [vmem:[%s2 + $0x11c] sm:$0xf]
      %v5277 = vld [vmem:[%s2 + $0x120] sm:$0xf]
      %v5278 = vld [vmem:[%s2 + $0x124] sm:$0xf]
      %v5279 = vld [vmem:[%s2 + $0x128] sm:$0xf]
      %v5280 = vld [vmem:[%s2 + $0x12c] sm:$0xf]
      %v5281 = vld [vmem:[%s2 + $0x130] sm:$0xf]
      %v5282 = vld [vmem:[%s2 + $0x134] sm:$0xf]
      %v5283 = vld [vmem:[%s2 + $0x138] sm:$0xf]
      %v5284 = vld [vmem:[%s2 + $0x13c] sm:$0xf]
      %v5285 = vld [vmem:[%s2 + $0x140] sm:$0xf]
      %v5286 = vld [vmem:[%s2 + $0x144] sm:$0xf]
      %v5287 = vld [vmem:[%s2 + $0x148] sm:$0xf]
      %v5288 = vld [vmem:[%s2 + $0x14c] sm:$0xf]
      %v5289 = vld [vmem:[%s2 + $0x150] sm:$0xf]
      %v5290 = vld [vmem:[%s2 + $0x154] sm:$0xf]
      %v5291 = vld [vmem:[%s2 + $0x158] sm:$0xf]
      %v5292 = vld [vmem:[%s2 + $0x15c] sm:$0xf]
      %v5293 = vld [vmem:[%s2 + $0x160] sm:$0xf]
      %v5294 = vld [vmem:[%s2 + $0x164] sm:$0xf]
      %v5295 = vld [vmem:[%s2 + $0x168] sm:$0xf]
      %v5296 = vld [vmem:[%s2 + $0x16c] sm:$0xf]
      %v5297 = vld [vmem:[%s2 + $0x170] sm:$0xf]
      %v5298 = vld [vmem:[%s2 + $0x174] sm:$0xf]
      %v5299 = vld [vmem:[%s2 + $0x178] sm:$0xf]
      %v5300 = vld [vmem:[%s2 + $0x17c] sm:$0xf]
      %v5301 = vld [vmem:[%s2 + $0x180] sm:$0xf]
      %v5302 = vld [vmem:[%s2 + $0x184] sm:$0xf]
      %v5303 = vld [vmem:[%s2 + $0x188] sm:$0xf]
      %v5304 = vld [vmem:[%s2 + $0x18c] sm:$0xf]
      %v5305 = vld [vmem:[%s2 + $0x190] sm:$0xf]
      %v5306 = vld [vmem:[%s2 + $0x194] sm:$0xf]
      %v5307 = vld [vmem:[%s2 + $0x198] sm:$0xf]
      %v5308 = vld [vmem:[%s2 + $0x19c] sm:$0xf]
      %v5309 = vld [vmem:[%s2 + $0x1a0] sm:$0xf]
      %v5310 = vld [vmem:[%s2 + $0x1a4] sm:$0xf]
      %v5311 = vld [vmem:[%s2 + $0x1a8] sm:$0xf]
      %v5312 = vld [vmem:[%s2 + $0x1ac] sm:$0xf]
      %v5313 = vld [vmem:[%s2 + $0x1b0] sm:$0xf]
      %v5314 = vld [vmem:[%s2 + $0x1b4] sm:$0xf]
      %v5315 = vld [vmem:[%s2 + $0x1b8] sm:$0xf]
      %v5316 = vld [vmem:[%s2 + $0x1bc] sm:$0xf]
      %v5317 = vld [vmem:[%s2 + $0x1c0] sm:$0xf]
      %v5318 = vld [vmem:[%s2 + $0x1c4] sm:$0xf]
      %v5319 = vld [vmem:[%s2 + $0x1c8] sm:$0xf]
      %v5320 = vld [vmem:[%s2 + $0x1cc] sm:$0xf]
      %v5321 = vld [vmem:[%s2 + $0x1d0] sm:$0xf]
      %v5322 = vld [vmem:[%s2 + $0x1d4] sm:$0xf]
      %v5323 = vld [vmem:[%s2 + $0x1d8] sm:$0xf]
      %v5324 = vld [vmem:[%s2 + $0x1dc] sm:$0xf]
      %v5325 = vld [vmem:[%s2 + $0x1e0] sm:$0xf]
      %v5326 = vld [vmem:[%s2 + $0x1e4] sm:$0xf]
      %v5327 = vld [vmem:[%s2 + $0x1e8] sm:$0xf]
      %v5328 = vld [vmem:[%s2 + $0x1ec] sm:$0xf]
      %v5329 = vld [vmem:[%s2 + $0x1f0] sm:$0xf]
      %v5330 = vld [vmem:[%s2 + $0x1f4] sm:$0xf]
      %v5331 = vld [vmem:[%s2 + $0x1f8] sm:$0xf]
      %v5332 = vld [vmem:[%s2 + $0x1fc] sm:$0xf]
      %v5333 = vunpack.c.l.bf16 %v5205
      %v5334 = vunpack.c.l.bf16 %v5206
      %v5335 = vunpack.c.l.bf16 %v5207
      %v5336 = vunpack.c.l.bf16 %v5208
      %v5337 = vunpack.c.l.bf16 %v5209
      %v5338 = vunpack.c.l.bf16 %v5210
      %v5339 = vunpack.c.l.bf16 %v5211
      %v5340 = vunpack.c.l.bf16 %v5212
      %v5341 = vunpack.c.l.bf16 %v5213
      %v5342 = vunpack.c.l.bf16 %v5214
      %v5343 = vunpack.c.l.bf16 %v5215
      %v5344 = vunpack.c.l.bf16 %v5216
      %v5345 = vunpack.c.l.bf16 %v5217
      %v5346 = vunpack.c.l.bf16 %v5218
      %v5347 = vunpack.c.l.bf16 %v5219
      %v5348 = vunpack.c.l.bf16 %v5220
      %v5349 = vunpack.c.l.bf16 %v5221
      %v5350 = vunpack.c.l.bf16 %v5222
      %v5351 = vunpack.c.l.bf16 %v5223
      %v5352 = vunpack.c.l.bf16 %v5224
      %v5353 = vunpack.c.l.bf16 %v5225
      %v5354 = vunpack.c.l.bf16 %v5226
      %v5355 = vunpack.c.l.bf16 %v5227
      %v5356 = vunpack.c.l.bf16 %v5228
      %v5357 = vunpack.c.l.bf16 %v5229
      %v5358 = vunpack.c.l.bf16 %v5230
      %v5359 = vunpack.c.l.bf16 %v5231
      %v5360 = vunpack.c.l.bf16 %v5232
      %v5361 = vunpack.c.l.bf16 %v5233
      %v5362 = vunpack.c.l.bf16 %v5234
      %v5363 = vunpack.c.l.bf16 %v5235
      %v5364 = vunpack.c.l.bf16 %v5236
      %v5365 = vunpack.c.l.bf16 %v5237
      %v5366 = vunpack.c.l.bf16 %v5238
      %v5367 = vunpack.c.l.bf16 %v5239
      %v5368 = vunpack.c.l.bf16 %v5240
      %v5369 = vunpack.c.l.bf16 %v5241
      %v5370 = vunpack.c.l.bf16 %v5242
      %v5371 = vunpack.c.l.bf16 %v5243
      %v5372 = vunpack.c.l.bf16 %v5244
      %v5373 = vunpack.c.l.bf16 %v5245
      %v5374 = vunpack.c.l.bf16 %v5246
      %v5375 = vunpack.c.l.bf16 %v5247
      %v5376 = vunpack.c.l.bf16 %v5248
      %v5377 = vunpack.c.l.bf16 %v5249
      %v5378 = vunpack.c.l.bf16 %v5250
      %v5379 = vunpack.c.l.bf16 %v5251
      %v5380 = vunpack.c.l.bf16 %v5252
      %v5381 = vunpack.c.l.bf16 %v5253
      %v5382 = vunpack.c.l.bf16 %v5254
      %v5383 = vunpack.c.l.bf16 %v5255
      %v5384 = vunpack.c.l.bf16 %v5256
      %v5385 = vunpack.c.l.bf16 %v5257
      %v5386 = vunpack.c.l.bf16 %v5258
      %v5387 = vunpack.c.l.bf16 %v5259
      %v5388 = vunpack.c.l.bf16 %v5260
      %v5389 = vunpack.c.l.bf16 %v5261
      %v5390 = vunpack.c.l.bf16 %v5262
      %v5391 = vunpack.c.l.bf16 %v5263
      %v5392 = vunpack.c.l.bf16 %v5264
      %v5393 = vunpack.c.l.bf16 %v5265
      %v5394 = vunpack.c.l.bf16 %v5266
      %v5395 = vunpack.c.l.bf16 %v5267
      %v5396 = vunpack.c.l.bf16 %v5268
      %v5397 = vunpack.c.l.bf16 %v5269
      %v5398 = vunpack.c.l.bf16 %v5270
      %v5399 = vunpack.c.l.bf16 %v5271
      %v5400 = vunpack.c.l.bf16 %v5272
      %v5401 = vunpack.c.l.bf16 %v5273
      %v5402 = vunpack.c.l.bf16 %v5274
      %v5403 = vunpack.c.l.bf16 %v5275
      %v5404 = vunpack.c.l.bf16 %v5276
      %v5405 = vunpack.c.l.bf16 %v5277
      %v5406 = vunpack.c.l.bf16 %v5278
      %v5407 = vunpack.c.l.bf16 %v5279
      %v5408 = vunpack.c.l.bf16 %v5280
      %v5409 = vunpack.c.l.bf16 %v5281
      %v5410 = vunpack.c.l.bf16 %v5282
      %v5411 = vunpack.c.l.bf16 %v5283
      %v5412 = vunpack.c.l.bf16 %v5284
      %v5413 = vunpack.c.l.bf16 %v5285
      %v5414 = vunpack.c.l.bf16 %v5286
      %v5415 = vunpack.c.l.bf16 %v5287
      %v5416 = vunpack.c.l.bf16 %v5288
      %v5417 = vunpack.c.l.bf16 %v5289
      %v5418 = vunpack.c.l.bf16 %v5290
      %v5419 = vunpack.c.l.bf16 %v5291
      %v5420 = vunpack.c.l.bf16 %v5292
      %v5421 = vunpack.c.l.bf16 %v5293
      %v5422 = vunpack.c.l.bf16 %v5294
      %v5423 = vunpack.c.l.bf16 %v5295
      %v5424 = vunpack.c.l.bf16 %v5296
      %v5425 = vunpack.c.l.bf16 %v5297
      %v5426 = vunpack.c.l.bf16 %v5298
      %v5427 = vunpack.c.l.bf16 %v5299
      %v5428 = vunpack.c.l.bf16 %v5300
      %v5429 = vunpack.c.l.bf16 %v5301
      %v5430 = vunpack.c.l.bf16 %v5302
      %v5431 = vunpack.c.l.bf16 %v5303
      %v5432 = vunpack.c.l.bf16 %v5304
      %v5433 = vunpack.c.l.bf16 %v5305
      %v5434 = vunpack.c.l.bf16 %v5306
      %v5435 = vunpack.c.l.bf16 %v5307
      %v5436 = vunpack.c.l.bf16 %v5308
      %v5437 = vunpack.c.l.bf16 %v5309
      %v5438 = vunpack.c.l.bf16 %v5310
      %v5439 = vunpack.c.l.bf16 %v5311
      %v5440 = vunpack.c.l.bf16 %v5312
      %v5441 = vunpack.c.l.bf16 %v5313
      %v5442 = vunpack.c.l.bf16 %v5314
      %v5443 = vunpack.c.l.bf16 %v5315
      %v5444 = vunpack.c.l.bf16 %v5316
      %v5445 = vunpack.c.l.bf16 %v5317
      %v5446 = vunpack.c.l.bf16 %v5318
      %v5447 = vunpack.c.l.bf16 %v5319
      %v5448 = vunpack.c.l.bf16 %v5320
      %v5449 = vunpack.c.l.bf16 %v5321
      %v5450 = vunpack.c.l.bf16 %v5322
      %v5451 = vunpack.c.l.bf16 %v5323
      %v5452 = vunpack.c.l.bf16 %v5324
      %v5453 = vunpack.c.l.bf16 %v5325
      %v5454 = vunpack.c.l.bf16 %v5326
      %v5455 = vunpack.c.l.bf16 %v5327
      %v5456 = vunpack.c.l.bf16 %v5328
      %v5457 = vunpack.c.l.bf16 %v5329
      %v5458 = vunpack.c.l.bf16 %v5330
      %v5459 = vunpack.c.l.bf16 %v5331
      %v5460 = vunpack.c.l.bf16 %v5332
      %v5589 = vmul.f32 %v4566, %v5333
      %v5590 = vmul.f32 %v4569, %v5334
      %v5591 = vmul.f32 %v4572, %v5335
      %v5592 = vmul.f32 %v4575, %v5336
      %v5593 = vmul.f32 %v4578, %v5337
      %v5594 = vmul.f32 %v4581, %v5338
      %v5595 = vmul.f32 %v4584, %v5339
      %v5596 = vmul.f32 %v4587, %v5340
      %v5597 = vmul.f32 %v4590, %v5341
      %v5598 = vmul.f32 %v4593, %v5342
      %v5599 = vmul.f32 %v4596, %v5343
      %v5600 = vmul.f32 %v4599, %v5344
      %v5601 = vmul.f32 %v4602, %v5345
      %v5602 = vmul.f32 %v4605, %v5346
      %v5603 = vmul.f32 %v4608, %v5347
      %v5604 = vmul.f32 %v4611, %v5348
      %v5605 = vmul.f32 %v4614, %v5349
      %v5606 = vmul.f32 %v4617, %v5350
      %v5607 = vmul.f32 %v4620, %v5351
      %v5608 = vmul.f32 %v4623, %v5352
      %v5609 = vmul.f32 %v4626, %v5353
      %v5610 = vmul.f32 %v4629, %v5354
      %v5611 = vmul.f32 %v4632, %v5355
      %v5612 = vmul.f32 %v4635, %v5356
      %v5613 = vmul.f32 %v4638, %v5357
      %v5614 = vmul.f32 %v4641, %v5358
      %v5615 = vmul.f32 %v4644, %v5359
      %v5616 = vmul.f32 %v4647, %v5360
      %v5617 = vmul.f32 %v4650, %v5361
      %v5618 = vmul.f32 %v4653, %v5362
      %v5619 = vmul.f32 %v4656, %v5363
      %v5620 = vmul.f32 %v4659, %v5364
      %v5621 = vmul.f32 %v4662, %v5365
      %v5622 = vmul.f32 %v4665, %v5366
      %v5623 = vmul.f32 %v4668, %v5367
      %v5624 = vmul.f32 %v4671, %v5368
      %v5625 = vmul.f32 %v4674, %v5369
      %v5626 = vmul.f32 %v4677, %v5370
      %v5627 = vmul.f32 %v4680, %v5371
      %v5628 = vmul.f32 %v4683, %v5372
      %v5629 = vmul.f32 %v4686, %v5373
      %v5630 = vmul.f32 %v4689, %v5374
      %v5631 = vmul.f32 %v4692, %v5375
      %v5632 = vmul.f32 %v4695, %v5376
      %v5633 = vmul.f32 %v4698, %v5377
      %v5634 = vmul.f32 %v4701, %v5378
      %v5635 = vmul.f32 %v4704, %v5379
      %v5636 = vmul.f32 %v4707, %v5380
      %v5637 = vmul.f32 %v4710, %v5381
      %v5638 = vmul.f32 %v4713, %v5382
      %v5639 = vmul.f32 %v4716, %v5383
      %v5640 = vmul.f32 %v4719, %v5384
      %v5641 = vmul.f32 %v4722, %v5385
      %v5642 = vmul.f32 %v4725, %v5386
      %v5643 = vmul.f32 %v4728, %v5387
      %v5644 = vmul.f32 %v4731, %v5388
      %v5645 = vmul.f32 %v4734, %v5389
      %v5646 = vmul.f32 %v4737, %v5390
      %v5647 = vmul.f32 %v4740, %v5391
      %v5648 = vmul.f32 %v4743, %v5392
      %v5649 = vmul.f32 %v4746, %v5393
      %v5650 = vmul.f32 %v4749, %v5394
      %v5651 = vmul.f32 %v4752, %v5395
      %v5652 = vmul.f32 %v4755, %v5396
      %v5653 = vmul.f32 %v4758, %v5397
      %v5654 = vmul.f32 %v4761, %v5398
      %v5655 = vmul.f32 %v4764, %v5399
      %v5656 = vmul.f32 %v4767, %v5400
      %v5657 = vmul.f32 %v4770, %v5401
      %v5658 = vmul.f32 %v4773, %v5402
      %v5659 = vmul.f32 %v4776, %v5403
      %v5660 = vmul.f32 %v4779, %v5404
      %v5661 = vmul.f32 %v4782, %v5405
      %v5662 = vmul.f32 %v4785, %v5406
      %v5663 = vmul.f32 %v4788, %v5407
      %v5664 = vmul.f32 %v4791, %v5408
      %v5665 = vmul.f32 %v4794, %v5409
      %v5666 = vmul.f32 %v4797, %v5410
      %v5667 = vmul.f32 %v4800, %v5411
      %v5668 = vmul.f32 %v4803, %v5412
      %v5669 = vmul.f32 %v4806, %v5413
      %v5670 = vmul.f32 %v4809, %v5414
      %v5671 = vmul.f32 %v4812, %v5415
      %v5672 = vmul.f32 %v4815, %v5416
      %v5673 = vmul.f32 %v4818, %v5417
      %v5674 = vmul.f32 %v4821, %v5418
      %v5675 = vmul.f32 %v4824, %v5419
      %v5676 = vmul.f32 %v4827, %v5420
      %v5677 = vmul.f32 %v4830, %v5421
      %v5678 = vmul.f32 %v4833, %v5422
      %v5679 = vmul.f32 %v4836, %v5423
      %v5680 = vmul.f32 %v4839, %v5424
      %v5681 = vmul.f32 %v4842, %v5425
      %v5682 = vmul.f32 %v4845, %v5426
      %v5683 = vmul.f32 %v4848, %v5427
      %v5684 = vmul.f32 %v4851, %v5428
      %v5685 = vmul.f32 %v4854, %v5429
      %v5686 = vmul.f32 %v4857, %v5430
      %v5687 = vmul.f32 %v4860, %v5431
      %v5688 = vmul.f32 %v4863, %v5432
      %v5689 = vmul.f32 %v4866, %v5433
      %v5690 = vmul.f32 %v4869, %v5434
      %v5691 = vmul.f32 %v4872, %v5435
      %v5692 = vmul.f32 %v4875, %v5436
      %v5693 = vmul.f32 %v4878, %v5437
      %v5694 = vmul.f32 %v4881, %v5438
      %v5695 = vmul.f32 %v4884, %v5439
      %v5696 = vmul.f32 %v4887, %v5440
      %v5697 = vmul.f32 %v4890, %v5441
      %v5698 = vmul.f32 %v4893, %v5442
      %v5699 = vmul.f32 %v4896, %v5443
      %v5700 = vmul.f32 %v4899, %v5444
      %v5701 = vmul.f32 %v4902, %v5445
      %v5702 = vmul.f32 %v4905, %v5446
      %v5703 = vmul.f32 %v4908, %v5447
      %v5704 = vmul.f32 %v4911, %v5448
      %v5705 = vmul.f32 %v4914, %v5449
      %v5706 = vmul.f32 %v4917, %v5450
      %v5707 = vmul.f32 %v4920, %v5451
      %v5708 = vmul.f32 %v4923, %v5452
      %v5709 = vmul.f32 %v4926, %v5453
      %v5710 = vmul.f32 %v4929, %v5454
      %v5711 = vmul.f32 %v4932, %v5455
      %v5712 = vmul.f32 %v4935, %v5456
      %v5713 = vmul.f32 %v4938, %v5457
      %v5714 = vmul.f32 %v4941, %v5458
      %v5715 = vmul.f32 %v4944, %v5459
      %v5716 = vmul.f32 %v4947, %v5460
      %v5717 = vsel %vm96, %v5589, 0.0
      %v5718 = vsel %vm96, %v5590, 0.0
      %v5719 = vadd.f32 %v5717, %v5718
      %v5720 = vsel %vm96, %v5591, 0.0
      %v5721 = vadd.f32 %v5719, %v5720
      %v5722 = vsel %vm96, %v5592, 0.0
      %v5723 = vadd.f32 %v5721, %v5722
      %v5724 = vsel %vm96, %v5593, 0.0
      %v5725 = vadd.f32 %v5723, %v5724
      %v5726 = vsel %vm96, %v5594, 0.0
      %v5727 = vadd.f32 %v5725, %v5726
      %v5728 = vsel %vm96, %v5595, 0.0
      %v5729 = vadd.f32 %v5727, %v5728
      %v5730 = vsel %vm96, %v5596, 0.0
      %v5731 = vadd.f32 %v5729, %v5730
      %v5732 = vsel %vm96, %v5597, 0.0
      %v5733 = vadd.f32 %v5731, %v5732
      %v5734 = vsel %vm96, %v5598, 0.0
      %v5735 = vadd.f32 %v5733, %v5734
      %v5736 = vsel %vm96, %v5599, 0.0
      %v5737 = vadd.f32 %v5735, %v5736
      %v5738 = vsel %vm96, %v5600, 0.0
      %v5739 = vadd.f32 %v5737, %v5738
      %v5740 = vsel %vm96, %v5601, 0.0
      %v5741 = vadd.f32 %v5739, %v5740
      %v5742 = vsel %vm96, %v5602, 0.0
      %v5743 = vadd.f32 %v5741, %v5742
      %v5744 = vsel %vm96, %v5603, 0.0
      %v5745 = vadd.f32 %v5743, %v5744
      %v5746 = vsel %vm96, %v5604, 0.0
      %v5747 = vadd.f32 %v5745, %v5746
      %v5748 = vrot.slane %v5747, 4
      %v5749 = vadd.f32 %v5747, %v5748
      %v5750 = vrot.slane %v5749, 2
      %v5751 = vadd.f32 %v5749, %v5750
      %v5752 = vrot.slane %v5751, 1
      %v5753 = vadd.f32 %v5751, %v5752
      %v5754 = vsel %vm96, %v5605, 0.0
      %v5755 = vsel %vm96, %v5606, 0.0
      %v5756 = vadd.f32 %v5754, %v5755
      %v5757 = vsel %vm96, %v5607, 0.0
      %v5758 = vadd.f32 %v5756, %v5757
      %v5759 = vsel %vm96, %v5608, 0.0
      %v5760 = vadd.f32 %v5758, %v5759
      %v5761 = vsel %vm96, %v5609, 0.0
      %v5762 = vadd.f32 %v5760, %v5761
      %v5763 = vsel %vm96, %v5610, 0.0
      %v5764 = vadd.f32 %v5762, %v5763
      %v5765 = vsel %vm96, %v5611, 0.0
      %v5766 = vadd.f32 %v5764, %v5765
      %v5767 = vsel %vm96, %v5612, 0.0
      %v5768 = vadd.f32 %v5766, %v5767
      %v5769 = vsel %vm96, %v5613, 0.0
      %v5770 = vadd.f32 %v5768, %v5769
      %v5771 = vsel %vm96, %v5614, 0.0
      %v5772 = vadd.f32 %v5770, %v5771
      %v5773 = vsel %vm96, %v5615, 0.0
      %v5774 = vadd.f32 %v5772, %v5773
      %v5775 = vsel %vm96, %v5616, 0.0
      %v5776 = vadd.f32 %v5774, %v5775
      %v5777 = vsel %vm96, %v5617, 0.0
      %v5778 = vadd.f32 %v5776, %v5777
      %v5779 = vsel %vm96, %v5618, 0.0
      %v5780 = vadd.f32 %v5778, %v5779
      %v5781 = vsel %vm96, %v5619, 0.0
      %v5782 = vadd.f32 %v5780, %v5781
      %v5783 = vsel %vm96, %v5620, 0.0
      %v5784 = vadd.f32 %v5782, %v5783
      %v5785 = vrot.slane %v5784, 4
      %v5786 = vadd.f32 %v5784, %v5785
      %v5787 = vrot.slane %v5786, 2
      %v5788 = vadd.f32 %v5786, %v5787
      %v5789 = vrot.slane %v5788, 1
      %v5790 = vadd.f32 %v5788, %v5789
      %v5791 = vsel %vm96, %v5621, 0.0
      %v5792 = vsel %vm96, %v5622, 0.0
      %v5793 = vadd.f32 %v5791, %v5792
      %v5794 = vsel %vm96, %v5623, 0.0
      %v5795 = vadd.f32 %v5793, %v5794
      %v5796 = vsel %vm96, %v5624, 0.0
      %v5797 = vadd.f32 %v5795, %v5796
      %v5798 = vsel %vm96, %v5625, 0.0
      %v5799 = vadd.f32 %v5797, %v5798
      %v5800 = vsel %vm96, %v5626, 0.0
      %v5801 = vadd.f32 %v5799, %v5800
      %v5802 = vsel %vm96, %v5627, 0.0
      %v5803 = vadd.f32 %v5801, %v5802
      %v5804 = vsel %vm96, %v5628, 0.0
      %v5805 = vadd.f32 %v5803, %v5804
      %v5806 = vsel %vm96, %v5629, 0.0
      %v5807 = vadd.f32 %v5805, %v5806
      %v5808 = vsel %vm96, %v5630, 0.0
      %v5809 = vadd.f32 %v5807, %v5808
      %v5810 = vsel %vm96, %v5631, 0.0
      %v5811 = vadd.f32 %v5809, %v5810
      %v5812 = vsel %vm96, %v5632, 0.0
      %v5813 = vadd.f32 %v5811, %v5812
      %v5814 = vsel %vm96, %v5633, 0.0
      %v5815 = vadd.f32 %v5813, %v5814
      %v5816 = vsel %vm96, %v5634, 0.0
      %v5817 = vadd.f32 %v5815, %v5816
      %v5818 = vsel %vm96, %v5635, 0.0
      %v5819 = vadd.f32 %v5817, %v5818
      %v5820 = vsel %vm96, %v5636, 0.0
      %v5821 = vadd.f32 %v5819, %v5820
      %v5822 = vrot.slane %v5821, 4
      %v5823 = vadd.f32 %v5821, %v5822
      %v5824 = vrot.slane %v5823, 2
      %v5825 = vadd.f32 %v5823, %v5824
      %v5826 = vrot.slane %v5825, 1
      %v5827 = vadd.f32 %v5825, %v5826
      %v5828 = vsel %vm96, %v5637, 0.0
      %v5829 = vsel %vm96, %v5638, 0.0
      %v5830 = vadd.f32 %v5828, %v5829
      %v5831 = vsel %vm96, %v5639, 0.0
      %v5832 = vadd.f32 %v5830, %v5831
      %v5833 = vsel %vm96, %v5640, 0.0
      %v5834 = vadd.f32 %v5832, %v5833
      %v5835 = vsel %vm96, %v5641, 0.0
      %v5836 = vadd.f32 %v5834, %v5835
      %v5837 = vsel %vm96, %v5642, 0.0
      %v5838 = vadd.f32 %v5836, %v5837
      %v5839 = vsel %vm96, %v5643, 0.0
      %v5840 = vadd.f32 %v5838, %v5839
      %v5841 = vsel %vm96, %v5644, 0.0
      %v5842 = vadd.f32 %v5840, %v5841
      %v5843 = vsel %vm96, %v5645, 0.0
      %v5844 = vadd.f32 %v5842, %v5843
      %v5845 = vsel %vm96, %v5646, 0.0
      %v5846 = vadd.f32 %v5844, %v5845
      %v5847 = vsel %vm96, %v5647, 0.0
      %v5848 = vadd.f32 %v5846, %v5847
      %v5849 = vsel %vm96, %v5648, 0.0
      %v5850 = vadd.f32 %v5848, %v5849
      %v5851 = vsel %vm96, %v5649, 0.0
      %v5852 = vadd.f32 %v5850, %v5851
      %v5853 = vsel %vm96, %v5650, 0.0
      %v5854 = vadd.f32 %v5852, %v5853
      %v5855 = vsel %vm96, %v5651, 0.0
      %v5856 = vadd.f32 %v5854, %v5855
      %v5857 = vsel %vm96, %v5652, 0.0
      %v5858 = vadd.f32 %v5856, %v5857
      %v5859 = vrot.slane %v5858, 4
      %v5860 = vadd.f32 %v5858, %v5859
      %v5861 = vrot.slane %v5860, 2
      %v5862 = vadd.f32 %v5860, %v5861
      %v5863 = vrot.slane %v5862, 1
      %v5864 = vadd.f32 %v5862, %v5863
      %v5865 = vsel %vm96, %v5653, 0.0
      %v5866 = vsel %vm96, %v5654, 0.0
      %v5867 = vadd.f32 %v5865, %v5866
      %v5868 = vsel %vm96, %v5655, 0.0
      %v5869 = vadd.f32 %v5867, %v5868
      %v5870 = vsel %vm96, %v5656, 0.0
      %v5871 = vadd.f32 %v5869, %v5870
      %v5872 = vsel %vm96, %v5657, 0.0
      %v5873 = vadd.f32 %v5871, %v5872
      %v5874 = vsel %vm96, %v5658, 0.0
      %v5875 = vadd.f32 %v5873, %v5874
      %v5876 = vsel %vm96, %v5659, 0.0
      %v5877 = vadd.f32 %v5875, %v5876
      %v5878 = vsel %vm96, %v5660, 0.0
      %v5879 = vadd.f32 %v5877, %v5878
      %v5880 = vsel %vm96, %v5661, 0.0
      %v5881 = vadd.f32 %v5879, %v5880
      %v5882 = vsel %vm96, %v5662, 0.0
      %v5883 = vadd.f32 %v5881, %v5882
      %v5884 = vsel %vm96, %v5663, 0.0
      %v5885 = vadd.f32 %v5883, %v5884
      %v5886 = vsel %vm96, %v5664, 0.0
      %v5887 = vadd.f32 %v5885, %v5886
      %v5888 = vsel %vm96, %v5665, 0.0
      %v5889 = vadd.f32 %v5887, %v5888
      %v5890 = vsel %vm96, %v5666, 0.0
      %v5891 = vadd.f32 %v5889, %v5890
      %v5892 = vsel %vm96, %v5667, 0.0
      %v5893 = vadd.f32 %v5891, %v5892
      %v5894 = vsel %vm96, %v5668, 0.0
      %v5895 = vadd.f32 %v5893, %v5894
      %v5896 = vrot.slane %v5895, 4
      %v5897 = vadd.f32 %v5895, %v5896
      %v5898 = vrot.slane %v5897, 2
      %v5899 = vadd.f32 %v5897, %v5898
      %v5900 = vrot.slane %v5899, 1
      %v5901 = vadd.f32 %v5899, %v5900
      %v5902 = vsel %vm96, %v5669, 0.0
      %v5903 = vsel %vm96, %v5670, 0.0
      %v5904 = vadd.f32 %v5902, %v5903
      %v5905 = vsel %vm96, %v5671, 0.0
      %v5906 = vadd.f32 %v5904, %v5905
      %v5907 = vsel %vm96, %v5672, 0.0
      %v5908 = vadd.f32 %v5906, %v5907
      %v5909 = vsel %vm96, %v5673, 0.0
      %v5910 = vadd.f32 %v5908, %v5909
      %v5911 = vsel %vm96, %v5674, 0.0
      %v5912 = vadd.f32 %v5910, %v5911
      %v5913 = vsel %vm96, %v5675, 0.0
      %v5914 = vadd.f32 %v5912, %v5913
      %v5915 = vsel %vm96, %v5676, 0.0
      %v5916 = vadd.f32 %v5914, %v5915
      %v5917 = vsel %vm96, %v5677, 0.0
      %v5918 = vadd.f32 %v5916, %v5917
      %v5919 = vsel %vm96, %v5678, 0.0
      %v5920 = vadd.f32 %v5918, %v5919
      %v5921 = vsel %vm96, %v5679, 0.0
      %v5922 = vadd.f32 %v5920, %v5921
      %v5923 = vsel %vm96, %v5680, 0.0
      %v5924 = vadd.f32 %v5922, %v5923
      %v5925 = vsel %vm96, %v5681, 0.0
      %v5926 = vadd.f32 %v5924, %v5925
      %v5927 = vsel %vm96, %v5682, 0.0
      %v5928 = vadd.f32 %v5926, %v5927
      %v5929 = vsel %vm96, %v5683, 0.0
      %v5930 = vadd.f32 %v5928, %v5929
      %v5931 = vsel %vm96, %v5684, 0.0
      %v5932 = vadd.f32 %v5930, %v5931
      %v5933 = vrot.slane %v5932, 4
      %v5934 = vadd.f32 %v5932, %v5933
      %v5935 = vrot.slane %v5934, 2
      %v5936 = vadd.f32 %v5934, %v5935
      %v5937 = vrot.slane %v5936, 1
      %v5938 = vadd.f32 %v5936, %v5937
      %v5939 = vsel %vm96, %v5685, 0.0
      %v5940 = vsel %vm96, %v5686, 0.0
      %v5941 = vadd.f32 %v5939, %v5940
      %v5942 = vsel %vm96, %v5687, 0.0
      %v5943 = vadd.f32 %v5941, %v5942
      %v5944 = vsel %vm96, %v5688, 0.0
      %v5945 = vadd.f32 %v5943, %v5944
      %v5946 = vsel %vm96, %v5689, 0.0
      %v5947 = vadd.f32 %v5945, %v5946
      %v5948 = vsel %vm96, %v5690, 0.0
      %v5949 = vadd.f32 %v5947, %v5948
      %v5950 = vsel %vm96, %v5691, 0.0
      %v5951 = vadd.f32 %v5949, %v5950
      %v5952 = vsel %vm96, %v5692, 0.0
      %v5953 = vadd.f32 %v5951, %v5952
      %v5954 = vsel %vm96, %v5693, 0.0
      %v5955 = vadd.f32 %v5953, %v5954
      %v5956 = vsel %vm96, %v5694, 0.0
      %v5957 = vadd.f32 %v5955, %v5956
      %v5958 = vsel %vm96, %v5695, 0.0
      %v5959 = vadd.f32 %v5957, %v5958
      %v5960 = vsel %vm96, %v5696, 0.0
      %v5961 = vadd.f32 %v5959, %v5960
      %v5962 = vsel %vm96, %v5697, 0.0
      %v5963 = vadd.f32 %v5961, %v5962
      %v5964 = vsel %vm96, %v5698, 0.0
      %v5965 = vadd.f32 %v5963, %v5964
      %v5966 = vsel %vm96, %v5699, 0.0
      %v5967 = vadd.f32 %v5965, %v5966
      %v5968 = vsel %vm96, %v5700, 0.0
      %v5969 = vadd.f32 %v5967, %v5968
      %v5970 = vrot.slane %v5969, 4
      %v5971 = vadd.f32 %v5969, %v5970
      %v5972 = vrot.slane %v5971, 2
      %v5973 = vadd.f32 %v5971, %v5972
      %v5974 = vrot.slane %v5973, 1
      %v5975 = vadd.f32 %v5973, %v5974
      %v5976 = vsel %vm96, %v5701, 0.0
      %v5977 = vsel %vm96, %v5702, 0.0
      %v5978 = vadd.f32 %v5976, %v5977
      %v5979 = vsel %vm96, %v5703, 0.0
      %v5980 = vadd.f32 %v5978, %v5979
      %v5981 = vsel %vm96, %v5704, 0.0
      %v5982 = vadd.f32 %v5980, %v5981
      %v5983 = vsel %vm96, %v5705, 0.0
      %v5984 = vadd.f32 %v5982, %v5983
      %v5985 = vsel %vm96, %v5706, 0.0
      %v5986 = vadd.f32 %v5984, %v5985
      %v5987 = vsel %vm96, %v5707, 0.0
      %v5988 = vadd.f32 %v5986, %v5987
      %v5989 = vsel %vm96, %v5708, 0.0
      %v5990 = vadd.f32 %v5988, %v5989
      %v5991 = vsel %vm96, %v5709, 0.0
      %v5992 = vadd.f32 %v5990, %v5991
      %v5993 = vsel %vm96, %v5710, 0.0
      %v5994 = vadd.f32 %v5992, %v5993
      %v5995 = vsel %vm96, %v5711, 0.0
      %v5996 = vadd.f32 %v5994, %v5995
      %v5997 = vsel %vm96, %v5712, 0.0
      %v5998 = vadd.f32 %v5996, %v5997
      %v5999 = vsel %vm96, %v5713, 0.0
      %v6000 = vadd.f32 %v5998, %v5999
      %v6001 = vsel %vm96, %v5714, 0.0
      %v6002 = vadd.f32 %v6000, %v6001
      %v6003 = vsel %vm96, %v5715, 0.0
      %v6004 = vadd.f32 %v6002, %v6003
      %v6005 = vsel %vm96, %v5716, 0.0
      %v6006 = vadd.f32 %v6004, %v6005
      %v6007 = vrot.slane %v6006, 4
      %v6008 = vadd.f32 %v6006, %v6007
      %v6009 = vrot.slane %v6008, 2
      %v6010 = vadd.f32 %v6008, %v6009
      %v6011 = vrot.slane %v6010, 1
      %v6012 = vadd.f32 %v6010, %v6011
      %v6013 = vld [vmem:[%s0] sm:$0xf]
      %vm6014 = vcmask 257024
      %6015 = vst.msk [vmem:[#allocation3] sm:$0xf] %vm6014, %v6013
      %v6016 = vpack.c.bf16 %v5753, %v5753
      %v6017 = vpack.c.bf16 %v5790, %v5790
      %v6018 = vpack.c.bf16 %v5827, %v5827
      %v6019 = vpack.c.bf16 %v5864, %v5864
      %v6020 = vpack.c.bf16 %v5901, %v5901
      %v6021 = vpack.c.bf16 %v5938, %v5938
      %v6022 = vpack.c.bf16 %v5975, %v5975
      %v6023 = vpack.c.bf16 %v6012, %v6012
      %v6032 = vunpack.c.l.b16 %v6016
      %v6033 = vunpack.c.l.b16 %v6017
      %v6034 = vunpack.c.l.b16 %v6018
      %v6035 = vunpack.c.l.b16 %v6019
      %v6036 = vunpack.c.l.b16 %v6020
      %v6037 = vunpack.c.l.b16 %v6021
      %v6038 = vunpack.c.l.b16 %v6022
      %v6039 = vunpack.c.l.b16 %v6023
      %v6040 = vsel %vm2991, %v6033, %v6032
      %v6041 = vsel %vm2993, %v6034, %v6040
      %v6042 = vsel %vm2995, %v6035, %v6041
      %v6043 = vsel %vm2997, %v6036, %v6042
      %v6044 = vsel %vm2999, %v6037, %v6043
      %v6045 = vsel %vm3001, %v6038, %v6044
      %v6046 = vsel %vm3003, %v6039, %v6045
      %v6047 = vpack.c.b16 %v6046, %v6046
      %6048 = vrot.lane.b32.xlu0 %v6047, 32
      %v6049 = vpop.permute.xlu0 %6048
      %vm6051 = vcmask 519424
      %6052 = vst.msk [vmem:[#allocation3] sm:$0xf] %vm6051, %v6049
      %v6053 = vld [vmem:[#allocation3] sm:$0xf]
      %v6054 = vld [vmem:[%s8] sm:$0xf]
      %v6055 = vld [vmem:[%s8 + $0x4] sm:$0xf]
      %v6056 = vld [vmem:[%s8 + $0x8] sm:$0xf]
      %v6057 = vld [vmem:[%s8 + $0xc] sm:$0xf]
      %v6058 = vld [vmem:[%s8 + $0x10] sm:$0xf]
      %v6059 = vld [vmem:[%s8 + $0x14] sm:$0xf]
      %v6060 = vld [vmem:[%s8 + $0x18] sm:$0xf]
      %v6061 = vld [vmem:[%s8 + $0x1c] sm:$0xf]
      %v6062 = vld [vmem:[%s9] sm:$0x1]
      %v6064 = vperm.slane %v6062, 0
      %v6074 = vunpack.c.l.b16 %v6054
      %v6075 = vunpack.c.l.b16 %v6055
      %v6076 = vunpack.c.l.b16 %v6056
      %v6077 = vunpack.c.l.b16 %v6057
      %v6078 = vunpack.c.l.b16 %v6058
      %v6079 = vunpack.c.l.b16 %v6059
      %v6080 = vunpack.c.l.b16 %v6060
      %v6081 = vunpack.c.l.b16 %v6061
      %v6082 = vpack.c.b16 %v6075, %v6074
      %v6083 = vpack.c.b16 %v6077, %v6076
      %v6084 = vpack.c.b16 %v6079, %v6078
      %v6085 = vpack.c.b16 %v6081, %v6080
      %vm6090 = vcmask 523264
      %v6092 = vsel %vm6090, %v6053, 0
      %6094 = vmatpush.bf16.msra.mxu0 0
      %6095 = vmatpush.bf16.msra.mxu0 0
      %6096 = vmatpush.bf16.msra.mxu0 0
      %6097 = vmatpush.bf16.msra.mxu0 0
      %6098 = vmatpush.bf16.msra.mxu0 %v6085
      %6099 = vmatpush.bf16.msra.mxu0 %v6084
      %6100 = vmatpush.bf16.msra.mxu0 %v6083
      %6101 = vmatpush.bf16.msra.mxu0 %v6082
      %6102 = vmatmul.bf16.gmra.mxu0 %v6092
      %v6103 = vpop.f32.mrf.mxu0
      %v6104 = vadd.f32 %v6064, %v6103
      %v6105 = vpop.f32.mrf.mxu0
      %6106 = vdwg.mxu0
      %v6107 = vld [vmem:[#allocation4] sm:$0xff]
      %v6108 = vpack.c.bf16 %v6104, %v6104
      %6109 = vst.msk [vmem:[#allocation3] sm:$0xf] %vm6014, %v6108
      %v6110 = vpack.c.bf16 %v6107, %v6107
      %6112 = vrot.lane.b32.xlu0 %v6110, 32
      %v6113 = vpop.permute.xlu0 %6112
      %6115 = vst.msk [vmem:[#allocation3] sm:$0xf] %vm6051, %v6113
      %v6116 = vld [vmem:[#allocation3] sm:$0xf]
      %v6117 = vld [vmem:[%s10] sm:$0xf]
      %v6118 = vld [vmem:[%s10 + $0x4] sm:$0xf]
      %v6119 = vld [vmem:[%s10 + $0x8] sm:$0xf]
      %v6120 = vld [vmem:[%s10 + $0xc] sm:$0xf]
      %v6121 = vld [vmem:[%s10 + $0x10] sm:$0xf]
      %v6122 = vld [vmem:[%s10 + $0x14] sm:$0xf]
      %v6123 = vld [vmem:[%s10 + $0x18] sm:$0xf]
      %v6124 = vld [vmem:[%s10 + $0x1c] sm:$0xf]
      %v6125 = vld [vmem:[%s11] sm:$0x1]
      %v6127 = vperm.slane %v6125, 0
      %v6137 = vunpack.c.l.b16 %v6117
      %v6138 = vunpack.c.l.b16 %v6118
      %v6139 = vunpack.c.l.b16 %v6119
      %v6140 = vunpack.c.l.b16 %v6120
      %v6141 = vunpack.c.l.b16 %v6121
      %v6142 = vunpack.c.l.b16 %v6122
      %v6143 = vunpack.c.l.b16 %v6123
      %v6144 = vunpack.c.l.b16 %v6124
      %v6145 = vpack.c.b16 %v6138, %v6137
      %v6146 = vpack.c.b16 %v6140, %v6139
      %v6147 = vpack.c.b16 %v6142, %v6141
      %v6148 = vpack.c.b16 %v6144, %v6143
      %v6154 = vsel %vm6090, %v6116, 0
      %6156 = vmatpush.bf16.msra.mxu0 0
      %6157 = vmatpush.bf16.msra.mxu0 0
      %6158 = vmatpush.bf16.msra.mxu0 0
      %6159 = vmatpush.bf16.msra.mxu0 0
      %6160 = vmatpush.bf16.msra.mxu0 %v6148
      %6161 = vmatpush.bf16.msra.mxu0 %v6147
      %6162 = vmatpush.bf16.msra.mxu0 %v6146
      %6163 = vmatpush.bf16.msra.mxu0 %v6145
      %6164 = vmatmul.bf16.gmra.mxu0 %v6154
      %v6165 = vpop.f32.mrf.mxu0
      %v6166 = vadd.f32 %v6127, %v6165
      %v6167 = vpop.f32.mrf.mxu0
      %6168 = vdwg.mxu0
      %v6169 = vxor.u32 %v6166, 2147483648
      %v6170 = vmul.f32 %v6169, 1.442695
      %v6171 = vpow.pop %v6170
      %v6172 = vadd.f32 %v6171, 1.0
      %v6173 = vrcp.pop %v6172
      %v6174 = vmul.f32 %v6172, %v6173
      %v6175 = vsub.f32 1.0, %v6174
      %v6176 = vmul.f32 %v6173, %v6175
      %v6177 = vadd.f32 %v6173, %v6176
      %vm6178 = vweird.f32 %v6172
      %vm6179 = vweird.f32 %v6173
      %vm6180 = vmor %vm6178, %vm6179
      %v6181 = vsel %vm6180, %v6173, %v6177
      %v6182 = vand.u32 2147483647, %v6172
      %vm6183 = vcmp.eq.f32.partialorder %v6182, 8.507059e+37
      %v6184 = vand.u32 %v6172, 2147483648
      %v6185 = vor.u32 1.1754944e-38, %v6184
      %v6186 = vsel %vm6183, %v6185, %v6181
      %v6187 = vmul.f32 1.0, %v6186
      %v6188 = vsub.f32 %v6187, 1.0
      %6190 = vrot.lane.b32.xlu0 %v6166, 32
      %v6191 = vpop.permute.xlu0 %6190
      %v6193 = vmul.f32 %v6188, %v6191
      %6195 = vrot.lane.b32.xlu0 %v6193, 64
      %v6196 = vpop.permute.xlu0 %6195
      %v6198 = vadd.f32 %v6166, %v6196
      %v6199 = vtanh.pop %v6198
      %v6200 = vsub.f32 1.0, %v6187
      %6202 = vrot.lane.b32.xlu0 %v6199, 96
      %v6203 = vpop.permute.xlu0 %6202
      %v6205 = vmul.f32 %v6200, %v6203
      %6207 = vrot.lane.b32.xlu0 %v6107, 32
      %v6208 = vpop.permute.xlu0 %6207
      %v6210 = vmul.f32 %v6187, %v6208
      %v6211 = vadd.f32 %v6205, %v6210
      %6213 = vrot.lane.b32.xlu0 %v6211, 96
      %v6214 = vpop.permute.xlu0 %6213
      %6216 = vst.msk [vmem:[#allocation7] sm:$0xff] %vm96, %v6214
      %v6217 = vld [vmem:[%s73] sm:$0xff]
      %v6218 = vpack.c.bf16 %v6211, %v6211
      %6220 = vrot.lane.b32.xlu0 %v6218, 96
      %v6221 = vpop.permute.xlu0 %6220
      %6223 = vst.msk [vmem:[#allocation3] sm:$0xf] %vm6014, %v6221
      %v6224 = vpack.c.bf16 %v6217, %v6217
      %6226 = vrot.lane.b32.xlu0 %v6224, 32
      %v6227 = vpop.permute.xlu0 %6226
      %6229 = vst.msk [vmem:[#allocation3] sm:$0xf] %vm6051, %v6227
      %v6230 = vld [vmem:[#allocation3] sm:$0xf]
      %s6231 = scalar_lea.vmem %s10, 32
      %v6232 = vld [vmem:[%s6231] sm:$0xf]
      %v6233 = vld [vmem:[%s6231 + $0x4] sm:$0xf]
      %v6234 = vld [vmem:[%s6231 + $0x8] sm:$0xf]
      %v6235 = vld [vmem:[%s6231 + $0xc] sm:$0xf]
      %v6236 = vld [vmem:[%s6231 + $0x10] sm:$0xf]
      %v6237 = vld [vmem:[%s6231 + $0x14] sm:$0xf]
      %v6238 = vld [vmem:[%s6231 + $0x18] sm:$0xf]
      %v6239 = vld [vmem:[%s6231 + $0x1c] sm:$0xf]
      %s6240 = scalar_lea.vmem %s11, 1
      %v6241 = vld [vmem:[%s6240] sm:$0x1]
      %v6243 = vperm.slane %v6241, 0
      %v6253 = vunpack.c.l.b16 %v6232
      %v6254 = vunpack.c.l.b16 %v6233
      %v6255 = vunpack.c.l.b16 %v6234
      %v6256 = vunpack.c.l.b16 %v6235
      %v6257 = vunpack.c.l.b16 %v6236
      %v6258 = vunpack.c.l.b16 %v6237
      %v6259 = vunpack.c.l.b16 %v6238
      %v6260 = vunpack.c.l.b16 %v6239
      %v6261 = vpack.c.b16 %v6254, %v6253
      %v6262 = vpack.c.b16 %v6256, %v6255
      %v6263 = vpack.c.b16 %v6258, %v6257
      %v6264 = vpack.c.b16 %v6260, %v6259
      %v6270 = vsel %vm6090, %v6230, 0
      %6272 = vmatpush.bf16.msra.mxu0 0
      %6273 = vmatpush.bf16.msra.mxu0 0
      %6274 = vmatpush.bf16.msra.mxu0 0
      %6275 = vmatpush.bf16.msra.mxu0 0
      %6276 = vmatpush.bf16.msra.mxu0 %v6264
      %6277 = vmatpush.bf16.msra.mxu0 %v6263
      %6278 = vmatpush.bf16.msra.mxu0 %v6262
      %6279 = vmatpush.bf16.msra.mxu0 %v6261
      %6280 = vmatmul.bf16.gmra.mxu0 %v6270
      %v6281 = vpop.f32.mrf.mxu0
      %v6282 = vadd.f32 %v6243, %v6281
      %v6283 = vpop.f32.mrf.mxu0
      %6284 = vdwg.mxu0
      %v6285 = vxor.u32 %v6282, 2147483648
      %v6286 = vmul.f32 %v6285, 1.442695
      %v6287 = vpow.pop %v6286
      %v6288 = vadd.f32 %v6287, 1.0
      %v6289 = vrcp.pop %v6288
      %v6290 = vmul.f32 %v6288, %v6289
      %v6291 = vsub.f32 1.0, %v6290
      %v6292 = vmul.f32 %v6289, %v6291
      %v6293 = vadd.f32 %v6289, %v6292
      %vm6294 = vweird.f32 %v6288
      %vm6295 = vweird.f32 %v6289
      %vm6296 = vmor %vm6294, %vm6295
      %v6297 = vsel %vm6296, %v6289, %v6293
      %v6298 = vand.u32 2147483647, %v6288
      %vm6299 = vcmp.eq.f32.partialorder %v6298, 8.507059e+37
      %v6300 = vand.u32 %v6288, 2147483648
      %v6301 = vor.u32 1.1754944e-38, %v6300
      %v6302 = vsel %vm6299, %v6301, %v6297
      %v6303 = vmul.f32 1.0, %v6302
      %v6304 = vsub.f32 %v6303, 1.0
      %6306 = vrot.lane.b32.xlu0 %v6282, 32
      %v6307 = vpop.permute.xlu0 %6306
      %v6309 = vmul.f32 %v6304, %v6307
      %6311 = vrot.lane.b32.xlu0 %v6309, 64
      %v6312 = vpop.permute.xlu0 %6311
      %v6314 = vadd.f32 %v6282, %v6312
      %v6315 = vtanh.pop %v6314
      %v6316 = vsub.f32 1.0, %v6303
      %6318 = vrot.lane.b32.xlu0 %v6315, 96
      %v6319 = vpop.permute.xlu0 %6318
      %v6321 = vmul.f32 %v6316, %v6319
      %6323 = vrot.lane.b32.xlu0 %v6217, 32
      %v6324 = vpop.permute.xlu0 %6323
      %v6326 = vmul.f32 %v6303, %v6324
      %v6327 = vadd.f32 %v6321, %v6326
      %6329 = vrot.lane.b32.xlu0 %v6327, 96
      %v6330 = vpop.permute.xlu0 %6329
      %s6332 = scalar_lea.vmem [#allocation7], 8
      %6333 = vst.msk [vmem:[%s6332] sm:$0xff] %vm96, %v6330
      %v6334 = vpack.c.bf16 %v6327, %v6327
      %6336 = vrot.lane.b32.xlu0 %v6334, 96
      %v6337 = vpop.permute.xlu0 %6336
      %6339 = vst.msk [vmem:[#allocation2] sm:$0xf] %vm6014, %v6337
    $region65: #{tpu_custom_call.1} parent=1 // pred_fallthru
      _
    %v6340 = vld [vmem:[#allocation2] sm:$0xf]
    %v6341 = vld [vmem:[%s12] sm:$0xf]
    %v6342 = vld [vmem:[%s12 + $0x4] sm:$0xf]
    %v6343 = vld [vmem:[%s12 + $0x8] sm:$0xf]
    %v6344 = vld [vmem:[%s12 + $0xc] sm:$0xf]
    %v6345 = vld [vmem:[%s13] sm:$0x1]
    %v6347 = vperm.slane %v6345, 0
    %v6353 = vunpack.c.l.b16 %v6341
    %v6354 = vunpack.c.l.b16 %v6342
    %v6355 = vunpack.c.l.b16 %v6343
    %v6356 = vunpack.c.l.b16 %v6344
    %v6357 = vpack.c.b16 %v6354, %v6353
    %v6358 = vpack.c.b16 %v6356, %v6355
    %vm6361 = vcmask 261120
    %v6363 = vsel %vm6361, %v6340, 0
    %6365 = vmatpush.bf16.msra.mxu0 0
    %6366 = vmatpush.bf16.msra.mxu0 0
    %6367 = vmatpush.bf16.msra.mxu0 0
    %6368 = vmatpush.bf16.msra.mxu0 0
    %6369 = vmatpush.bf16.msra.mxu0 0
    %6370 = vmatpush.bf16.msra.mxu0 0
    %6371 = vmatpush.bf16.msra.mxu0 %v6358
    %6372 = vmatpush.bf16.msra.mxu0 %v6357
    %6373 = vmatmul.bf16.gmra.mxu0 %v6363
    %v6374 = vpop.f32.mrf.mxu0
    %v6375 = vadd.f32 %v6347, %v6374
    %v6376 = vpop.f32.mrf.mxu0
    %6377 = vdwg.mxu0
    %6378 = vst [vmem:[#allocation10] sm:$0xff] %v6375
    // Predicated region
    $region66: #{tpu_custom_call.1} parent=1 // pred_check
      _
    $region67: #{tpu_custom_call.1} parent=1 // pred_check_branch
      %6380 = sbr.rel (0) target = $region69
    $region68: #{tpu_custom_call.1} parent=1 // pred_region
      %6382 = vsyncadd [#allocation6], 0
      %s6383 = sshll.u32 [#allocation7], 4
      %s6384 = int_to_ptr.vmem [resolvable:$true] %s6383
      %s6385 = sshll.u32 %s14, 4
      %s6386 = int_to_ptr.hbm [resolvable:$true] %s6385
      %6391 = dma.vmem_to_hbm [thread:$0]  %s6384, 256, %s6386, [#allocation6], 128, 128, 8
    $region69: #{tpu_custom_call.1} parent=1 // pred_fallthru
      _
    // Predicated region
    $region70: #{tpu_custom_call.1} parent=1 // pred_check
      _
    $region71: #{tpu_custom_call.1} parent=1 // pred_check_branch
      %6393 = sbr.rel (0) target = $region73
    $region72: #{tpu_custom_call.1} parent=1 // pred_region
      %6395 = vsyncadd [#allocation9], 0
      %s6397 = sshll.u32 [#allocation8], 4
      %s6398 = int_to_ptr.vmem [resolvable:$true] %s6397
      %s6399 = sshll.u32 %s15, 4
      %s6400 = int_to_ptr.hbm [resolvable:$true] %s6399
      %6402 = dma.vmem_to_hbm [thread:$0]  %s6398, 128, %s6400, [#allocation9]
    $region73: #{tpu_custom_call.1} parent=1 // pred_fallthru
      _
    // Predicated region
    $region74: #{tpu_custom_call.1} parent=1 // pred_check
      _
    $region75: #{tpu_custom_call.1} parent=1 // pred_check_branch
      %6404 = sbr.rel (0) target = $region77
    $region76: #{tpu_custom_call.1} parent=1 // pred_region
      %6406 = vsyncadd [#allocation9], 0
      %s6408 = sshll.u32 [#allocation10], 4
      %s6409 = int_to_ptr.vmem [resolvable:$true] %s6408
      %s6410 = sshll.u32 %s16, 4
      %s6411 = int_to_ptr.hbm [resolvable:$true] %s6410
      %6413 = dma.vmem_to_hbm [thread:$0]  %s6409, 128, %s6411, [#allocation9]
    $region77: #{tpu_custom_call.1} parent=1 // pred_fallthru
      _
    // Predicated region
    $region78: #{tpu_custom_call.1} parent=1 // pred_check
      _
    $region79: #{tpu_custom_call.1} parent=1 // pred_check_branch
      %6415 = sbr.rel (0) target = $region81
    $region80: #{tpu_custom_call.1} parent=1 // pred_region
      %6417 = dma.done [#allocation6], 256
    $region81: #{tpu_custom_call.1} parent=1 // pred_fallthru
      _
    // Predicated region
    $region82: #{tpu_custom_call.1} parent=1 // pred_check
      _
    $region83: #{tpu_custom_call.1} parent=1 // pred_check_branch
      %6419 = sbr.rel (0) target = $region85
    $region84: #{tpu_custom_call.1} parent=1 // pred_region
      %6421 = dma.done [#allocation9], 128
    $region85: #{tpu_custom_call.1} parent=1 // pred_fallthru
      _
    // Predicated region
    $region86: #{tpu_custom_call.1} parent=1 // pred_check
      _
    $region87: #{tpu_custom_call.1} parent=1 // pred_check_branch
      %6423 = sbr.rel (0) target = $region89
    $region88: #{tpu_custom_call.1} parent=1 // pred_region
      %6425 = dma.done [#allocation9], 128
    $region89: #{tpu_custom_call.1} parent=1 // pred_fallthru
      _
    %6426 = vsyncpa [#allocation5], 1
    %6427 = vsyncpa [#allocation6], 1
    %6428 = vsyncpa [#allocation9], 1

</llo_original>
